<compile_context>
chip_gen: v7x
topology: tpu7x:2x2x1
jax: 0.10.0
libtpu: 0.0.40
codegen_flags: <defaults>
</compile_context>

<pallas_src>
import math
import functools

import jax
import jax.numpy as jnp
from jax.experimental import pallas as pl
from jax.experimental.pallas import tpu as pltpu


# ---------------------------------------------------------------------------
# Kernel
# ---------------------------------------------------------------------------
def _layer_norm(x, gamma, beta, d_real, eps=1e-5):
    """LayerNorm over the last (lane-padded) dim using the REAL feature count.

    Padded feature lanes of `x` are guaranteed zero and gamma/beta are zero
    there too, so the statistics match un-padded LayerNorm and the output keeps
    the zero-padding invariant.
    """
    inv_d = 1.0 / d_real
    mu = jnp.sum(x, axis=-1, keepdims=True) * inv_d
    var = jnp.sum(x * x, axis=-1, keepdims=True) * inv_d - mu * mu
    var = jnp.maximum(var, 0.0)
    return (x - mu) * jax.lax.rsqrt(var + eps) * gamma + beta


def dae_kernel(num_heads, head_dim, d_real,
               x_ref, pos_ref, bias_ref, ew_ref, eb_ref,
               wq_ref, bq_ref, wk_ref, bk_ref, wv_ref, bv_ref,
               wo_ref, bo_ref, g1_ref, gb1_ref,
               w1_ref, fb1_ref, w2_ref, fb2_ref, g2_ref, gb2_ref,
               ow_ref, ob_ref, out_ref):
    H, dh = num_heads, head_dim
    L = wq_ref.shape[0]
    scale = 1.0 / math.sqrt(dh)
    bf16 = jnp.bfloat16
    # contract the last dim of both operands: q @ k^T without an explicit transpose
    nt_dims = (((1,), (1,)), ((), ()))

    # ---- embedding + positional encoding for this frame tile ----
    h = jnp.dot(x_ref[...].astype(bf16), ew_ref[...],
                preferred_element_type=jnp.float32)
    h = h + eb_ref[...] + pos_ref[...]

    # additive same-frame mask (block-diagonal over the flattened row axis)
    bias = bias_ref[...]

    # ---- encoder layers: all weights are VMEM-resident, loop is unrolled ----
    for l in range(L):
        hb = h.astype(bf16)
        q = jnp.dot(hb, wq_ref[l], preferred_element_type=jnp.float32) + bq_ref[l]
        k = jnp.dot(hb, wk_ref[l], preferred_element_type=jnp.float32) + bk_ref[l]
        v = jnp.dot(hb, wv_ref[l], preferred_element_type=jnp.float32) + bv_ref[l]
        q = q * scale                      # fold 1/sqrt(dh) into q once
        vb = v.astype(bf16)

        # multi-head attention over the batch axis, independently per frame:
        # computed as one (R, R) Gram matrix per head restricted (via `bias`)
        # to same-frame pairs -- keeps everything 2-D row-major and lane-dense.
        ctx_heads = []
        for hd in range(H):
            sl = slice(hd * dh, (hd + 1) * dh)
            s = jax.lax.dot_general(q[:, sl], k[:, sl], nt_dims,
                                    preferred_element_type=jnp.float32)
            s = s + bias
            s = s - jnp.max(s, axis=-1, keepdims=True)
            p = jnp.exp(s)
            p = p * pl.reciprocal(jnp.sum(p, axis=-1, keepdims=True), approx=True)
            ctx_heads.append(jnp.dot(p.astype(bf16), vb[:, sl],
                                     preferred_element_type=jnp.float32))
        ctx = jnp.concatenate(ctx_heads, axis=-1)            # (R, d_real)
        attn = jnp.dot(ctx.astype(bf16), wo_ref[l],
                       preferred_element_type=jnp.float32) + bo_ref[l]

        h = _layer_norm(h + attn, g1_ref[l], gb1_ref[l], d_real)

        ff = jnp.dot(h.astype(bf16), w1_ref[l],
                     preferred_element_type=jnp.float32) + fb1_ref[l]
        ff = jnp.maximum(ff, 0.0)
        ff = jnp.dot(ff.astype(bf16), w2_ref[l],
                     preferred_element_type=jnp.float32) + fb2_ref[l]

        h = _layer_norm(h + ff, g2_ref[l], gb2_ref[l], d_real)

    # ---- output projection (lane-dense, unmasked store) ----
    y = jnp.dot(h.astype(bf16), ow_ref[...],
                preferred_element_type=jnp.float32) + ob_ref[...]
    out_ref[...] = y.astype(out_ref.dtype)


# ---------------------------------------------------------------------------
# Wrapper
# ---------------------------------------------------------------------------
def _ceil_to(x, m):
    return ((x + m - 1) // m) * m


def _choose_frame_tile(T, B, max_rows=512):
    """Largest frame tile tT (proper divisor of T) such that R = tT*B is
    sublane-aligned and <= max_rows.  Preferring a proper divisor guarantees
    n_tiles >= 2 so the single 'parallel' grid axis can shard across v7x's two
    TensorCores; max_rows bounds the (R, R) attention tensors and VMEM."""
    best = None
    for tT in range(1, T):
        if T % tT:
            continue
        R = tT * B
        if R % 8 or R > max_rows:
            continue
        best = tT
    return best if best is not None else T


def init_params(key, input_dim, output_dim, seq_len, d_model, num_layers, dim_ff):
    ks = jax.random.split(key, 17)

    def u(k, shape, s=0.1):
        return jax.random.uniform(k, shape, jnp.float32, -s, s)

    return dict(
        emb_w=u(ks[0], (input_dim, d_model)),
        emb_b=u(ks[1], (1, d_model)),
        pos=jax.random.uniform(ks[2], (seq_len, d_model), jnp.float32, 0.0, 1.0),
        wq=u(ks[3], (num_layers, d_model, d_model)),
        bq=u(ks[4], (num_layers, 1, d_model)),
        wk=u(ks[5], (num_layers, d_model, d_model)),
        bk=u(ks[6], (num_layers, 1, d_model)),
        wv=u(ks[7], (num_layers, d_model, d_model)),
        bv=u(ks[8], (num_layers, 1, d_model)),
        wo=u(ks[9], (num_layers, d_model, d_model)),
        bo=u(ks[10], (num_layers, 1, d_model)),
        ln1_g=jnp.ones((num_layers, 1, d_model), jnp.float32),
        ln1_b=jnp.zeros((num_layers, 1, d_model), jnp.float32),
        w1=u(ks[11], (num_layers, d_model, dim_ff)),
        b1=u(ks[12], (num_layers, 1, dim_ff)),
        w2=u(ks[13], (num_layers, dim_ff, d_model)),
        b2=u(ks[14], (num_layers, 1, d_model)),
        ln2_g=jnp.ones((num_layers, 1, d_model), jnp.float32),
        ln2_b=jnp.zeros((num_layers, 1, d_model), jnp.float32),
        out_w=u(ks[15], (d_model, output_dim)),
        out_b=u(ks[16], (1, output_dim)),
    )


def denoising_transformer_dae(noisy_mel, params, num_heads):
    """noisy_mel: (B, mel_dim, num_frames) -> (B, output_dim, num_frames)."""
    B, M, T = noisy_mel.shape
    D = params['emb_w'].shape[1]
    FF = params['w1'].shape[2]
    L = params['wq'].shape[0]
    O = params['out_w'].shape[1]
    H = num_heads
    assert D % H == 0, "d_model must be divisible by num_heads"
    dh = D // H
    assert params['pos'].shape[0] == T, \
        "num_frames must equal seq_len (pos_encoding broadcast)"

    # lane-dense padding of every feature dim
    M_pad = _ceil_to(M, 128)
    O_pad = _ceil_to(O, 128)
    D_pad = _ceil_to(D, 128)
    FF_pad = _ceil_to(FF, 128)

    tT = _choose_frame_tile(T, B)
    n_tiles = T // tT
    R = tT * B
    TB = T * B

    bf = jnp.bfloat16
    f32 = jnp.float32

    # ---- flattened, frame-major, lane-padded IO (sublane/lane-dense DMA) ----
    x = jnp.transpose(noisy_mel, (2, 0, 1)).reshape(TB, M)      # row = t*B + b
    x = jnp.pad(x, ((0, 0), (0, M_pad - M)))
    pos = jnp.repeat(params['pos'], B, axis=0)                   # (TB, D)
    pos = jnp.pad(pos, ((0, 0), (0, D_pad - D))).astype(f32)

    # block-diagonal same-frame additive mask (identical for every row tile)
    rows = jnp.arange(R)
    same = (rows[:, None] // B) == (rows[None, :] // B)
    attn_bias = jnp.where(same, 0.0, -1e30).astype(f32)

    # ---- lane-padded weights (zero-padded -> padded feature lanes stay zero) --
    def pad2(a, r, c):
        return jnp.pad(a, ((0, r - a.shape[0]), (0, c - a.shape[1])))

    def pad3(a, r, c):
        return jnp.pad(a, ((0, 0), (0, r - a.shape[1]), (0, c - a.shape[2])))

    emb_w = pad2(params['emb_w'], M_pad, D_pad).astype(bf)
    emb_b = pad2(params['emb_b'], 1, D_pad)
    out_w = pad2(params['out_w'], D_pad, O_pad).astype(bf)
    out_b = pad2(params['out_b'], 1, O_pad)

    wq = pad3(params['wq'], D_pad, D_pad).astype(bf)
    wk = pad3(params['wk'], D_pad, D_pad).astype(bf)
    wv = pad3(params['wv'], D_pad, D_pad).astype(bf)
    wo = pad3(params['wo'], D, D_pad).astype(bf)      # ctx width stays real D
    bq = pad3(params['bq'], 1, D_pad)
    bk = pad3(params['bk'], 1, D_pad)
    bv = pad3(params['bv'], 1, D_pad)
    bo = pad3(params['bo'], 1, D_pad)
    g1 = pad3(params['ln1_g'], 1, D_pad)
    gb1 = pad3(params['ln1_b'], 1, D_pad)
    w1 = pad3(params['w1'], D_pad, FF_pad).astype(bf)
    fb1 = pad3(params['b1'], 1, FF_pad)
    w2 = pad3(params['w2'], FF_pad, D_pad).astype(bf)
    fb2 = pad3(params['b2'], 1, D_pad)
    g2 = pad3(params['ln2_g'], 1, D_pad)
    gb2 = pad3(params['ln2_b'], 1, D_pad)

    args = (x, pos, attn_bias, emb_w, emb_b,
            wq, bq, wk, bk, wv, bv, wo, bo, g1, gb1,
            w1, fb1, w2, fb2, g2, gb2, out_w, out_b)

    # ---- BlockSpecs: tile the flattened rows; weights fully VMEM-resident ----
    # (For models whose stacked weights exceed the VMEM budget, switch the
    #  weight specs back to per-layer streaming on an inner 'arbitrary' axis.)
    def row_tile(cols):
        return pl.BlockSpec((R, cols), lambda i: (i, 0))

    def whole2(r, c):
        return pl.BlockSpec((r, c), lambda i: (0, 0))

    def whole3(a, b_, c):
        return pl.BlockSpec((a, b_, c), lambda i: (0, 0, 0))

    in_specs = [
        row_tile(M_pad),                   # x
        row_tile(D_pad),                   # pos (pre-broadcast in the wrapper)
        whole2(R, R),                      # same-frame attention bias
        whole2(M_pad, D_pad),              # emb_w
        whole2(1, D_pad),                  # emb_b
        whole3(L, D_pad, D_pad),           # wq
        whole3(L, 1, D_pad),               # bq
        whole3(L, D_pad, D_pad),           # wk
        whole3(L, 1, D_pad),               # bk
        whole3(L, D_pad, D_pad),           # wv
        whole3(L, 1, D_pad),               # bv
        whole3(L, D, D_pad),               # wo
        whole3(L, 1, D_pad),               # bo
        whole3(L, 1, D_pad),               # ln1_g
        whole3(L, 1, D_pad),               # ln1_b
        whole3(L, D_pad, FF_pad),          # w1
        whole3(L, 1, FF_pad),              # b1
        whole3(L, FF_pad, D_pad),          # w2
        whole3(L, 1, D_pad),               # b2
        whole3(L, 1, D_pad),               # ln2_g
        whole3(L, 1, D_pad),               # ln2_b
        whole2(D_pad, O_pad),              # out_w
        whole2(1, O_pad),                  # out_b
    ]
    out_spec = pl.BlockSpec((R, O_pad), lambda i: (i, 0))

    # ---- VMEM budget, clamped to the physical capacity of this chip ----
    f32b, bf16b = 4, 2
    weight_elems = (M_pad * D_pad + D_pad * O_pad
                    + L * (3 * D_pad * D_pad + D * D_pad + 2 * D_pad * FF_pad))
    small_elems = 2 * D_pad + O_pad + L * (9 * D_pad + FF_pad)
    weights_bytes = weight_elems * bf16b + small_elems * f32b
    io_bytes = (R * (M_pad + D_pad + O_pad) + R * R) * f32b
    tmp_bytes = (R * (8 * D_pad + FF_pad) + 3 * R * R) * f32b
    est = 2 * (weights_bytes + io_bytes) + tmp_bytes
    try:
        vmem_cap = int(pltpu.get_tpu_info().vmem_capacity_bytes)
    except Exception:
        vmem_cap = 64 * 1024 * 1024        # conservative (v7x) fallback
    vmem_limit = int(min(max(est * 1.3, 16 * 1024 * 1024), vmem_cap * 9 // 10))

    # ---- advisory cost estimate for the XLA scheduler ----
    flops = int(2 * TB * (M_pad * D_pad + D_pad * O_pad)
                + 2 * TB * L * (3 * D_pad * D_pad + D * D_pad + 2 * D_pad * FF_pad)
                + 4 * L * H * n_tiles * R * R * dh)
    transcendentals = int(L * H * n_tiles * R * R)
    bytes_accessed = int((TB * (M_pad + D_pad + O_pad) + R * R) * f32b
                         + weight_elems * bf16b + small_elems * f32b)

    out_flat = pl.pallas_call(
        functools.partial(dae_kernel, H, dh, D),
        out_shape=jax.ShapeDtypeStruct((TB, O_pad), jnp.float32),
        grid=(n_tiles,),
        in_specs=in_specs,
        out_specs=out_spec,
        compiler_params=pltpu.CompilerParams(
            dimension_semantics=("parallel",),
            vmem_limit_bytes=vmem_limit,
        ),
        cost_estimate=pl.CostEstimate(
            flops=flops,
            transcendentals=transcendentals,
            bytes_accessed=bytes_accessed,
        ),
    )(*args)

    out = out_flat[:, :O].reshape(T, B, O)        # drop lane padding
    return jnp.transpose(out, (1, 2, 0))          # (B, O, T)


# ---------------------------------------------------------------------------
# Pure-JAX reference (module semantics, incl. the batch_first=False quirk)
# ---------------------------------------------------------------------------
def _ref_layer_norm(x, g, b, eps=1e-5):
    mu = jnp.mean(x, axis=-1, keepdims=True)
    var = jnp.mean(jnp.square(x - mu), axis=-1, keepdims=True)
    return (x - mu) / jnp.sqrt(var + eps) * g + b


def reference_dae(noisy_mel, params, num_heads):
    B, M, T = noisy_mel.shape
    D = params['emb_w'].shape[1]
    H = num_heads
    dh = D // H
    L = params['wq'].shape[0]

    x = jnp.transpose(noisy_mel, (0, 2, 1))                  # (B, T, M)
    h = x @ params['emb_w'] + params['emb_b']
    h = h + params['pos'][None]

    for l in range(L):
        q = h @ params['wq'][l] + params['bq'][l]
        k = h @ params['wk'][l] + params['bk'][l]
        v = h @ params['wv'][l] + params['bv'][l]
        qh = q.reshape(B, T, H, dh)
        kh = k.reshape(B, T, H, dh)
        vh = v.reshape(B, T, H, dh)
        # batch_first=False: attention over the batch axis, per frame t
        s = jnp.einsum('bthd,cthd->thbc', qh, kh) / math.sqrt(dh)
        p = jax.nn.softmax(s, axis=-1)
        ctx = jnp.einsum('thbc,cthd->bthd', p, vh).reshape(B, T, D)
        attn = ctx @ params['wo'][l] + params['bo'][l]
        h = _ref_layer_norm(h + attn, params['ln1_g'][l], params['ln1_b'][l])
        ff = jnp.maximum(h @ params['w1'][l] + params['b1'][l], 0.0)
        ff = ff @ params['w2'][l] + params['b2'][l]
        h = _ref_layer_norm(h + ff, params['ln2_g'][l], params['ln2_b'][l])

    y = h @ params['out_w'] + params['out_b']
    return jnp.transpose(y, (0, 2, 1))                       # (B, O, T)


if __name__ == "__main__":
    # Small shapes consistent with the module's forward pass.
    batch = 2
    input_dim = 8
    output_dim = 8
    seq_len = 16          # num_frames must equal seq_len
    d_model = 32
    num_heads = 4
    num_layers = 2
    dim_ff = 64

    key = jax.random.PRNGKey(0)
    k_in, k_par = jax.random.split(key)
    noisy_mel = jax.random.normal(k_in, (batch, input_dim, seq_len), jnp.float32)
    params = init_params(k_par, input_dim, output_dim, seq_len, d_model,
                         num_layers, dim_ff)

    clean_mel = denoising_transformer_dae(noisy_mel, params, num_heads)
    jax.block_until_ready(clean_mel)
    assert clean_mel.shape == (batch, output_dim, seq_len)
    assert bool(jnp.all(jnp.isfinite(clean_mel)))

    ref = reference_dae(noisy_mel, params, num_heads)
    err = float(jnp.max(jnp.abs(clean_mel - ref)))
    assert err < 5e-2, f"kernel deviates from reference: max abs err {err}"
    print("KERNEL_OK")
</pallas_src>

<mosaic_0001>
module attributes {stable_mosaic.version = 11 : i64} {
  func.func @dae_kernel(%arg0: i32, %arg1: memref<16x128xf32, #tpu.memory_space<vmem>>, %arg2: memref<16x128xf32, #tpu.memory_space<vmem>>, %arg3: memref<16x16xf32, #tpu.memory_space<vmem>>, %arg4: memref<128x128xbf16, #tpu.memory_space<vmem>>, %arg5: memref<1x128xf32, #tpu.memory_space<vmem>>, %arg6: memref<2x128x128xbf16, #tpu.memory_space<vmem>>, %arg7: memref<2x1x128xf32, #tpu.memory_space<vmem>>, %arg8: memref<2x128x128xbf16, #tpu.memory_space<vmem>>, %arg9: memref<2x1x128xf32, #tpu.memory_space<vmem>>, %arg10: memref<2x128x128xbf16, #tpu.memory_space<vmem>>, %arg11: memref<2x1x128xf32, #tpu.memory_space<vmem>>, %arg12: memref<2x32x128xbf16, #tpu.memory_space<vmem>>, %arg13: memref<2x1x128xf32, #tpu.memory_space<vmem>>, %arg14: memref<2x1x128xf32, #tpu.memory_space<vmem>>, %arg15: memref<2x1x128xf32, #tpu.memory_space<vmem>>, %arg16: memref<2x128x128xbf16, #tpu.memory_space<vmem>>, %arg17: memref<2x1x128xf32, #tpu.memory_space<vmem>>, %arg18: memref<2x128x128xbf16, #tpu.memory_space<vmem>>, %arg19: memref<2x1x128xf32, #tpu.memory_space<vmem>>, %arg20: memref<2x1x128xf32, #tpu.memory_space<vmem>>, %arg21: memref<2x1x128xf32, #tpu.memory_space<vmem>>, %arg22: memref<128x128xbf16, #tpu.memory_space<vmem>>, %arg23: memref<1x128xf32, #tpu.memory_space<vmem>>, %arg24: memref<16x128xf32, #tpu.memory_space<vmem>>) attributes {dimension_semantics = [#tpu.dimension_semantics<parallel>], iteration_bounds = array<i64: 2>, scalar_prefetch = 0 : i64, scratch_operands = 0 : i64, tpu.core_type = #tpu.core_type<tc>, window_params = [{transform_indices = @transform_0, window_bounds = array<i64: 16, 128>}, {transform_indices = @transform_1, window_bounds = array<i64: 16, 128>}, {pipeline_mode = #tpu.pipeline_mode<synchronous>, transform_indices = @transform_2, window_bounds = array<i64: 16, 16>}, {pipeline_mode = #tpu.pipeline_mode<synchronous>, transform_indices = @transform_3, window_bounds = array<i64: 128, 128>}, {pipeline_mode = #tpu.pipeline_mode<synchronous>, transform_indices = @transform_4, window_bounds = array<i64: 1, 128>}, {pipeline_mode = #tpu.pipeline_mode<synchronous>, transform_indices = @transform_5, window_bounds = array<i64: 2, 128, 128>}, {pipeline_mode = #tpu.pipeline_mode<synchronous>, transform_indices = @transform_6, window_bounds = array<i64: 2, 1, 128>}, {pipeline_mode = #tpu.pipeline_mode<synchronous>, transform_indices = @transform_7, window_bounds = array<i64: 2, 128, 128>}, {pipeline_mode = #tpu.pipeline_mode<synchronous>, transform_indices = @transform_8, window_bounds = array<i64: 2, 1, 128>}, {pipeline_mode = #tpu.pipeline_mode<synchronous>, transform_indices = @transform_9, window_bounds = array<i64: 2, 128, 128>}, {pipeline_mode = #tpu.pipeline_mode<synchronous>, transform_indices = @transform_10, window_bounds = array<i64: 2, 1, 128>}, {pipeline_mode = #tpu.pipeline_mode<synchronous>, transform_indices = @transform_11, window_bounds = array<i64: 2, 32, 128>}, {pipeline_mode = #tpu.pipeline_mode<synchronous>, transform_indices = @transform_12, window_bounds = array<i64: 2, 1, 128>}, {pipeline_mode = #tpu.pipeline_mode<synchronous>, transform_indices = @transform_13, window_bounds = array<i64: 2, 1, 128>}, {pipeline_mode = #tpu.pipeline_mode<synchronous>, transform_indices = @transform_14, window_bounds = array<i64: 2, 1, 128>}, {pipeline_mode = #tpu.pipeline_mode<synchronous>, transform_indices = @transform_15, window_bounds = array<i64: 2, 128, 128>}, {pipeline_mode = #tpu.pipeline_mode<synchronous>, transform_indices = @transform_16, window_bounds = array<i64: 2, 1, 128>}, {pipeline_mode = #tpu.pipeline_mode<synchronous>, transform_indices = @transform_17, window_bounds = array<i64: 2, 128, 128>}, {pipeline_mode = #tpu.pipeline_mode<synchronous>, transform_indices = @transform_18, window_bounds = array<i64: 2, 1, 128>}, {pipeline_mode = #tpu.pipeline_mode<synchronous>, transform_indices = @transform_19, window_bounds = array<i64: 2, 1, 128>}, {pipeline_mode = #tpu.pipeline_mode<synchronous>, transform_indices = @transform_20, window_bounds = array<i64: 2, 1, 128>}, {pipeline_mode = #tpu.pipeline_mode<synchronous>, transform_indices = @transform_21, window_bounds = array<i64: 128, 128>}, {pipeline_mode = #tpu.pipeline_mode<synchronous>, transform_indices = @transform_22, window_bounds = array<i64: 1, 128>}, {transform_indices = @transform_23, window_bounds = array<i64: 16, 128>}]} {
    %c0 = arith.constant 0 : index
    %c0_0 = arith.constant 0 : index
    %0 = vector.load %arg1[%c0, %c0_0] : memref<16x128xf32, #tpu.memory_space<vmem>>, vector<16x128xf32>
    %1 = arith.truncf %0 : vector<16x128xf32> to vector<16x128xbf16>
    %c0_1 = arith.constant 0 : index
    %c0_2 = arith.constant 0 : index
    %2 = vector.load %arg4[%c0_1, %c0_2] : memref<128x128xbf16, #tpu.memory_space<vmem>>, vector<128x128xbf16>
    %cst = arith.constant dense<0.000000e+00> : vector<16x128xf32>
    %3 = tpu.matmul %1, %2, %cst {dimension_numbers = #tpu.dot_dimension_numbers<[1], [0], [0], [1], [0, 0, 1, 1], [], []>} : vector<16x128xbf16>, vector<128x128xbf16>, vector<16x128xf32> -> vector<16x128xf32>
    %c0_3 = arith.constant 0 : index
    %c0_4 = arith.constant 0 : index
    %4 = vector.load %arg5[%c0_3, %c0_4] : memref<1x128xf32, #tpu.memory_space<vmem>>, vector<1x128xf32>
    %5 = vector.broadcast %4 : vector<1x128xf32> to vector<16x128xf32>
    %6 = arith.addf %3, %5 : vector<16x128xf32>
    %c0_5 = arith.constant 0 : index
    %c0_6 = arith.constant 0 : index
    %7 = vector.load %arg2[%c0_5, %c0_6] : memref<16x128xf32, #tpu.memory_space<vmem>>, vector<16x128xf32>
    %8 = arith.addf %6, %7 : vector<16x128xf32>
    %c0_7 = arith.constant 0 : index
    %c0_8 = arith.constant 0 : index
    %9 = vector.load %arg3[%c0_7, %c0_8] : memref<16x16xf32, #tpu.memory_space<vmem>>, vector<16x16xf32>
    %10 = arith.truncf %8 : vector<16x128xf32> to vector<16x128xbf16>
    %c0_9 = arith.constant 0 : index
    %c0_10 = arith.constant 0 : index
    %c0_11 = arith.constant 0 : index
    %11 = vector.load %arg6[%c0_9, %c0_10, %c0_11] : memref<2x128x128xbf16, #tpu.memory_space<vmem>>, vector<1x128x128xbf16>
    %12 = vector.shape_cast %11 : vector<1x128x128xbf16> to vector<128x128xbf16>
    %cst_12 = arith.constant dense<0.000000e+00> : vector<16x128xf32>
    %13 = tpu.matmul %10, %12, %cst_12 {dimension_numbers = #tpu.dot_dimension_numbers<[1], [0], [0], [1], [0, 0, 1, 1], [], []>} : vector<16x128xbf16>, vector<128x128xbf16>, vector<16x128xf32> -> vector<16x128xf32>
    %c0_13 = arith.constant 0 : index
    %c0_14 = arith.constant 0 : index
    %c0_15 = arith.constant 0 : index
    %14 = vector.load %arg7[%c0_13, %c0_14, %c0_15] : memref<2x1x128xf32, #tpu.memory_space<vmem>>, vector<1x1x128xf32>
    %15 = vector.shape_cast %14 : vector<1x1x128xf32> to vector<1x128xf32>
    %16 = vector.broadcast %15 : vector<1x128xf32> to vector<16x128xf32>
    %17 = arith.addf %13, %16 : vector<16x128xf32>
    %c0_16 = arith.constant 0 : index
    %c0_17 = arith.constant 0 : index
    %c0_18 = arith.constant 0 : index
    %18 = vector.load %arg8[%c0_16, %c0_17, %c0_18] : memref<2x128x128xbf16, #tpu.memory_space<vmem>>, vector<1x128x128xbf16>
    %19 = vector.shape_cast %18 : vector<1x128x128xbf16> to vector<128x128xbf16>
    %cst_19 = arith.constant dense<0.000000e+00> : vector<16x128xf32>
    %20 = tpu.matmul %10, %19, %cst_19 {dimension_numbers = #tpu.dot_dimension_numbers<[1], [0], [0], [1], [0, 0, 1, 1], [], []>} : vector<16x128xbf16>, vector<128x128xbf16>, vector<16x128xf32> -> vector<16x128xf32>
    %c0_20 = arith.constant 0 : index
    %c0_21 = arith.constant 0 : index
    %c0_22 = arith.constant 0 : index
    %21 = vector.load %arg9[%c0_20, %c0_21, %c0_22] : memref<2x1x128xf32, #tpu.memory_space<vmem>>, vector<1x1x128xf32>
    %22 = vector.shape_cast %21 : vector<1x1x128xf32> to vector<1x128xf32>
    %23 = vector.broadcast %22 : vector<1x128xf32> to vector<16x128xf32>
    %24 = arith.addf %20, %23 : vector<16x128xf32>
    %c0_23 = arith.constant 0 : index
    %c0_24 = arith.constant 0 : index
    %c0_25 = arith.constant 0 : index
    %25 = vector.load %arg10[%c0_23, %c0_24, %c0_25] : memref<2x128x128xbf16, #tpu.memory_space<vmem>>, vector<1x128x128xbf16>
    %26 = vector.shape_cast %25 : vector<1x128x128xbf16> to vector<128x128xbf16>
    %cst_26 = arith.constant dense<0.000000e+00> : vector<16x128xf32>
    %27 = tpu.matmul %10, %26, %cst_26 {dimension_numbers = #tpu.dot_dimension_numbers<[1], [0], [0], [1], [0, 0, 1, 1], [], []>} : vector<16x128xbf16>, vector<128x128xbf16>, vector<16x128xf32> -> vector<16x128xf32>
    %c0_27 = arith.constant 0 : index
    %c0_28 = arith.constant 0 : index
    %c0_29 = arith.constant 0 : index
    %28 = vector.load %arg11[%c0_27, %c0_28, %c0_29] : memref<2x1x128xf32, #tpu.memory_space<vmem>>, vector<1x1x128xf32>
    %29 = vector.shape_cast %28 : vector<1x1x128xf32> to vector<1x128xf32>
    %30 = vector.broadcast %29 : vector<1x128xf32> to vector<16x128xf32>
    %31 = arith.addf %27, %30 : vector<16x128xf32>
    %cst_30 = arith.constant 0.353553385 : f32
    %32 = vector.broadcast %cst_30 : f32 to vector<16x128xf32>
    %33 = arith.mulf %17, %32 : vector<16x128xf32>
    %34 = arith.truncf %31 : vector<16x128xf32> to vector<16x128xbf16>
    %35 = vector.extract_strided_slice %33 {offsets = [0, 0], sizes = [16, 8], strides = [1, 1]} : vector<16x128xf32> to vector<16x8xf32>
    %36 = vector.extract_strided_slice %24 {offsets = [0, 0], sizes = [16, 8], strides = [1, 1]} : vector<16x128xf32> to vector<16x8xf32>
    %cst_31 = arith.constant dense<0.000000e+00> : vector<16x16xf32>
    %37 = tpu.matmul %35, %36, %cst_31 {dimension_numbers = #tpu.dot_dimension_numbers<[1], [1], [0], [0], [0, 0, 1, 0], [], []>} : vector<16x8xf32>, vector<16x8xf32>, vector<16x16xf32> -> vector<16x16xf32>
    %38 = arith.addf %37, %9 : vector<16x16xf32>
    %cst_32 = arith.constant dense<0xFF800000> : vector<16xf32>
    %39 = vector.multi_reduction <maximumf>, %38, %cst_32 [1] : vector<16x16xf32> to vector<16xf32>
    %40 = vector.shape_cast %39 : vector<16xf32> to vector<16x1xf32>
    %41 = vector.broadcast %40 : vector<16x1xf32> to vector<16x16xf32>
    %42 = arith.subf %38, %41 : vector<16x16xf32>
    %43 = math.exp %42 : vector<16x16xf32>
    %cst_33 = arith.constant dense<0.000000e+00> : vector<16xf32>
    %44 = vector.multi_reduction <add>, %43, %cst_33 [1] : vector<16x16xf32> to vector<16xf32>
    %45 = vector.shape_cast %44 : vector<16xf32> to vector<16x1xf32>
    %46 = tpu.reciprocal %45 {approx = true} : vector<16x1xf32> -> vector<16x1xf32>
    %47 = vector.broadcast %46 : vector<16x1xf32> to vector<16x16xf32>
    %48 = arith.mulf %43, %47 : vector<16x16xf32>
    %49 = arith.truncf %48 : vector<16x16xf32> to vector<16x16xbf16>
    %50 = vector.extract_strided_slice %34 {offsets = [0, 0], sizes = [16, 8], strides = [1, 1]} : vector<16x128xbf16> to vector<16x8xbf16>
    %cst_34 = arith.constant dense<0.000000e+00> : vector<16x8xf32>
    %51 = tpu.matmul %49, %50, %cst_34 {dimension_numbers = #tpu.dot_dimension_numbers<[1], [0], [0], [1], [0, 0, 1, 1], [], []>} : vector<16x16xbf16>, vector<16x8xbf16>, vector<16x8xf32> -> vector<16x8xf32>
    %52 = vector.extract_strided_slice %33 {offsets = [0, 8], sizes = [16, 8], strides = [1, 1]} : vector<16x128xf32> to vector<16x8xf32>
    %53 = vector.extract_strided_slice %24 {offsets = [0, 8], sizes = [16, 8], strides = [1, 1]} : vector<16x128xf32> to vector<16x8xf32>
    %cst_35 = arith.constant dense<0.000000e+00> : vector<16x16xf32>
    %54 = tpu.matmul %52, %53, %cst_35 {dimension_numbers = #tpu.dot_dimension_numbers<[1], [1], [0], [0], [0, 0, 1, 0], [], []>} : vector<16x8xf32>, vector<16x8xf32>, vector<16x16xf32> -> vector<16x16xf32>
    %55 = arith.addf %54, %9 : vector<16x16xf32>
    %cst_36 = arith.constant dense<0xFF800000> : vector<16xf32>
    %56 = vector.multi_reduction <maximumf>, %55, %cst_36 [1] : vector<16x16xf32> to vector<16xf32>
    %57 = vector.shape_cast %56 : vector<16xf32> to vector<16x1xf32>
    %58 = vector.broadcast %57 : vector<16x1xf32> to vector<16x16xf32>
    %59 = arith.subf %55, %58 : vector<16x16xf32>
    %60 = math.exp %59 : vector<16x16xf32>
    %cst_37 = arith.constant dense<0.000000e+00> : vector<16xf32>
    %61 = vector.multi_reduction <add>, %60, %cst_37 [1] : vector<16x16xf32> to vector<16xf32>
    %62 = vector.shape_cast %61 : vector<16xf32> to vector<16x1xf32>
    %63 = tpu.reciprocal %62 {approx = true} : vector<16x1xf32> -> vector<16x1xf32>
    %64 = vector.broadcast %63 : vector<16x1xf32> to vector<16x16xf32>
    %65 = arith.mulf %60, %64 : vector<16x16xf32>
    %66 = arith.truncf %65 : vector<16x16xf32> to vector<16x16xbf16>
    %67 = vector.extract_strided_slice %34 {offsets = [0, 8], sizes = [16, 8], strides = [1, 1]} : vector<16x128xbf16> to vector<16x8xbf16>
    %cst_38 = arith.constant dense<0.000000e+00> : vector<16x8xf32>
    %68 = tpu.matmul %66, %67, %cst_38 {dimension_numbers = #tpu.dot_dimension_numbers<[1], [0], [0], [1], [0, 0, 1, 1], [], []>} : vector<16x16xbf16>, vector<16x8xbf16>, vector<16x8xf32> -> vector<16x8xf32>
    %69 = vector.extract_strided_slice %33 {offsets = [0, 16], sizes = [16, 8], strides = [1, 1]} : vector<16x128xf32> to vector<16x8xf32>
    %70 = vector.extract_strided_slice %24 {offsets = [0, 16], sizes = [16, 8], strides = [1, 1]} : vector<16x128xf32> to vector<16x8xf32>
    %cst_39 = arith.constant dense<0.000000e+00> : vector<16x16xf32>
    %71 = tpu.matmul %69, %70, %cst_39 {dimension_numbers = #tpu.dot_dimension_numbers<[1], [1], [0], [0], [0, 0, 1, 0], [], []>} : vector<16x8xf32>, vector<16x8xf32>, vector<16x16xf32> -> vector<16x16xf32>
    %72 = arith.addf %71, %9 : vector<16x16xf32>
    %cst_40 = arith.constant dense<0xFF800000> : vector<16xf32>
    %73 = vector.multi_reduction <maximumf>, %72, %cst_40 [1] : vector<16x16xf32> to vector<16xf32>
    %74 = vector.shape_cast %73 : vector<16xf32> to vector<16x1xf32>
    %75 = vector.broadcast %74 : vector<16x1xf32> to vector<16x16xf32>
    %76 = arith.subf %72, %75 : vector<16x16xf32>
    %77 = math.exp %76 : vector<16x16xf32>
    %cst_41 = arith.constant dense<0.000000e+00> : vector<16xf32>
    %78 = vector.multi_reduction <add>, %77, %cst_41 [1] : vector<16x16xf32> to vector<16xf32>
    %79 = vector.shape_cast %78 : vector<16xf32> to vector<16x1xf32>
    %80 = tpu.reciprocal %79 {approx = true} : vector<16x1xf32> -> vector<16x1xf32>
    %81 = vector.broadcast %80 : vector<16x1xf32> to vector<16x16xf32>
    %82 = arith.mulf %77, %81 : vector<16x16xf32>
    %83 = arith.truncf %82 : vector<16x16xf32> to vector<16x16xbf16>
    %84 = vector.extract_strided_slice %34 {offsets = [0, 16], sizes = [16, 8], strides = [1, 1]} : vector<16x128xbf16> to vector<16x8xbf16>
    %cst_42 = arith.constant dense<0.000000e+00> : vector<16x8xf32>
    %85 = tpu.matmul %83, %84, %cst_42 {dimension_numbers = #tpu.dot_dimension_numbers<[1], [0], [0], [1], [0, 0, 1, 1], [], []>} : vector<16x16xbf16>, vector<16x8xbf16>, vector<16x8xf32> -> vector<16x8xf32>
    %86 = vector.extract_strided_slice %33 {offsets = [0, 24], sizes = [16, 8], strides = [1, 1]} : vector<16x128xf32> to vector<16x8xf32>
    %87 = vector.extract_strided_slice %24 {offsets = [0, 24], sizes = [16, 8], strides = [1, 1]} : vector<16x128xf32> to vector<16x8xf32>
    %cst_43 = arith.constant dense<0.000000e+00> : vector<16x16xf32>
    %88 = tpu.matmul %86, %87, %cst_43 {dimension_numbers = #tpu.dot_dimension_numbers<[1], [1], [0], [0], [0, 0, 1, 0], [], []>} : vector<16x8xf32>, vector<16x8xf32>, vector<16x16xf32> -> vector<16x16xf32>
    %89 = arith.addf %88, %9 : vector<16x16xf32>
    %cst_44 = arith.constant dense<0xFF800000> : vector<16xf32>
    %90 = vector.multi_reduction <maximumf>, %89, %cst_44 [1] : vector<16x16xf32> to vector<16xf32>
    %91 = vector.shape_cast %90 : vector<16xf32> to vector<16x1xf32>
    %92 = vector.broadcast %91 : vector<16x1xf32> to vector<16x16xf32>
    %93 = arith.subf %89, %92 : vector<16x16xf32>
    %94 = math.exp %93 : vector<16x16xf32>
    %cst_45 = arith.constant dense<0.000000e+00> : vector<16xf32>
    %95 = vector.multi_reduction <add>, %94, %cst_45 [1] : vector<16x16xf32> to vector<16xf32>
    %96 = vector.shape_cast %95 : vector<16xf32> to vector<16x1xf32>
    %97 = tpu.reciprocal %96 {approx = true} : vector<16x1xf32> -> vector<16x1xf32>
    %98 = vector.broadcast %97 : vector<16x1xf32> to vector<16x16xf32>
    %99 = arith.mulf %94, %98 : vector<16x16xf32>
    %100 = arith.truncf %99 : vector<16x16xf32> to vector<16x16xbf16>
    %101 = vector.extract_strided_slice %34 {offsets = [0, 24], sizes = [16, 8], strides = [1, 1]} : vector<16x128xbf16> to vector<16x8xbf16>
    %cst_46 = arith.constant dense<0.000000e+00> : vector<16x8xf32>
    %102 = tpu.matmul %100, %101, %cst_46 {dimension_numbers = #tpu.dot_dimension_numbers<[1], [0], [0], [1], [0, 0, 1, 1], [], []>} : vector<16x16xbf16>, vector<16x8xbf16>, vector<16x8xf32> -> vector<16x8xf32>
    %103 = tpu.concatenate %51, %68, %85, %102 in 1 : vector<16x8xf32>, vector<16x8xf32>, vector<16x8xf32>, vector<16x8xf32> -> vector<16x32xf32>
    %104 = arith.truncf %103 : vector<16x32xf32> to vector<16x32xbf16>
    %c0_47 = arith.constant 0 : index
    %c0_48 = arith.constant 0 : index
    %c0_49 = arith.constant 0 : index
    %105 = vector.load %arg12[%c0_47, %c0_48, %c0_49] : memref<2x32x128xbf16, #tpu.memory_space<vmem>>, vector<1x32x128xbf16>
    %106 = vector.shape_cast %105 : vector<1x32x128xbf16> to vector<32x128xbf16>
    %cst_50 = arith.constant dense<0.000000e+00> : vector<16x128xf32>
    %107 = tpu.matmul %104, %106, %cst_50 {dimension_numbers = #tpu.dot_dimension_numbers<[1], [0], [0], [1], [0, 0, 1, 1], [], []>} : vector<16x32xbf16>, vector<32x128xbf16>, vector<16x128xf32> -> vector<16x128xf32>
    %c0_51 = arith.constant 0 : index
    %c0_52 = arith.constant 0 : index
    %c0_53 = arith.constant 0 : index
    %108 = vector.load %arg13[%c0_51, %c0_52, %c0_53] : memref<2x1x128xf32, #tpu.memory_space<vmem>>, vector<1x1x128xf32>
    %109 = vector.shape_cast %108 : vector<1x1x128xf32> to vector<1x128xf32>
    %110 = vector.broadcast %109 : vector<1x128xf32> to vector<16x128xf32>
    %111 = arith.addf %107, %110 : vector<16x128xf32>
    %112 = arith.addf %8, %111 : vector<16x128xf32>
    %c0_54 = arith.constant 0 : index
    %c0_55 = arith.constant 0 : index
    %c0_56 = arith.constant 0 : index
    %113 = vector.load %arg14[%c0_54, %c0_55, %c0_56] : memref<2x1x128xf32, #tpu.memory_space<vmem>>, vector<1x1x128xf32>
    %114 = vector.shape_cast %113 : vector<1x1x128xf32> to vector<1x128xf32>
    %c0_57 = arith.constant 0 : index
    %c0_58 = arith.constant 0 : index
    %c0_59 = arith.constant 0 : index
    %115 = vector.load %arg15[%c0_57, %c0_58, %c0_59] : memref<2x1x128xf32, #tpu.memory_space<vmem>>, vector<1x1x128xf32>
    %116 = vector.shape_cast %115 : vector<1x1x128xf32> to vector<1x128xf32>
    %cst_60 = arith.constant dense<0.000000e+00> : vector<16xf32>
    %117 = vector.multi_reduction <add>, %112, %cst_60 [1] : vector<16x128xf32> to vector<16xf32>
    %118 = vector.shape_cast %117 : vector<16xf32> to vector<16x1xf32>
    %cst_61 = arith.constant 3.125000e-02 : f32
    %119 = vector.broadcast %cst_61 : f32 to vector<16x1xf32>
    %120 = arith.mulf %118, %119 : vector<16x1xf32>
    %121 = arith.mulf %112, %112 : vector<16x128xf32>
    %cst_62 = arith.constant dense<0.000000e+00> : vector<16xf32>
    %122 = vector.multi_reduction <add>, %121, %cst_62 [1] : vector<16x128xf32> to vector<16xf32>
    %123 = vector.shape_cast %122 : vector<16xf32> to vector<16x1xf32>
    %cst_63 = arith.constant 3.125000e-02 : f32
    %124 = vector.broadcast %cst_63 : f32 to vector<16x1xf32>
    %125 = arith.mulf %123, %124 : vector<16x1xf32>
    %126 = arith.mulf %120, %120 : vector<16x1xf32>
    %127 = arith.subf %125, %126 : vector<16x1xf32>
    %cst_64 = arith.constant 0.000000e+00 : f32
    %128 = vector.broadcast %cst_64 : f32 to vector<16x1xf32>
    %129 = arith.maximumf %127, %128 : vector<16x1xf32>
    %130 = vector.broadcast %120 : vector<16x1xf32> to vector<16x128xf32>
    %131 = arith.subf %112, %130 : vector<16x128xf32>
    %cst_65 = arith.constant 9.99999974E-6 : f32
    %132 = vector.broadcast %cst_65 : f32 to vector<16x1xf32>
    %133 = arith.addf %129, %132 : vector<16x1xf32>
    %134 = math.rsqrt %133 : vector<16x1xf32>
    %135 = vector.broadcast %134 : vector<16x1xf32> to vector<16x128xf32>
    %136 = arith.mulf %131, %135 : vector<16x128xf32>
    %137 = vector.broadcast %114 : vector<1x128xf32> to vector<16x128xf32>
    %138 = arith.mulf %136, %137 : vector<16x128xf32>
    %139 = vector.broadcast %116 : vector<1x128xf32> to vector<16x128xf32>
    %140 = arith.addf %138, %139 : vector<16x128xf32>
    %141 = arith.truncf %140 : vector<16x128xf32> to vector<16x128xbf16>
    %c0_66 = arith.constant 0 : index
    %c0_67 = arith.constant 0 : index
    %c0_68 = arith.constant 0 : index
    %142 = vector.load %arg16[%c0_66, %c0_67, %c0_68] : memref<2x128x128xbf16, #tpu.memory_space<vmem>>, vector<1x128x128xbf16>
    %143 = vector.shape_cast %142 : vector<1x128x128xbf16> to vector<128x128xbf16>
    %cst_69 = arith.constant dense<0.000000e+00> : vector<16x128xf32>
    %144 = tpu.matmul %141, %143, %cst_69 {dimension_numbers = #tpu.dot_dimension_numbers<[1], [0], [0], [1], [0, 0, 1, 1], [], []>} : vector<16x128xbf16>, vector<128x128xbf16>, vector<16x128xf32> -> vector<16x128xf32>
    %c0_70 = arith.constant 0 : index
    %c0_71 = arith.constant 0 : index
    %c0_72 = arith.constant 0 : index
    %145 = vector.load %arg17[%c0_70, %c0_71, %c0_72] : memref<2x1x128xf32, #tpu.memory_space<vmem>>, vector<1x1x128xf32>
    %146 = vector.shape_cast %145 : vector<1x1x128xf32> to vector<1x128xf32>
    %147 = vector.broadcast %146 : vector<1x128xf32> to vector<16x128xf32>
    %148 = arith.addf %144, %147 : vector<16x128xf32>
    %cst_73 = arith.constant 0.000000e+00 : f32
    %149 = vector.broadcast %cst_73 : f32 to vector<16x128xf32>
    %150 = arith.maximumf %148, %149 : vector<16x128xf32>
    %151 = arith.truncf %150 : vector<16x128xf32> to vector<16x128xbf16>
    %c0_74 = arith.constant 0 : index
    %c0_75 = arith.constant 0 : index
    %c0_76 = arith.constant 0 : index
    %152 = vector.load %arg18[%c0_74, %c0_75, %c0_76] : memref<2x128x128xbf16, #tpu.memory_space<vmem>>, vector<1x128x128xbf16>
    %153 = vector.shape_cast %152 : vector<1x128x128xbf16> to vector<128x128xbf16>
    %cst_77 = arith.constant dense<0.000000e+00> : vector<16x128xf32>
    %154 = tpu.matmul %151, %153, %cst_77 {dimension_numbers = #tpu.dot_dimension_numbers<[1], [0], [0], [1], [0, 0, 1, 1], [], []>} : vector<16x128xbf16>, vector<128x128xbf16>, vector<16x128xf32> -> vector<16x128xf32>
    %c0_78 = arith.constant 0 : index
    %c0_79 = arith.constant 0 : index
    %c0_80 = arith.constant 0 : index
    %155 = vector.load %arg19[%c0_78, %c0_79, %c0_80] : memref<2x1x128xf32, #tpu.memory_space<vmem>>, vector<1x1x128xf32>
    %156 = vector.shape_cast %155 : vector<1x1x128xf32> to vector<1x128xf32>
    %157 = vector.broadcast %156 : vector<1x128xf32> to vector<16x128xf32>
    %158 = arith.addf %154, %157 : vector<16x128xf32>
    %159 = arith.addf %140, %158 : vector<16x128xf32>
    %c0_81 = arith.constant 0 : index
    %c0_82 = arith.constant 0 : index
    %c0_83 = arith.constant 0 : index
    %160 = vector.load %arg20[%c0_81, %c0_82, %c0_83] : memref<2x1x128xf32, #tpu.memory_space<vmem>>, vector<1x1x128xf32>
    %161 = vector.shape_cast %160 : vector<1x1x128xf32> to vector<1x128xf32>
    %c0_84 = arith.constant 0 : index
    %c0_85 = arith.constant 0 : index
    %c0_86 = arith.constant 0 : index
    %162 = vector.load %arg21[%c0_84, %c0_85, %c0_86] : memref<2x1x128xf32, #tpu.memory_space<vmem>>, vector<1x1x128xf32>
    %163 = vector.shape_cast %162 : vector<1x1x128xf32> to vector<1x128xf32>
    %cst_87 = arith.constant dense<0.000000e+00> : vector<16xf32>
    %164 = vector.multi_reduction <add>, %159, %cst_87 [1] : vector<16x128xf32> to vector<16xf32>
    %165 = vector.shape_cast %164 : vector<16xf32> to vector<16x1xf32>
    %cst_88 = arith.constant 3.125000e-02 : f32
    %166 = vector.broadcast %cst_88 : f32 to vector<16x1xf32>
    %167 = arith.mulf %165, %166 : vector<16x1xf32>
    %168 = arith.mulf %159, %159 : vector<16x128xf32>
    %cst_89 = arith.constant dense<0.000000e+00> : vector<16xf32>
    %169 = vector.multi_reduction <add>, %168, %cst_89 [1] : vector<16x128xf32> to vector<16xf32>
    %170 = vector.shape_cast %169 : vector<16xf32> to vector<16x1xf32>
    %cst_90 = arith.constant 3.125000e-02 : f32
    %171 = vector.broadcast %cst_90 : f32 to vector<16x1xf32>
    %172 = arith.mulf %170, %171 : vector<16x1xf32>
    %173 = arith.mulf %167, %167 : vector<16x1xf32>
    %174 = arith.subf %172, %173 : vector<16x1xf32>
    %cst_91 = arith.constant 0.000000e+00 : f32
    %175 = vector.broadcast %cst_91 : f32 to vector<16x1xf32>
    %176 = arith.maximumf %174, %175 : vector<16x1xf32>
    %177 = vector.broadcast %167 : vector<16x1xf32> to vector<16x128xf32>
    %178 = arith.subf %159, %177 : vector<16x128xf32>
    %cst_92 = arith.constant 9.99999974E-6 : f32
    %179 = vector.broadcast %cst_92 : f32 to vector<16x1xf32>
    %180 = arith.addf %176, %179 : vector<16x1xf32>
    %181 = math.rsqrt %180 : vector<16x1xf32>
    %182 = vector.broadcast %181 : vector<16x1xf32> to vector<16x128xf32>
    %183 = arith.mulf %178, %182 : vector<16x128xf32>
    %184 = vector.broadcast %161 : vector<1x128xf32> to vector<16x128xf32>
    %185 = arith.mulf %183, %184 : vector<16x128xf32>
    %186 = vector.broadcast %163 : vector<1x128xf32> to vector<16x128xf32>
    %187 = arith.addf %185, %186 : vector<16x128xf32>
    %188 = arith.truncf %187 : vector<16x128xf32> to vector<16x128xbf16>
    %c1 = arith.constant 1 : index
    %c0_93 = arith.constant 0 : index
    %c0_94 = arith.constant 0 : index
    %189 = vector.load %arg6[%c1, %c0_93, %c0_94] : memref<2x128x128xbf16, #tpu.memory_space<vmem>>, vector<1x128x128xbf16>
    %190 = vector.shape_cast %189 : vector<1x128x128xbf16> to vector<128x128xbf16>
    %cst_95 = arith.constant dense<0.000000e+00> : vector<16x128xf32>
    %191 = tpu.matmul %188, %190, %cst_95 {dimension_numbers = #tpu.dot_dimension_numbers<[1], [0], [0], [1], [0, 0, 1, 1], [], []>} : vector<16x128xbf16>, vector<128x128xbf16>, vector<16x128xf32> -> vector<16x128xf32>
    %c1_96 = arith.constant 1 : index
    %c0_97 = arith.constant 0 : index
    %c0_98 = arith.constant 0 : index
    %192 = vector.load %arg7[%c1_96, %c0_97, %c0_98] : memref<2x1x128xf32, #tpu.memory_space<vmem>>, vector<1x1x128xf32>
    %193 = vector.shape_cast %192 : vector<1x1x128xf32> to vector<1x128xf32>
    %194 = vector.broadcast %193 : vector<1x128xf32> to vector<16x128xf32>
    %195 = arith.addf %191, %194 : vector<16x128xf32>
    %c1_99 = arith.constant 1 : index
    %c0_100 = arith.constant 0 : index
    %c0_101 = arith.constant 0 : index
    %196 = vector.load %arg8[%c1_99, %c0_100, %c0_101] : memref<2x128x128xbf16, #tpu.memory_space<vmem>>, vector<1x128x128xbf16>
    %197 = vector.shape_cast %196 : vector<1x128x128xbf16> to vector<128x128xbf16>
    %cst_102 = arith.constant dense<0.000000e+00> : vector<16x128xf32>
    %198 = tpu.matmul %188, %197, %cst_102 {dimension_numbers = #tpu.dot_dimension_numbers<[1], [0], [0], [1], [0, 0, 1, 1], [], []>} : vector<16x128xbf16>, vector<128x128xbf16>, vector<16x128xf32> -> vector<16x128xf32>
    %c1_103 = arith.constant 1 : index
    %c0_104 = arith.constant 0 : index
    %c0_105 = arith.constant 0 : index
    %199 = vector.load %arg9[%c1_103, %c0_104, %c0_105] : memref<2x1x128xf32, #tpu.memory_space<vmem>>, vector<1x1x128xf32>
    %200 = vector.shape_cast %199 : vector<1x1x128xf32> to vector<1x128xf32>
    %201 = vector.broadcast %200 : vector<1x128xf32> to vector<16x128xf32>
    %202 = arith.addf %198, %201 : vector<16x128xf32>
    %c1_106 = arith.constant 1 : index
    %c0_107 = arith.constant 0 : index
    %c0_108 = arith.constant 0 : index
    %203 = vector.load %arg10[%c1_106, %c0_107, %c0_108] : memref<2x128x128xbf16, #tpu.memory_space<vmem>>, vector<1x128x128xbf16>
    %204 = vector.shape_cast %203 : vector<1x128x128xbf16> to vector<128x128xbf16>
    %cst_109 = arith.constant dense<0.000000e+00> : vector<16x128xf32>
    %205 = tpu.matmul %188, %204, %cst_109 {dimension_numbers = #tpu.dot_dimension_numbers<[1], [0], [0], [1], [0, 0, 1, 1], [], []>} : vector<16x128xbf16>, vector<128x128xbf16>, vector<16x128xf32> -> vector<16x128xf32>
    %c1_110 = arith.constant 1 : index
    %c0_111 = arith.constant 0 : index
    %c0_112 = arith.constant 0 : index
    %206 = vector.load %arg11[%c1_110, %c0_111, %c0_112] : memref<2x1x128xf32, #tpu.memory_space<vmem>>, vector<1x1x128xf32>
    %207 = vector.shape_cast %206 : vector<1x1x128xf32> to vector<1x128xf32>
    %208 = vector.broadcast %207 : vector<1x128xf32> to vector<16x128xf32>
    %209 = arith.addf %205, %208 : vector<16x128xf32>
    %cst_113 = arith.constant 0.353553385 : f32
    %210 = vector.broadcast %cst_113 : f32 to vector<16x128xf32>
    %211 = arith.mulf %195, %210 : vector<16x128xf32>
    %212 = arith.truncf %209 : vector<16x128xf32> to vector<16x128xbf16>
    %213 = vector.extract_strided_slice %211 {offsets = [0, 0], sizes = [16, 8], strides = [1, 1]} : vector<16x128xf32> to vector<16x8xf32>
    %214 = vector.extract_strided_slice %202 {offsets = [0, 0], sizes = [16, 8], strides = [1, 1]} : vector<16x128xf32> to vector<16x8xf32>
    %cst_114 = arith.constant dense<0.000000e+00> : vector<16x16xf32>
    %215 = tpu.matmul %213, %214, %cst_114 {dimension_numbers = #tpu.dot_dimension_numbers<[1], [1], [0], [0], [0, 0, 1, 0], [], []>} : vector<16x8xf32>, vector<16x8xf32>, vector<16x16xf32> -> vector<16x16xf32>
    %216 = arith.addf %215, %9 : vector<16x16xf32>
    %cst_115 = arith.constant dense<0xFF800000> : vector<16xf32>
    %217 = vector.multi_reduction <maximumf>, %216, %cst_115 [1] : vector<16x16xf32> to vector<16xf32>
    %218 = vector.shape_cast %217 : vector<16xf32> to vector<16x1xf32>
    %219 = vector.broadcast %218 : vector<16x1xf32> to vector<16x16xf32>
    %220 = arith.subf %216, %219 : vector<16x16xf32>
    %221 = math.exp %220 : vector<16x16xf32>
    %cst_116 = arith.constant dense<0.000000e+00> : vector<16xf32>
    %222 = vector.multi_reduction <add>, %221, %cst_116 [1] : vector<16x16xf32> to vector<16xf32>
    %223 = vector.shape_cast %222 : vector<16xf32> to vector<16x1xf32>
    %224 = tpu.reciprocal %223 {approx = true} : vector<16x1xf32> -> vector<16x1xf32>
    %225 = vector.broadcast %224 : vector<16x1xf32> to vector<16x16xf32>
    %226 = arith.mulf %221, %225 : vector<16x16xf32>
    %227 = arith.truncf %226 : vector<16x16xf32> to vector<16x16xbf16>
    %228 = vector.extract_strided_slice %212 {offsets = [0, 0], sizes = [16, 8], strides = [1, 1]} : vector<16x128xbf16> to vector<16x8xbf16>
    %cst_117 = arith.constant dense<0.000000e+00> : vector<16x8xf32>
    %229 = tpu.matmul %227, %228, %cst_117 {dimension_numbers = #tpu.dot_dimension_numbers<[1], [0], [0], [1], [0, 0, 1, 1], [], []>} : vector<16x16xbf16>, vector<16x8xbf16>, vector<16x8xf32> -> vector<16x8xf32>
    %230 = vector.extract_strided_slice %211 {offsets = [0, 8], sizes = [16, 8], strides = [1, 1]} : vector<16x128xf32> to vector<16x8xf32>
    %231 = vector.extract_strided_slice %202 {offsets = [0, 8], sizes = [16, 8], strides = [1, 1]} : vector<16x128xf32> to vector<16x8xf32>
    %cst_118 = arith.constant dense<0.000000e+00> : vector<16x16xf32>
    %232 = tpu.matmul %230, %231, %cst_118 {dimension_numbers = #tpu.dot_dimension_numbers<[1], [1], [0], [0], [0, 0, 1, 0], [], []>} : vector<16x8xf32>, vector<16x8xf32>, vector<16x16xf32> -> vector<16x16xf32>
    %233 = arith.addf %232, %9 : vector<16x16xf32>
    %cst_119 = arith.constant dense<0xFF800000> : vector<16xf32>
    %234 = vector.multi_reduction <maximumf>, %233, %cst_119 [1] : vector<16x16xf32> to vector<16xf32>
    %235 = vector.shape_cast %234 : vector<16xf32> to vector<16x1xf32>
    %236 = vector.broadcast %235 : vector<16x1xf32> to vector<16x16xf32>
    %237 = arith.subf %233, %236 : vector<16x16xf32>
    %238 = math.exp %237 : vector<16x16xf32>
    %cst_120 = arith.constant dense<0.000000e+00> : vector<16xf32>
    %239 = vector.multi_reduction <add>, %238, %cst_120 [1] : vector<16x16xf32> to vector<16xf32>
    %240 = vector.shape_cast %239 : vector<16xf32> to vector<16x1xf32>
    %241 = tpu.reciprocal %240 {approx = true} : vector<16x1xf32> -> vector<16x1xf32>
    %242 = vector.broadcast %241 : vector<16x1xf32> to vector<16x16xf32>
    %243 = arith.mulf %238, %242 : vector<16x16xf32>
    %244 = arith.truncf %243 : vector<16x16xf32> to vector<16x16xbf16>
    %245 = vector.extract_strided_slice %212 {offsets = [0, 8], sizes = [16, 8], strides = [1, 1]} : vector<16x128xbf16> to vector<16x8xbf16>
    %cst_121 = arith.constant dense<0.000000e+00> : vector<16x8xf32>
    %246 = tpu.matmul %244, %245, %cst_121 {dimension_numbers = #tpu.dot_dimension_numbers<[1], [0], [0], [1], [0, 0, 1, 1], [], []>} : vector<16x16xbf16>, vector<16x8xbf16>, vector<16x8xf32> -> vector<16x8xf32>
    %247 = vector.extract_strided_slice %211 {offsets = [0, 16], sizes = [16, 8], strides = [1, 1]} : vector<16x128xf32> to vector<16x8xf32>
    %248 = vector.extract_strided_slice %202 {offsets = [0, 16], sizes = [16, 8], strides = [1, 1]} : vector<16x128xf32> to vector<16x8xf32>
    %cst_122 = arith.constant dense<0.000000e+00> : vector<16x16xf32>
    %249 = tpu.matmul %247, %248, %cst_122 {dimension_numbers = #tpu.dot_dimension_numbers<[1], [1], [0], [0], [0, 0, 1, 0], [], []>} : vector<16x8xf32>, vector<16x8xf32>, vector<16x16xf32> -> vector<16x16xf32>
    %250 = arith.addf %249, %9 : vector<16x16xf32>
    %cst_123 = arith.constant dense<0xFF800000> : vector<16xf32>
    %251 = vector.multi_reduction <maximumf>, %250, %cst_123 [1] : vector<16x16xf32> to vector<16xf32>
    %252 = vector.shape_cast %251 : vector<16xf32> to vector<16x1xf32>
    %253 = vector.broadcast %252 : vector<16x1xf32> to vector<16x16xf32>
    %254 = arith.subf %250, %253 : vector<16x16xf32>
    %255 = math.exp %254 : vector<16x16xf32>
    %cst_124 = arith.constant dense<0.000000e+00> : vector<16xf32>
    %256 = vector.multi_reduction <add>, %255, %cst_124 [1] : vector<16x16xf32> to vector<16xf32>
    %257 = vector.shape_cast %256 : vector<16xf32> to vector<16x1xf32>
    %258 = tpu.reciprocal %257 {approx = true} : vector<16x1xf32> -> vector<16x1xf32>
    %259 = vector.broadcast %258 : vector<16x1xf32> to vector<16x16xf32>
    %260 = arith.mulf %255, %259 : vector<16x16xf32>
    %261 = arith.truncf %260 : vector<16x16xf32> to vector<16x16xbf16>
    %262 = vector.extract_strided_slice %212 {offsets = [0, 16], sizes = [16, 8], strides = [1, 1]} : vector<16x128xbf16> to vector<16x8xbf16>
    %cst_125 = arith.constant dense<0.000000e+00> : vector<16x8xf32>
    %263 = tpu.matmul %261, %262, %cst_125 {dimension_numbers = #tpu.dot_dimension_numbers<[1], [0], [0], [1], [0, 0, 1, 1], [], []>} : vector<16x16xbf16>, vector<16x8xbf16>, vector<16x8xf32> -> vector<16x8xf32>
    %264 = vector.extract_strided_slice %211 {offsets = [0, 24], sizes = [16, 8], strides = [1, 1]} : vector<16x128xf32> to vector<16x8xf32>
    %265 = vector.extract_strided_slice %202 {offsets = [0, 24], sizes = [16, 8], strides = [1, 1]} : vector<16x128xf32> to vector<16x8xf32>
    %cst_126 = arith.constant dense<0.000000e+00> : vector<16x16xf32>
    %266 = tpu.matmul %264, %265, %cst_126 {dimension_numbers = #tpu.dot_dimension_numbers<[1], [1], [0], [0], [0, 0, 1, 0], [], []>} : vector<16x8xf32>, vector<16x8xf32>, vector<16x16xf32> -> vector<16x16xf32>
    %267 = arith.addf %266, %9 : vector<16x16xf32>
    %cst_127 = arith.constant dense<0xFF800000> : vector<16xf32>
    %268 = vector.multi_reduction <maximumf>, %267, %cst_127 [1] : vector<16x16xf32> to vector<16xf32>
    %269 = vector.shape_cast %268 : vector<16xf32> to vector<16x1xf32>
    %270 = vector.broadcast %269 : vector<16x1xf32> to vector<16x16xf32>
    %271 = arith.subf %267, %270 : vector<16x16xf32>
    %272 = math.exp %271 : vector<16x16xf32>
    %cst_128 = arith.constant dense<0.000000e+00> : vector<16xf32>
    %273 = vector.multi_reduction <add>, %272, %cst_128 [1] : vector<16x16xf32> to vector<16xf32>
    %274 = vector.shape_cast %273 : vector<16xf32> to vector<16x1xf32>
    %275 = tpu.reciprocal %274 {approx = true} : vector<16x1xf32> -> vector<16x1xf32>
    %276 = vector.broadcast %275 : vector<16x1xf32> to vector<16x16xf32>
    %277 = arith.mulf %272, %276 : vector<16x16xf32>
    %278 = arith.truncf %277 : vector<16x16xf32> to vector<16x16xbf16>
    %279 = vector.extract_strided_slice %212 {offsets = [0, 24], sizes = [16, 8], strides = [1, 1]} : vector<16x128xbf16> to vector<16x8xbf16>
    %cst_129 = arith.constant dense<0.000000e+00> : vector<16x8xf32>
    %280 = tpu.matmul %278, %279, %cst_129 {dimension_numbers = #tpu.dot_dimension_numbers<[1], [0], [0], [1], [0, 0, 1, 1], [], []>} : vector<16x16xbf16>, vector<16x8xbf16>, vector<16x8xf32> -> vector<16x8xf32>
    %281 = tpu.concatenate %229, %246, %263, %280 in 1 : vector<16x8xf32>, vector<16x8xf32>, vector<16x8xf32>, vector<16x8xf32> -> vector<16x32xf32>
    %282 = arith.truncf %281 : vector<16x32xf32> to vector<16x32xbf16>
    %c1_130 = arith.constant 1 : index
    %c0_131 = arith.constant 0 : index
    %c0_132 = arith.constant 0 : index
    %283 = vector.load %arg12[%c1_130, %c0_131, %c0_132] : memref<2x32x128xbf16, #tpu.memory_space<vmem>>, vector<1x32x128xbf16>
    %284 = vector.shape_cast %283 : vector<1x32x128xbf16> to vector<32x128xbf16>
    %cst_133 = arith.constant dense<0.000000e+00> : vector<16x128xf32>
    %285 = tpu.matmul %282, %284, %cst_133 {dimension_numbers = #tpu.dot_dimension_numbers<[1], [0], [0], [1], [0, 0, 1, 1], [], []>} : vector<16x32xbf16>, vector<32x128xbf16>, vector<16x128xf32> -> vector<16x128xf32>
    %c1_134 = arith.constant 1 : index
    %c0_135 = arith.constant 0 : index
    %c0_136 = arith.constant 0 : index
    %286 = vector.load %arg13[%c1_134, %c0_135, %c0_136] : memref<2x1x128xf32, #tpu.memory_space<vmem>>, vector<1x1x128xf32>
    %287 = vector.shape_cast %286 : vector<1x1x128xf32> to vector<1x128xf32>
    %288 = vector.broadcast %287 : vector<1x128xf32> to vector<16x128xf32>
    %289 = arith.addf %285, %288 : vector<16x128xf32>
    %290 = arith.addf %187, %289 : vector<16x128xf32>
    %c1_137 = arith.constant 1 : index
    %c0_138 = arith.constant 0 : index
    %c0_139 = arith.constant 0 : index
    %291 = vector.load %arg14[%c1_137, %c0_138, %c0_139] : memref<2x1x128xf32, #tpu.memory_space<vmem>>, vector<1x1x128xf32>
    %292 = vector.shape_cast %291 : vector<1x1x128xf32> to vector<1x128xf32>
    %c1_140 = arith.constant 1 : index
    %c0_141 = arith.constant 0 : index
    %c0_142 = arith.constant 0 : index
    %293 = vector.load %arg15[%c1_140, %c0_141, %c0_142] : memref<2x1x128xf32, #tpu.memory_space<vmem>>, vector<1x1x128xf32>
    %294 = vector.shape_cast %293 : vector<1x1x128xf32> to vector<1x128xf32>
    %cst_143 = arith.constant dense<0.000000e+00> : vector<16xf32>
    %295 = vector.multi_reduction <add>, %290, %cst_143 [1] : vector<16x128xf32> to vector<16xf32>
    %296 = vector.shape_cast %295 : vector<16xf32> to vector<16x1xf32>
    %cst_144 = arith.constant 3.125000e-02 : f32
    %297 = vector.broadcast %cst_144 : f32 to vector<16x1xf32>
    %298 = arith.mulf %296, %297 : vector<16x1xf32>
    %299 = arith.mulf %290, %290 : vector<16x128xf32>
    %cst_145 = arith.constant dense<0.000000e+00> : vector<16xf32>
    %300 = vector.multi_reduction <add>, %299, %cst_145 [1] : vector<16x128xf32> to vector<16xf32>
    %301 = vector.shape_cast %300 : vector<16xf32> to vector<16x1xf32>
    %cst_146 = arith.constant 3.125000e-02 : f32
    %302 = vector.broadcast %cst_146 : f32 to vector<16x1xf32>
    %303 = arith.mulf %301, %302 : vector<16x1xf32>
    %304 = arith.mulf %298, %298 : vector<16x1xf32>
    %305 = arith.subf %303, %304 : vector<16x1xf32>
    %cst_147 = arith.constant 0.000000e+00 : f32
    %306 = vector.broadcast %cst_147 : f32 to vector<16x1xf32>
    %307 = arith.maximumf %305, %306 : vector<16x1xf32>
    %308 = vector.broadcast %298 : vector<16x1xf32> to vector<16x128xf32>
    %309 = arith.subf %290, %308 : vector<16x128xf32>
    %cst_148 = arith.constant 9.99999974E-6 : f32
    %310 = vector.broadcast %cst_148 : f32 to vector<16x1xf32>
    %311 = arith.addf %307, %310 : vector<16x1xf32>
    %312 = math.rsqrt %311 : vector<16x1xf32>
    %313 = vector.broadcast %312 : vector<16x1xf32> to vector<16x128xf32>
    %314 = arith.mulf %309, %313 : vector<16x128xf32>
    %315 = vector.broadcast %292 : vector<1x128xf32> to vector<16x128xf32>
    %316 = arith.mulf %314, %315 : vector<16x128xf32>
    %317 = vector.broadcast %294 : vector<1x128xf32> to vector<16x128xf32>
    %318 = arith.addf %316, %317 : vector<16x128xf32>
    %319 = arith.truncf %318 : vector<16x128xf32> to vector<16x128xbf16>
    %c1_149 = arith.constant 1 : index
    %c0_150 = arith.constant 0 : index
    %c0_151 = arith.constant 0 : index
    %320 = vector.load %arg16[%c1_149, %c0_150, %c0_151] : memref<2x128x128xbf16, #tpu.memory_space<vmem>>, vector<1x128x128xbf16>
    %321 = vector.shape_cast %320 : vector<1x128x128xbf16> to vector<128x128xbf16>
    %cst_152 = arith.constant dense<0.000000e+00> : vector<16x128xf32>
    %322 = tpu.matmul %319, %321, %cst_152 {dimension_numbers = #tpu.dot_dimension_numbers<[1], [0], [0], [1], [0, 0, 1, 1], [], []>} : vector<16x128xbf16>, vector<128x128xbf16>, vector<16x128xf32> -> vector<16x128xf32>
    %c1_153 = arith.constant 1 : index
    %c0_154 = arith.constant 0 : index
    %c0_155 = arith.constant 0 : index
    %323 = vector.load %arg17[%c1_153, %c0_154, %c0_155] : memref<2x1x128xf32, #tpu.memory_space<vmem>>, vector<1x1x128xf32>
    %324 = vector.shape_cast %323 : vector<1x1x128xf32> to vector<1x128xf32>
    %325 = vector.broadcast %324 : vector<1x128xf32> to vector<16x128xf32>
    %326 = arith.addf %322, %325 : vector<16x128xf32>
    %cst_156 = arith.constant 0.000000e+00 : f32
    %327 = vector.broadcast %cst_156 : f32 to vector<16x128xf32>
    %328 = arith.maximumf %326, %327 : vector<16x128xf32>
    %329 = arith.truncf %328 : vector<16x128xf32> to vector<16x128xbf16>
    %c1_157 = arith.constant 1 : index
    %c0_158 = arith.constant 0 : index
    %c0_159 = arith.constant 0 : index
    %330 = vector.load %arg18[%c1_157, %c0_158, %c0_159] : memref<2x128x128xbf16, #tpu.memory_space<vmem>>, vector<1x128x128xbf16>
    %331 = vector.shape_cast %330 : vector<1x128x128xbf16> to vector<128x128xbf16>
    %cst_160 = arith.constant dense<0.000000e+00> : vector<16x128xf32>
    %332 = tpu.matmul %329, %331, %cst_160 {dimension_numbers = #tpu.dot_dimension_numbers<[1], [0], [0], [1], [0, 0, 1, 1], [], []>} : vector<16x128xbf16>, vector<128x128xbf16>, vector<16x128xf32> -> vector<16x128xf32>
    %c1_161 = arith.constant 1 : index
    %c0_162 = arith.constant 0 : index
    %c0_163 = arith.constant 0 : index
    %333 = vector.load %arg19[%c1_161, %c0_162, %c0_163] : memref<2x1x128xf32, #tpu.memory_space<vmem>>, vector<1x1x128xf32>
    %334 = vector.shape_cast %333 : vector<1x1x128xf32> to vector<1x128xf32>
    %335 = vector.broadcast %334 : vector<1x128xf32> to vector<16x128xf32>
    %336 = arith.addf %332, %335 : vector<16x128xf32>
    %337 = arith.addf %318, %336 : vector<16x128xf32>
    %c1_164 = arith.constant 1 : index
    %c0_165 = arith.constant 0 : index
    %c0_166 = arith.constant 0 : index
    %338 = vector.load %arg20[%c1_164, %c0_165, %c0_166] : memref<2x1x128xf32, #tpu.memory_space<vmem>>, vector<1x1x128xf32>
    %339 = vector.shape_cast %338 : vector<1x1x128xf32> to vector<1x128xf32>
    %c1_167 = arith.constant 1 : index
    %c0_168 = arith.constant 0 : index
    %c0_169 = arith.constant 0 : index
    %340 = vector.load %arg21[%c1_167, %c0_168, %c0_169] : memref<2x1x128xf32, #tpu.memory_space<vmem>>, vector<1x1x128xf32>
    %341 = vector.shape_cast %340 : vector<1x1x128xf32> to vector<1x128xf32>
    %cst_170 = arith.constant dense<0.000000e+00> : vector<16xf32>
    %342 = vector.multi_reduction <add>, %337, %cst_170 [1] : vector<16x128xf32> to vector<16xf32>
    %343 = vector.shape_cast %342 : vector<16xf32> to vector<16x1xf32>
    %cst_171 = arith.constant 3.125000e-02 : f32
    %344 = vector.broadcast %cst_171 : f32 to vector<16x1xf32>
    %345 = arith.mulf %343, %344 : vector<16x1xf32>
    %346 = arith.mulf %337, %337 : vector<16x128xf32>
    %cst_172 = arith.constant dense<0.000000e+00> : vector<16xf32>
    %347 = vector.multi_reduction <add>, %346, %cst_172 [1] : vector<16x128xf32> to vector<16xf32>
    %348 = vector.shape_cast %347 : vector<16xf32> to vector<16x1xf32>
    %cst_173 = arith.constant 3.125000e-02 : f32
    %349 = vector.broadcast %cst_173 : f32 to vector<16x1xf32>
    %350 = arith.mulf %348, %349 : vector<16x1xf32>
    %351 = arith.mulf %345, %345 : vector<16x1xf32>
    %352 = arith.subf %350, %351 : vector<16x1xf32>
    %cst_174 = arith.constant 0.000000e+00 : f32
    %353 = vector.broadcast %cst_174 : f32 to vector<16x1xf32>
    %354 = arith.maximumf %352, %353 : vector<16x1xf32>
    %355 = vector.broadcast %345 : vector<16x1xf32> to vector<16x128xf32>
    %356 = arith.subf %337, %355 : vector<16x128xf32>
    %cst_175 = arith.constant 9.99999974E-6 : f32
    %357 = vector.broadcast %cst_175 : f32 to vector<16x1xf32>
    %358 = arith.addf %354, %357 : vector<16x1xf32>
    %359 = math.rsqrt %358 : vector<16x1xf32>
    %360 = vector.broadcast %359 : vector<16x1xf32> to vector<16x128xf32>
    %361 = arith.mulf %356, %360 : vector<16x128xf32>
    %362 = vector.broadcast %339 : vector<1x128xf32> to vector<16x128xf32>
    %363 = arith.mulf %361, %362 : vector<16x128xf32>
    %364 = vector.broadcast %341 : vector<1x128xf32> to vector<16x128xf32>
    %365 = arith.addf %363, %364 : vector<16x128xf32>
    %366 = arith.truncf %365 : vector<16x128xf32> to vector<16x128xbf16>
    %c0_176 = arith.constant 0 : index
    %c0_177 = arith.constant 0 : index
    %367 = vector.load %arg22[%c0_176, %c0_177] : memref<128x128xbf16, #tpu.memory_space<vmem>>, vector<128x128xbf16>
    %cst_178 = arith.constant dense<0.000000e+00> : vector<16x128xf32>
    %368 = tpu.matmul %366, %367, %cst_178 {dimension_numbers = #tpu.dot_dimension_numbers<[1], [0], [0], [1], [0, 0, 1, 1], [], []>} : vector<16x128xbf16>, vector<128x128xbf16>, vector<16x128xf32> -> vector<16x128xf32>
    %c0_179 = arith.constant 0 : index
    %c0_180 = arith.constant 0 : index
    %369 = vector.load %arg23[%c0_179, %c0_180] : memref<1x128xf32, #tpu.memory_space<vmem>>, vector<1x128xf32>
    %370 = vector.broadcast %369 : vector<1x128xf32> to vector<16x128xf32>
    %371 = arith.addf %368, %370 : vector<16x128xf32>
    %c0_181 = arith.constant 0 : index
    %c0_182 = arith.constant 0 : index
    %372 = vector.load %arg24[%c0_181, %c0_182] : memref<16x128xf32, #tpu.memory_space<vmem>>, vector<16x128xf32>
    tpu.vector_store %arg24[%c0_181, %c0_182], %371 {strides = array<i32>} : memref<16x128xf32, #tpu.memory_space<vmem>>, vector<16x128xf32>,
    return
  }
  func.func @transform_0(%arg0: i32) -> (i32, i32) {
    %c0_i32 = arith.constant 0 : i32
    %c0_i32_0 = arith.constant 0 : i32
    return %arg0, %c0_i32 : i32, i32
  }
  func.func @transform_1(%arg0: i32) -> (i32, i32) {
    %c0_i32 = arith.constant 0 : i32
    %c0_i32_0 = arith.constant 0 : i32
    return %arg0, %c0_i32 : i32, i32
  }
  func.func @transform_2(%arg0: i32) -> (i32, i32) {
    %c0_i32 = arith.constant 0 : i32
    %c0_i32_0 = arith.constant 0 : i32
    %c0_i32_1 = arith.constant 0 : i32
    return %c0_i32, %c0_i32_0 : i32, i32
  }
  func.func @transform_3(%arg0: i32) -> (i32, i32) {
    %c0_i32 = arith.constant 0 : i32
    %c0_i32_0 = arith.constant 0 : i32
    %c0_i32_1 = arith.constant 0 : i32
    return %c0_i32, %c0_i32_0 : i32, i32
  }
  func.func @transform_4(%arg0: i32) -> (i32, i32) {
    %c0_i32 = arith.constant 0 : i32
    %c0_i32_0 = arith.constant 0 : i32
    %c0_i32_1 = arith.constant 0 : i32
    return %c0_i32, %c0_i32_0 : i32, i32
  }
  func.func @transform_5(%arg0: i32) -> (i32, i32, i32) {
    %c0_i32 = arith.constant 0 : i32
    %c0_i32_0 = arith.constant 0 : i32
    %c0_i32_1 = arith.constant 0 : i32
    %c0_i32_2 = arith.constant 0 : i32
    return %c0_i32, %c0_i32_0, %c0_i32_1 : i32, i32, i32
  }
  func.func @transform_6(%arg0: i32) -> (i32, i32, i32) {
    %c0_i32 = arith.constant 0 : i32
    %c0_i32_0 = arith.constant 0 : i32
    %c0_i32_1 = arith.constant 0 : i32
    %c0_i32_2 = arith.constant 0 : i32
    return %c0_i32, %c0_i32_0, %c0_i32_1 : i32, i32, i32
  }
  func.func @transform_7(%arg0: i32) -> (i32, i32, i32) {
    %c0_i32 = arith.constant 0 : i32
    %c0_i32_0 = arith.constant 0 : i32
    %c0_i32_1 = arith.constant 0 : i32
    %c0_i32_2 = arith.constant 0 : i32
    return %c0_i32, %c0_i32_0, %c0_i32_1 : i32, i32, i32
  }
  func.func @transform_8(%arg0: i32) -> (i32, i32, i32) {
    %c0_i32 = arith.constant 0 : i32
    %c0_i32_0 = arith.constant 0 : i32
    %c0_i32_1 = arith.constant 0 : i32
    %c0_i32_2 = arith.constant 0 : i32
    return %c0_i32, %c0_i32_0, %c0_i32_1 : i32, i32, i32
  }
  func.func @transform_9(%arg0: i32) -> (i32, i32, i32) {
    %c0_i32 = arith.constant 0 : i32
    %c0_i32_0 = arith.constant 0 : i32
    %c0_i32_1 = arith.constant 0 : i32
    %c0_i32_2 = arith.constant 0 : i32
    return %c0_i32, %c0_i32_0, %c0_i32_1 : i32, i32, i32
  }
  func.func @transform_10(%arg0: i32) -> (i32, i32, i32) {
    %c0_i32 = arith.constant 0 : i32
    %c0_i32_0 = arith.constant 0 : i32
    %c0_i32_1 = arith.constant 0 : i32
    %c0_i32_2 = arith.constant 0 : i32
    return %c0_i32, %c0_i32_0, %c0_i32_1 : i32, i32, i32
  }
  func.func @transform_11(%arg0: i32) -> (i32, i32, i32) {
    %c0_i32 = arith.constant 0 : i32
    %c0_i32_0 = arith.constant 0 : i32
    %c0_i32_1 = arith.constant 0 : i32
    %c0_i32_2 = arith.constant 0 : i32
    return %c0_i32, %c0_i32_0, %c0_i32_1 : i32, i32, i32
  }
  func.func @transform_12(%arg0: i32) -> (i32, i32, i32) {
    %c0_i32 = arith.constant 0 : i32
    %c0_i32_0 = arith.constant 0 : i32
    %c0_i32_1 = arith.constant 0 : i32
    %c0_i32_2 = arith.constant 0 : i32
    return %c0_i32, %c0_i32_0, %c0_i32_1 : i32, i32, i32
  }
  func.func @transform_13(%arg0: i32) -> (i32, i32, i32) {
    %c0_i32 = arith.constant 0 : i32
    %c0_i32_0 = arith.constant 0 : i32
    %c0_i32_1 = arith.constant 0 : i32
    %c0_i32_2 = arith.constant 0 : i32
    return %c0_i32, %c0_i32_0, %c0_i32_1 : i32, i32, i32
  }
  func.func @transform_14(%arg0: i32) -> (i32, i32, i32) {
    %c0_i32 = arith.constant 0 : i32
    %c0_i32_0 = arith.constant 0 : i32
    %c0_i32_1 = arith.constant 0 : i32
    %c0_i32_2 = arith.constant 0 : i32
    return %c0_i32, %c0_i32_0, %c0_i32_1 : i32, i32, i32
  }
  func.func @transform_15(%arg0: i32) -> (i32, i32, i32) {
    %c0_i32 = arith.constant 0 : i32
    %c0_i32_0 = arith.constant 0 : i32
    %c0_i32_1 = arith.constant 0 : i32
    %c0_i32_2 = arith.constant 0 : i32
    return %c0_i32, %c0_i32_0, %c0_i32_1 : i32, i32, i32
  }
  func.func @transform_16(%arg0: i32) -> (i32, i32, i32) {
    %c0_i32 = arith.constant 0 : i32
    %c0_i32_0 = arith.constant 0 : i32
    %c0_i32_1 = arith.constant 0 : i32
    %c0_i32_2 = arith.constant 0 : i32
    return %c0_i32, %c0_i32_0, %c0_i32_1 : i32, i32, i32
  }
  func.func @transform_17(%arg0: i32) -> (i32, i32, i32) {
    %c0_i32 = arith.constant 0 : i32
    %c0_i32_0 = arith.constant 0 : i32
    %c0_i32_1 = arith.constant 0 : i32
    %c0_i32_2 = arith.constant 0 : i32
    return %c0_i32, %c0_i32_0, %c0_i32_1 : i32, i32, i32
  }
  func.func @transform_18(%arg0: i32) -> (i32, i32, i32) {
    %c0_i32 = arith.constant 0 : i32
    %c0_i32_0 = arith.constant 0 : i32
    %c0_i32_1 = arith.constant 0 : i32
    %c0_i32_2 = arith.constant 0 : i32
    return %c0_i32, %c0_i32_0, %c0_i32_1 : i32, i32, i32
  }
  func.func @transform_19(%arg0: i32) -> (i32, i32, i32) {
    %c0_i32 = arith.constant 0 : i32
    %c0_i32_0 = arith.constant 0 : i32
    %c0_i32_1 = arith.constant 0 : i32
    %c0_i32_2 = arith.constant 0 : i32
    return %c0_i32, %c0_i32_0, %c0_i32_1 : i32, i32, i32
  }
  func.func @transform_20(%arg0: i32) -> (i32, i32, i32) {
    %c0_i32 = arith.constant 0 : i32
    %c0_i32_0 = arith.constant 0 : i32
    %c0_i32_1 = arith.constant 0 : i32
    %c0_i32_2 = arith.constant 0 : i32
    return %c0_i32, %c0_i32_0, %c0_i32_1 : i32, i32, i32
  }
  func.func @transform_21(%arg0: i32) -> (i32, i32) {
    %c0_i32 = arith.constant 0 : i32
    %c0_i32_0 = arith.constant 0 : i32
    %c0_i32_1 = arith.constant 0 : i32
    return %c0_i32, %c0_i32_0 : i32, i32
  }
  func.func @transform_22(%arg0: i32) -> (i32, i32) {
    %c0_i32 = arith.constant 0 : i32
    %c0_i32_0 = arith.constant 0 : i32
    %c0_i32_1 = arith.constant 0 : i32
    return %c0_i32, %c0_i32_0 : i32, i32
  }
  func.func @transform_23(%arg0: i32) -> (i32, i32) {
    %c0_i32 = arith.constant 0 : i32
    %c0_i32_0 = arith.constant 0 : i32
    return %arg0, %c0_i32 : i32, i32
  }
}

</mosaic_0001>

<llo_original>
// kernel: tpu_custom_call.1
$region0: #{tpu_custom_call.1}
  #allocation0 [shape = 'u32[]', space=smem, size = 0x4, offset = 0x4, fixed_abs, tag = 'smem constant byte address 0x4 - core index']
  #allocation1 [shape = 'u32[144,128]{1,0:T(1,128)}', space=vmem, size = 0x12000, scoped, tag = 'internal scratch']
  %s0 = inlined_call_operand.hbm [shape: f32[32,128], index: 0, kind: input, shape index: {}]
  %s1 = inlined_call_operand.hbm [shape: f32[32,128], index: 1, kind: input, shape index: {}]
  %s2 = inlined_call_operand.hbm [shape: f32[16,16], index: 2, kind: input, shape index: {}]
  %s3 = inlined_call_operand.hbm [shape: bf16[128,128], index: 3, kind: input, shape index: {}]
  %s4 = inlined_call_operand.vmem [shape: f32[1,128], index: 4, kind: input, shape index: {}]
  %s5 = inlined_call_operand.hbm [shape: bf16[2,128,128], index: 5, kind: input, shape index: {}]
  %s6 = inlined_call_operand.vmem [shape: f32[2,1,128], index: 6, kind: input, shape index: {}]
  %s7 = inlined_call_operand.hbm [shape: bf16[2,128,128], index: 7, kind: input, shape index: {}]
  %s8 = inlined_call_operand.vmem [shape: f32[2,1,128], index: 8, kind: input, shape index: {}]
  %s9 = inlined_call_operand.hbm [shape: bf16[2,128,128], index: 9, kind: input, shape index: {}]
  %s10 = inlined_call_operand.vmem [shape: f32[2,1,128], index: 10, kind: input, shape index: {}]
  %s11 = inlined_call_operand.hbm [shape: bf16[2,32,128], index: 11, kind: input, shape index: {}]
  %s12 = inlined_call_operand.vmem [shape: f32[2,1,128], index: 12, kind: input, shape index: {}]
  %s13 = inlined_call_operand.vmem [shape: f32[2,1,128], index: 13, kind: input, shape index: {}]
  %s14 = inlined_call_operand.vmem [shape: f32[2,1,128], index: 14, kind: input, shape index: {}]
  %s15 = inlined_call_operand.hbm [shape: bf16[2,128,128], index: 15, kind: input, shape index: {}]
  %s16 = inlined_call_operand.vmem [shape: f32[2,1,128], index: 16, kind: input, shape index: {}]
  %s17 = inlined_call_operand.hbm [shape: bf16[2,128,128], index: 17, kind: input, shape index: {}]
  %s18 = inlined_call_operand.hbm [shape: f32[2,1,128], index: 18, kind: input, shape index: {}]
  %s19 = inlined_call_operand.hbm [shape: f32[2,1,128], index: 19, kind: input, shape index: {}]
  %s20 = inlined_call_operand.hbm [shape: f32[2,1,128], index: 20, kind: input, shape index: {}]
  %s21 = inlined_call_operand.vmem [shape: bf16[128,128], index: 21, kind: input, shape index: {}]
  %s22 = inlined_call_operand.vmem [shape: f32[1,128], index: 22, kind: input, shape index: {}]
  %s23 = inlined_call_operand.hbm [shape: f32[32,128], index: 23, kind: output, shape index: {}]
  %s24 = sld [smem:[#allocation0]]
  $region177: #{tpu_custom_call.1} parent=0
    _
  %s26 = ssub.s32 1, %s24
  %s27 = scalar_select 0, %s26, %s24
  $region1: #{tpu_custom_call.1} parent=0
    #allocation2 [shape = 'u8[16384]{0}', space=vmem, size = 0x4000, scoped, tag = 'input window, operand 0']
    #allocation3 [shape = 's32[2]{0}', space=sflag, size = 0x8, scoped, tag = 'scoped memory for tpu_custom_call.1']
    #allocation4 [shape = 's32[2]{0}', space=sflag, size = 0x8, scoped, tag = 'scoped memory for tpu_custom_call.1']
    #allocation5 [shape = 'u8[16384]{0}', space=vmem, size = 0x4000, scoped, tag = 'input window, operand 1']
    #allocation6 [shape = 's32[2]{0}', space=sflag, size = 0x8, scoped, tag = 'scoped memory for tpu_custom_call.1']
    #allocation7 [shape = 'u8[8192]{0}', space=vmem, size = 0x2000, scoped, tag = 'input window, operand 2, single buffered']
    #allocation8 [shape = 'u8[32768]{0}', space=vmem, size = 0x8000, scoped, tag = 'input window, operand 3, single buffered']
    #allocation9 [shape = 's32[1]{0}', space=sflag, size = 0x4, scoped, tag = 'scoped memory for tpu_custom_call.1']
    #allocation10 [shape = 'u8[65536]{0}', space=vmem, size = 0x10000, scoped, tag = 'input window, operand 5, single buffered']
    #allocation11 [shape = 'u8[65536]{0}', space=vmem, size = 0x10000, scoped, tag = 'input window, operand 7, single buffered']
    #allocation12 [shape = 's32[1]{0}', space=sflag, size = 0x4, scoped, tag = 'scoped memory for tpu_custom_call.1']
    #allocation13 [shape = 'u8[65536]{0}', space=vmem, size = 0x10000, scoped, tag = 'input window, operand 9, single buffered']
    #allocation14 [shape = 'u8[16384]{0}', space=vmem, size = 0x4000, scoped, tag = 'input window, operand 11, single buffered']
    #allocation15 [shape = 's32[1]{0}', space=sflag, size = 0x4, scoped, tag = 'scoped memory for tpu_custom_call.1']
    #allocation16 [shape = 'u8[65536]{0}', space=vmem, size = 0x10000, scoped, tag = 'input window, operand 15, single buffered']
    #allocation17 [shape = 'u8[65536]{0}', space=vmem, size = 0x10000, scoped, tag = 'input window, operand 17, single buffered']
    #allocation18 [shape = 's32[1]{0}', space=sflag, size = 0x4, scoped, tag = 'scoped memory for tpu_custom_call.1']
    #allocation19 [shape = 'u8[1024]{0}', space=vmem, size = 0x400, scoped, tag = 'input window, operand 18, single buffered']
    #allocation20 [shape = 'u8[1024]{0}', space=vmem, size = 0x400, scoped, tag = 'input window, operand 19, single buffered']
    #allocation21 [shape = 's32[1]{0}', space=sflag, size = 0x4, scoped, tag = 'scoped memory for tpu_custom_call.1']
    #allocation22 [shape = 'u8[1024]{0}', space=vmem, size = 0x400, scoped, tag = 'input window, operand 20, single buffered']
    #allocation23 [shape = 'u8[16384]{0}', space=vmem, size = 0x4000, scoped, tag = 'output window, operand 0']
    %28 = vsyncpa [#allocation3], 0
    %s29 = scalar_lea.sflag [#allocation3], 1
    %30 = vsyncpa %s29, 0
    %31 = vsyncpa [#allocation6], 0
    %s32 = scalar_lea.sflag [#allocation6], 1
    %33 = vsyncpa %s32, 0
    %34 = vsyncpa [#allocation9], 0
    %35 = vsyncpa [#allocation12], 0
    %36 = vsyncpa [#allocation15], 0
    %37 = vsyncpa [#allocation18], 0
    %38 = vsyncpa [#allocation21], 0
    %39 = vsyncpa [#allocation4], 0
    %s40 = scalar_lea.sflag [#allocation4], 1
    %41 = vsyncpa %s40, 0
    loop: start=0, step=1, limit=4
    $region2: #{tpu_custom_call.1} parent=1 // loop_pre_header
      _
    $region3: #{tpu_custom_call.1} parent=1 // loop_header
      %s43 = sphi 0, %s47
      %p44 = scmp.ge.s32.totalorder %s43, 4
      %s53 = sphi 0, %s55
      %s56 = sphi 0, %s53
      %s57 = sphi 0, %s56
      %s73 = sphi 0, %s57
      %s79 = sphi 0, %s81
      %s82 = sphi 0, %s79
      %s83 = sphi 0, %s82
      %s99 = sphi 0, %s83
      %s103 = sphi 0, %s103
      %s105 = sphi 0, %s103
      %s106 = sphi 0, %s105
      %s120 = sphi 0, %s106
      %s124 = sphi 0, %s124
      %s126 = sphi 0, %s124
      %s127 = sphi 0, %s126
      %s141 = sphi 0, %s127
      %s145 = sphi 0, %s145
      %s147 = sphi 0, %s145
      %s148 = sphi 0, %s147
      %s162 = sphi 0, %s148
      %s166 = sphi 0, %s166
      %s168 = sphi 0, %s166
      %s169 = sphi 0, %s168
      %s183 = sphi 0, %s169
      %s187 = sphi 0, %s187
      %s189 = sphi 0, %s187
      %s190 = sphi 0, %s189
      %s204 = sphi 0, %s190
      %s208 = sphi 0, %s208
      %s210 = sphi 0, %s208
      %s211 = sphi 0, %s210
      %s225 = sphi 0, %s211
      %s229 = sphi 0, %s229
      %s231 = sphi 0, %s229
      %s232 = sphi 0, %s231
      %s246 = sphi 0, %s232
      %s250 = sphi 0, %s250
      %s252 = sphi 0, %s250
      %s253 = sphi 0, %s252
      %s267 = sphi 0, %s253
      %s271 = sphi 0, %s271
      %s273 = sphi 0, %s271
      %s274 = sphi 0, %s273
      %s288 = sphi 0, %s274
      %s292 = sphi 0, %s292
      %s294 = sphi 0, %s292
      %s295 = sphi 0, %s294
      %s309 = sphi 0, %s295
      %s313 = sphi 0, %s313
      %s315 = sphi 0, %s313
      %s316 = sphi 0, %s315
      %s330 = sphi 0, %s316
      %s334 = sphi 0, %s334
      %s336 = sphi 0, %s334
      %s337 = sphi 0, %s336
      %s351 = sphi 0, %s337
      %s355 = sphi 0, %s355
      %s357 = sphi 0, %s355
      %s358 = sphi 0, %s357
      %s372 = sphi 0, %s358
      %s376 = sphi 0, %s376
      %s378 = sphi 0, %s376
      %s379 = sphi 0, %s378
      %s393 = sphi 0, %s379
      %s397 = sphi 0, %s397
      %s399 = sphi 0, %s397
      %s400 = sphi 0, %s399
      %s414 = sphi 0, %s400
      %s418 = sphi 0, %s418
      %s420 = sphi 0, %s418
      %s421 = sphi 0, %s420
      %s435 = sphi 0, %s421
      %s439 = sphi 0, %s439
      %s441 = sphi 0, %s439
      %s442 = sphi 0, %s441
      %s456 = sphi 0, %s442
      %s460 = sphi 0, %s460
      %s462 = sphi 0, %s460
      %s463 = sphi 0, %s462
      %s477 = sphi 0, %s463
      %s481 = sphi 0, %s481
      %s483 = sphi 0, %s481
      %s484 = sphi 0, %s483
      %s498 = sphi 0, %s484
      %s502 = sphi 0, %s502
      %s504 = sphi 0, %s502
      %s505 = sphi 0, %s504
      %s519 = sphi 0, %s505
      %s523 = sphi 0, %s523
      %s525 = sphi 0, %s523
      %s526 = sphi 0, %s525
      %s540 = sphi 0, %s526
      %s546 = sphi 0, %s548
      %s549 = sphi 0, %s546
      %s550 = sphi 0, %s549
      %s566 = sphi 0, %s550
    $region4: #{tpu_custom_call.1} parent=1 // loop_header_branch
      %46 = sbr.rel (%p44) target = $region8
    $region5: #{tpu_custom_call.1} parent=1 // loop_body
      %s48 = ssub.s32 %s43, 1
      %s49 = ssub.s32 %s43, 2
      %s50 = sadd.s32 %s43, 1
      %s51 = ssub.s32 %s43, %s50
      %p52 = scmp.eq.s32.totalorder %s51, 0
      %s54 = sadd.s32 %s53, 1
      %s55 = scalar_select %p52, %s53, %s54
      %p58 = pneg %p52
      %p59 = scmp.eq.s32.totalorder %s43, 1
      %p60 = por %p58, %p59
      %p61 = scmp.ne.s32.totalorder %s53, %s56
      %p62 = scmp.eq.s32.totalorder %s43, 0
      %p63 = por %p61, %p62
      %p64 = scmp.ne.s32.totalorder %s53, %s56
      %p65 = scmp.eq.s32.totalorder %s48, 1
      %p66 = por %p64, %p65
      %p67 = scmp.ne.s32.totalorder %s56, %s57
      %p68 = scmp.eq.s32.totalorder %s48, 0
      %p69 = por %p67, %p68
      %p70 = scmp.ne.s32.totalorder %s56, %s57
      %p71 = scmp.eq.s32.totalorder %s49, 1
      %p72 = por %p70, %p71
      %p74 = scmp.ne.s32.totalorder %s57, %s73
      %p75 = scmp.eq.s32.totalorder %s49, 0
      %p76 = por %p74, %p75
      %s77 = ssub.s32 %s43, %s50
      %p78 = scmp.eq.s32.totalorder %s77, 0
      %s80 = sadd.s32 %s79, 1
      %s81 = scalar_select %p78, %s79, %s80
      %p84 = pneg %p78
      %p85 = scmp.eq.s32.totalorder %s43, 1
      %p86 = por %p84, %p85
      %p87 = scmp.ne.s32.totalorder %s79, %s82
      %p88 = scmp.eq.s32.totalorder %s43, 0
      %p89 = por %p87, %p88
      %p90 = scmp.ne.s32.totalorder %s79, %s82
      %p91 = scmp.eq.s32.totalorder %s48, 1
      %p92 = por %p90, %p91
      %p93 = scmp.ne.s32.totalorder %s82, %s83
      %p94 = scmp.eq.s32.totalorder %s48, 0
      %p95 = por %p93, %p94
      %p96 = scmp.ne.s32.totalorder %s82, %s83
      %p97 = scmp.eq.s32.totalorder %s49, 1
      %p98 = por %p96, %p97
      %p100 = scmp.ne.s32.totalorder %s83, %s99
      %p101 = scmp.eq.s32.totalorder %s49, 0
      %p102 = por %p100, %p101
      %s104 = sadd.s32 %s103, 1
      %p107 = scmp.eq.s32.totalorder %s43, 1
      %p108 = scmp.ne.s32.totalorder %s103, %s105
      %p109 = scmp.eq.s32.totalorder %s43, 0
      %p110 = por %p108, %p109
      %p111 = scmp.ne.s32.totalorder %s103, %s105
      %p112 = scmp.eq.s32.totalorder %s48, 1
      %p113 = por %p111, %p112
      %p114 = scmp.ne.s32.totalorder %s105, %s106
      %p115 = scmp.eq.s32.totalorder %s48, 0
      %p116 = por %p114, %p115
      %p117 = scmp.ne.s32.totalorder %s105, %s106
      %p118 = scmp.eq.s32.totalorder %s49, 1
      %p119 = por %p117, %p118
      %p121 = scmp.ne.s32.totalorder %s106, %s120
      %p122 = scmp.eq.s32.totalorder %s49, 0
      %p123 = por %p121, %p122
      %s125 = sadd.s32 %s124, 1
      %p128 = scmp.eq.s32.totalorder %s43, 1
      %p129 = scmp.ne.s32.totalorder %s124, %s126
      %p130 = scmp.eq.s32.totalorder %s43, 0
      %p131 = por %p129, %p130
      %p132 = scmp.ne.s32.totalorder %s124, %s126
      %p133 = scmp.eq.s32.totalorder %s48, 1
      %p134 = por %p132, %p133
      %p135 = scmp.ne.s32.totalorder %s126, %s127
      %p136 = scmp.eq.s32.totalorder %s48, 0
      %p137 = por %p135, %p136
      %p138 = scmp.ne.s32.totalorder %s126, %s127
      %p139 = scmp.eq.s32.totalorder %s49, 1
      %p140 = por %p138, %p139
      %p142 = scmp.ne.s32.totalorder %s127, %s141
      %p143 = scmp.eq.s32.totalorder %s49, 0
      %p144 = por %p142, %p143
      %s146 = sadd.s32 %s145, 1
      %p149 = scmp.eq.s32.totalorder %s43, 1
      %p150 = scmp.ne.s32.totalorder %s145, %s147
      %p151 = scmp.eq.s32.totalorder %s43, 0
      %p152 = por %p150, %p151
      %p153 = scmp.ne.s32.totalorder %s145, %s147
      %p154 = scmp.eq.s32.totalorder %s48, 1
      %p155 = por %p153, %p154
      %p156 = scmp.ne.s32.totalorder %s147, %s148
      %p157 = scmp.eq.s32.totalorder %s48, 0
      %p158 = por %p156, %p157
      %p159 = scmp.ne.s32.totalorder %s147, %s148
      %p160 = scmp.eq.s32.totalorder %s49, 1
      %p161 = por %p159, %p160
      %p163 = scmp.ne.s32.totalorder %s148, %s162
      %p164 = scmp.eq.s32.totalorder %s49, 0
      %p165 = por %p163, %p164
      %s167 = sadd.s32 %s166, 1
      %p170 = scmp.eq.s32.totalorder %s43, 1
      %p171 = scmp.ne.s32.totalorder %s166, %s168
      %p172 = scmp.eq.s32.totalorder %s43, 0
      %p173 = por %p171, %p172
      %p174 = scmp.ne.s32.totalorder %s166, %s168
      %p175 = scmp.eq.s32.totalorder %s48, 1
      %p176 = por %p174, %p175
      %p177 = scmp.ne.s32.totalorder %s168, %s169
      %p178 = scmp.eq.s32.totalorder %s48, 0
      %p179 = por %p177, %p178
      %p180 = scmp.ne.s32.totalorder %s168, %s169
      %p181 = scmp.eq.s32.totalorder %s49, 1
      %p182 = por %p180, %p181
      %p184 = scmp.ne.s32.totalorder %s169, %s183
      %p185 = scmp.eq.s32.totalorder %s49, 0
      %p186 = por %p184, %p185
      %s188 = sadd.s32 %s187, 1
      %p191 = scmp.eq.s32.totalorder %s43, 1
      %p192 = scmp.ne.s32.totalorder %s187, %s189
      %p193 = scmp.eq.s32.totalorder %s43, 0
      %p194 = por %p192, %p193
      %p195 = scmp.ne.s32.totalorder %s187, %s189
      %p196 = scmp.eq.s32.totalorder %s48, 1
      %p197 = por %p195, %p196
      %p198 = scmp.ne.s32.totalorder %s189, %s190
      %p199 = scmp.eq.s32.totalorder %s48, 0
      %p200 = por %p198, %p199
      %p201 = scmp.ne.s32.totalorder %s189, %s190
      %p202 = scmp.eq.s32.totalorder %s49, 1
      %p203 = por %p201, %p202
      %p205 = scmp.ne.s32.totalorder %s190, %s204
      %p206 = scmp.eq.s32.totalorder %s49, 0
      %p207 = por %p205, %p206
      %s209 = sadd.s32 %s208, 1
      %p212 = scmp.eq.s32.totalorder %s43, 1
      %p213 = scmp.ne.s32.totalorder %s208, %s210
      %p214 = scmp.eq.s32.totalorder %s43, 0
      %p215 = por %p213, %p214
      %p216 = scmp.ne.s32.totalorder %s208, %s210
      %p217 = scmp.eq.s32.totalorder %s48, 1
      %p218 = por %p216, %p217
      %p219 = scmp.ne.s32.totalorder %s210, %s211
      %p220 = scmp.eq.s32.totalorder %s48, 0
      %p221 = por %p219, %p220
      %p222 = scmp.ne.s32.totalorder %s210, %s211
      %p223 = scmp.eq.s32.totalorder %s49, 1
      %p224 = por %p222, %p223
      %p226 = scmp.ne.s32.totalorder %s211, %s225
      %p227 = scmp.eq.s32.totalorder %s49, 0
      %p228 = por %p226, %p227
      %s230 = sadd.s32 %s229, 1
      %p233 = scmp.eq.s32.totalorder %s43, 1
      %p234 = scmp.ne.s32.totalorder %s229, %s231
      %p235 = scmp.eq.s32.totalorder %s43, 0
      %p236 = por %p234, %p235
      %p237 = scmp.ne.s32.totalorder %s229, %s231
      %p238 = scmp.eq.s32.totalorder %s48, 1
      %p239 = por %p237, %p238
      %p240 = scmp.ne.s32.totalorder %s231, %s232
      %p241 = scmp.eq.s32.totalorder %s48, 0
      %p242 = por %p240, %p241
      %p243 = scmp.ne.s32.totalorder %s231, %s232
      %p244 = scmp.eq.s32.totalorder %s49, 1
      %p245 = por %p243, %p244
      %p247 = scmp.ne.s32.totalorder %s232, %s246
      %p248 = scmp.eq.s32.totalorder %s49, 0
      %p249 = por %p247, %p248
      %s251 = sadd.s32 %s250, 1
      %p254 = scmp.eq.s32.totalorder %s43, 1
      %p255 = scmp.ne.s32.totalorder %s250, %s252
      %p256 = scmp.eq.s32.totalorder %s43, 0
      %p257 = por %p255, %p256
      %p258 = scmp.ne.s32.totalorder %s250, %s252
      %p259 = scmp.eq.s32.totalorder %s48, 1
      %p260 = por %p258, %p259
      %p261 = scmp.ne.s32.totalorder %s252, %s253
      %p262 = scmp.eq.s32.totalorder %s48, 0
      %p263 = por %p261, %p262
      %p264 = scmp.ne.s32.totalorder %s252, %s253
      %p265 = scmp.eq.s32.totalorder %s49, 1
      %p266 = por %p264, %p265
      %p268 = scmp.ne.s32.totalorder %s253, %s267
      %p269 = scmp.eq.s32.totalorder %s49, 0
      %p270 = por %p268, %p269
      %s272 = sadd.s32 %s271, 1
      %p275 = scmp.eq.s32.totalorder %s43, 1
      %p276 = scmp.ne.s32.totalorder %s271, %s273
      %p277 = scmp.eq.s32.totalorder %s43, 0
      %p278 = por %p276, %p277
      %p279 = scmp.ne.s32.totalorder %s271, %s273
      %p280 = scmp.eq.s32.totalorder %s48, 1
      %p281 = por %p279, %p280
      %p282 = scmp.ne.s32.totalorder %s273, %s274
      %p283 = scmp.eq.s32.totalorder %s48, 0
      %p284 = por %p282, %p283
      %p285 = scmp.ne.s32.totalorder %s273, %s274
      %p286 = scmp.eq.s32.totalorder %s49, 1
      %p287 = por %p285, %p286
      %p289 = scmp.ne.s32.totalorder %s274, %s288
      %p290 = scmp.eq.s32.totalorder %s49, 0
      %p291 = por %p289, %p290
      %s293 = sadd.s32 %s292, 1
      %p296 = scmp.eq.s32.totalorder %s43, 1
      %p297 = scmp.ne.s32.totalorder %s292, %s294
      %p298 = scmp.eq.s32.totalorder %s43, 0
      %p299 = por %p297, %p298
      %p300 = scmp.ne.s32.totalorder %s292, %s294
      %p301 = scmp.eq.s32.totalorder %s48, 1
      %p302 = por %p300, %p301
      %p303 = scmp.ne.s32.totalorder %s294, %s295
      %p304 = scmp.eq.s32.totalorder %s48, 0
      %p305 = por %p303, %p304
      %p306 = scmp.ne.s32.totalorder %s294, %s295
      %p307 = scmp.eq.s32.totalorder %s49, 1
      %p308 = por %p306, %p307
      %p310 = scmp.ne.s32.totalorder %s295, %s309
      %p311 = scmp.eq.s32.totalorder %s49, 0
      %p312 = por %p310, %p311
      %s314 = sadd.s32 %s313, 1
      %p317 = scmp.eq.s32.totalorder %s43, 1
      %p318 = scmp.ne.s32.totalorder %s313, %s315
      %p319 = scmp.eq.s32.totalorder %s43, 0
      %p320 = por %p318, %p319
      %p321 = scmp.ne.s32.totalorder %s313, %s315
      %p322 = scmp.eq.s32.totalorder %s48, 1
      %p323 = por %p321, %p322
      %p324 = scmp.ne.s32.totalorder %s315, %s316
      %p325 = scmp.eq.s32.totalorder %s48, 0
      %p326 = por %p324, %p325
      %p327 = scmp.ne.s32.totalorder %s315, %s316
      %p328 = scmp.eq.s32.totalorder %s49, 1
      %p329 = por %p327, %p328
      %p331 = scmp.ne.s32.totalorder %s316, %s330
      %p332 = scmp.eq.s32.totalorder %s49, 0
      %p333 = por %p331, %p332
      %s335 = sadd.s32 %s334, 1
      %p338 = scmp.eq.s32.totalorder %s43, 1
      %p339 = scmp.ne.s32.totalorder %s334, %s336
      %p340 = scmp.eq.s32.totalorder %s43, 0
      %p341 = por %p339, %p340
      %p342 = scmp.ne.s32.totalorder %s334, %s336
      %p343 = scmp.eq.s32.totalorder %s48, 1
      %p344 = por %p342, %p343
      %p345 = scmp.ne.s32.totalorder %s336, %s337
      %p346 = scmp.eq.s32.totalorder %s48, 0
      %p347 = por %p345, %p346
      %p348 = scmp.ne.s32.totalorder %s336, %s337
      %p349 = scmp.eq.s32.totalorder %s49, 1
      %p350 = por %p348, %p349
      %p352 = scmp.ne.s32.totalorder %s337, %s351
      %p353 = scmp.eq.s32.totalorder %s49, 0
      %p354 = por %p352, %p353
      %s356 = sadd.s32 %s355, 1
      %p359 = scmp.eq.s32.totalorder %s43, 1
      %p360 = scmp.ne.s32.totalorder %s355, %s357
      %p361 = scmp.eq.s32.totalorder %s43, 0
      %p362 = por %p360, %p361
      %p363 = scmp.ne.s32.totalorder %s355, %s357
      %p364 = scmp.eq.s32.totalorder %s48, 1
      %p365 = por %p363, %p364
      %p366 = scmp.ne.s32.totalorder %s357, %s358
      %p367 = scmp.eq.s32.totalorder %s48, 0
      %p368 = por %p366, %p367
      %p369 = scmp.ne.s32.totalorder %s357, %s358
      %p370 = scmp.eq.s32.totalorder %s49, 1
      %p371 = por %p369, %p370
      %p373 = scmp.ne.s32.totalorder %s358, %s372
      %p374 = scmp.eq.s32.totalorder %s49, 0
      %p375 = por %p373, %p374
      %s377 = sadd.s32 %s376, 1
      %p380 = scmp.eq.s32.totalorder %s43, 1
      %p381 = scmp.ne.s32.totalorder %s376, %s378
      %p382 = scmp.eq.s32.totalorder %s43, 0
      %p383 = por %p381, %p382
      %p384 = scmp.ne.s32.totalorder %s376, %s378
      %p385 = scmp.eq.s32.totalorder %s48, 1
      %p386 = por %p384, %p385
      %p387 = scmp.ne.s32.totalorder %s378, %s379
      %p388 = scmp.eq.s32.totalorder %s48, 0
      %p389 = por %p387, %p388
      %p390 = scmp.ne.s32.totalorder %s378, %s379
      %p391 = scmp.eq.s32.totalorder %s49, 1
      %p392 = por %p390, %p391
      %p394 = scmp.ne.s32.totalorder %s379, %s393
      %p395 = scmp.eq.s32.totalorder %s49, 0
      %p396 = por %p394, %p395
      %s398 = sadd.s32 %s397, 1
      %p401 = scmp.eq.s32.totalorder %s43, 1
      %p402 = scmp.ne.s32.totalorder %s397, %s399
      %p403 = scmp.eq.s32.totalorder %s43, 0
      %p404 = por %p402, %p403
      %p405 = scmp.ne.s32.totalorder %s397, %s399
      %p406 = scmp.eq.s32.totalorder %s48, 1
      %p407 = por %p405, %p406
      %p408 = scmp.ne.s32.totalorder %s399, %s400
      %p409 = scmp.eq.s32.totalorder %s48, 0
      %p410 = por %p408, %p409
      %p411 = scmp.ne.s32.totalorder %s399, %s400
      %p412 = scmp.eq.s32.totalorder %s49, 1
      %p413 = por %p411, %p412
      %p415 = scmp.ne.s32.totalorder %s400, %s414
      %p416 = scmp.eq.s32.totalorder %s49, 0
      %p417 = por %p415, %p416
      %s419 = sadd.s32 %s418, 1
      %p422 = scmp.eq.s32.totalorder %s43, 1
      %p423 = scmp.ne.s32.totalorder %s418, %s420
      %p424 = scmp.eq.s32.totalorder %s43, 0
      %p425 = por %p423, %p424
      %p426 = scmp.ne.s32.totalorder %s418, %s420
      %p427 = scmp.eq.s32.totalorder %s48, 1
      %p428 = por %p426, %p427
      %p429 = scmp.ne.s32.totalorder %s420, %s421
      %p430 = scmp.eq.s32.totalorder %s48, 0
      %p431 = por %p429, %p430
      %p432 = scmp.ne.s32.totalorder %s420, %s421
      %p433 = scmp.eq.s32.totalorder %s49, 1
      %p434 = por %p432, %p433
      %p436 = scmp.ne.s32.totalorder %s421, %s435
      %p437 = scmp.eq.s32.totalorder %s49, 0
      %p438 = por %p436, %p437
      %s440 = sadd.s32 %s439, 1
      %p443 = scmp.eq.s32.totalorder %s43, 1
      %p444 = scmp.ne.s32.totalorder %s439, %s441
      %p445 = scmp.eq.s32.totalorder %s43, 0
      %p446 = por %p444, %p445
      %p447 = scmp.ne.s32.totalorder %s439, %s441
      %p448 = scmp.eq.s32.totalorder %s48, 1
      %p449 = por %p447, %p448
      %p450 = scmp.ne.s32.totalorder %s441, %s442
      %p451 = scmp.eq.s32.totalorder %s48, 0
      %p452 = por %p450, %p451
      %p453 = scmp.ne.s32.totalorder %s441, %s442
      %p454 = scmp.eq.s32.totalorder %s49, 1
      %p455 = por %p453, %p454
      %p457 = scmp.ne.s32.totalorder %s442, %s456
      %p458 = scmp.eq.s32.totalorder %s49, 0
      %p459 = por %p457, %p458
      %s461 = sadd.s32 %s460, 1
      %p464 = scmp.eq.s32.totalorder %s43, 1
      %p465 = scmp.ne.s32.totalorder %s460, %s462
      %p466 = scmp.eq.s32.totalorder %s43, 0
      %p467 = por %p465, %p466
      %p468 = scmp.ne.s32.totalorder %s460, %s462
      %p469 = scmp.eq.s32.totalorder %s48, 1
      %p470 = por %p468, %p469
      %p471 = scmp.ne.s32.totalorder %s462, %s463
      %p472 = scmp.eq.s32.totalorder %s48, 0
      %p473 = por %p471, %p472
      %p474 = scmp.ne.s32.totalorder %s462, %s463
      %p475 = scmp.eq.s32.totalorder %s49, 1
      %p476 = por %p474, %p475
      %p478 = scmp.ne.s32.totalorder %s463, %s477
      %p479 = scmp.eq.s32.totalorder %s49, 0
      %p480 = por %p478, %p479
      %s482 = sadd.s32 %s481, 1
      %p485 = scmp.eq.s32.totalorder %s43, 1
      %p486 = scmp.ne.s32.totalorder %s481, %s483
      %p487 = scmp.eq.s32.totalorder %s43, 0
      %p488 = por %p486, %p487
      %p489 = scmp.ne.s32.totalorder %s481, %s483
      %p490 = scmp.eq.s32.totalorder %s48, 1
      %p491 = por %p489, %p490
      %p492 = scmp.ne.s32.totalorder %s483, %s484
      %p493 = scmp.eq.s32.totalorder %s48, 0
      %p494 = por %p492, %p493
      %p495 = scmp.ne.s32.totalorder %s483, %s484
      %p496 = scmp.eq.s32.totalorder %s49, 1
      %p497 = por %p495, %p496
      %p499 = scmp.ne.s32.totalorder %s484, %s498
      %p500 = scmp.eq.s32.totalorder %s49, 0
      %p501 = por %p499, %p500
      %s503 = sadd.s32 %s502, 1
      %p506 = scmp.eq.s32.totalorder %s43, 1
      %p507 = scmp.ne.s32.totalorder %s502, %s504
      %p508 = scmp.eq.s32.totalorder %s43, 0
      %p509 = por %p507, %p508
      %p510 = scmp.ne.s32.totalorder %s502, %s504
      %p511 = scmp.eq.s32.totalorder %s48, 1
      %p512 = por %p510, %p511
      %p513 = scmp.ne.s32.totalorder %s504, %s505
      %p514 = scmp.eq.s32.totalorder %s48, 0
      %p515 = por %p513, %p514
      %p516 = scmp.ne.s32.totalorder %s504, %s505
      %p517 = scmp.eq.s32.totalorder %s49, 1
      %p518 = por %p516, %p517
      %p520 = scmp.ne.s32.totalorder %s505, %s519
      %p521 = scmp.eq.s32.totalorder %s49, 0
      %p522 = por %p520, %p521
      %s524 = sadd.s32 %s523, 1
      %p527 = scmp.eq.s32.totalorder %s43, 1
      %p528 = scmp.ne.s32.totalorder %s523, %s525
      %p529 = scmp.eq.s32.totalorder %s43, 0
      %p530 = por %p528, %p529
      %p531 = scmp.ne.s32.totalorder %s523, %s525
      %p532 = scmp.eq.s32.totalorder %s48, 1
      %p533 = por %p531, %p532
      %p534 = scmp.ne.s32.totalorder %s525, %s526
      %p535 = scmp.eq.s32.totalorder %s48, 0
      %p536 = por %p534, %p535
      %p537 = scmp.ne.s32.totalorder %s525, %s526
      %p538 = scmp.eq.s32.totalorder %s49, 1
      %p539 = por %p537, %p538
      %p541 = scmp.ne.s32.totalorder %s526, %s540
      %p542 = scmp.eq.s32.totalorder %s49, 0
      %p543 = por %p541, %p542
      %s544 = ssub.s32 %s43, %s50
      %p545 = scmp.eq.s32.totalorder %s544, 0
      %s547 = sadd.s32 %s546, 1
      %s548 = scalar_select %p545, %s546, %s547
      %p551 = pneg %p545
      %p552 = scmp.eq.s32.totalorder %s43, 1
      %p553 = por %p551, %p552
      %p554 = scmp.ne.s32.totalorder %s546, %s549
      %p555 = scmp.eq.s32.totalorder %s43, 0
      %p556 = por %p554, %p555
      %p557 = scmp.ne.s32.totalorder %s546, %s549
      %p558 = scmp.eq.s32.totalorder %s48, 1
      %p559 = por %p557, %p558
      %p560 = scmp.ne.s32.totalorder %s549, %s550
      %p561 = scmp.eq.s32.totalorder %s48, 0
      %p562 = por %p560, %p561
      %p563 = scmp.ne.s32.totalorder %s549, %s550
      %p564 = scmp.eq.s32.totalorder %s49, 1
      %p565 = por %p563, %p564
      %p567 = scmp.ne.s32.totalorder %s550, %s566
      %p568 = scmp.eq.s32.totalorder %s49, 0
      %p569 = por %p567, %p568
      %p570 = scmp.le.s32.totalorder 1, %s43
      %p571 = scmp.lt.s32.totalorder %s43, 3
      %p572 = pnand %p570, %p571
      %p573 = pneg %p572
      // Predicated region
      $region9: #{tpu_custom_call.1} parent=5 // pred_check
        _
      $region10: #{tpu_custom_call.1} parent=5 // pred_check_branch
        %575 = sbr.rel (%p572) target = $region12
      $region11: #{tpu_custom_call.1} parent=5 // pred_region
        %s576 = ssub.s32 %s43, 1
        // Predicated region
        $region13: #{tpu_custom_call.1} parent=11 // pred_check
          %p577 = pneg %p116
        $region14: #{tpu_custom_call.1} parent=11 // pred_check_branch
          %579 = sbr.rel (%p577) target = $region16
        $region15: #{tpu_custom_call.1} parent=11 // pred_region
          %s581 = ssub.s32 256, 256
          %582 = vsyncadd [#allocation6], %s581
          %s583 = sshll.u32 [#allocation7], 4
          %s584 = int_to_ptr.vmem [resolvable:$true] %s583
          %589 = dma.hbm_to_vmem [thread:$0]  %s2, 256, %s584, [#allocation6], 128, 128, 8
        $region16: #{tpu_custom_call.1} parent=11 // pred_fallthru
          _
        // Predicated region
        $region17: #{tpu_custom_call.1} parent=11 // pred_check
          %p590 = pneg %p137
        $region18: #{tpu_custom_call.1} parent=11 // pred_check_branch
          %592 = sbr.rel (%p590) target = $region20
        $region19: #{tpu_custom_call.1} parent=11 // pred_region
          %s594 = ssub.s32 1024, 1024
          %595 = vsyncadd [#allocation9], %s594
          %s596 = sshll.u32 [#allocation8], 4
          %s597 = int_to_ptr.vmem [resolvable:$true] %s596
          %602 = dma.hbm_to_vmem [thread:$0]  %s3, 1024, %s597, [#allocation9], 64, 64, 4
        $region20: #{tpu_custom_call.1} parent=11 // pred_fallthru
          _
        // Predicated region
        $region21: #{tpu_custom_call.1} parent=11 // pred_check
          %p603 = pneg %p158
        $region22: #{tpu_custom_call.1} parent=11 // pred_check_branch
          %605 = sbr.rel (%p603) target = $region24
        $region23: #{tpu_custom_call.1} parent=11 // pred_region
          _
        $region24: #{tpu_custom_call.1} parent=11 // pred_fallthru
          _
        // Predicated region
        $region25: #{tpu_custom_call.1} parent=11 // pred_check
          %p606 = pneg %p179
        $region26: #{tpu_custom_call.1} parent=11 // pred_check_branch
          %608 = sbr.rel (%p606) target = $region28
        $region27: #{tpu_custom_call.1} parent=11 // pred_region
          %s610 = ssub.s32 2048, 2048
          %611 = vsyncadd [#allocation9], %s610
          %s612 = sshll.u32 [#allocation10], 4
          %s613 = int_to_ptr.vmem [resolvable:$true] %s612
          %618 = dma.hbm_to_vmem [thread:$0]  %s5, 2048, %s613, [#allocation9], 64, 64, 4
        $region28: #{tpu_custom_call.1} parent=11 // pred_fallthru
          _
        // Predicated region
        $region29: #{tpu_custom_call.1} parent=11 // pred_check
          %p619 = pneg %p200
        $region30: #{tpu_custom_call.1} parent=11 // pred_check_branch
          %621 = sbr.rel (%p619) target = $region32
        $region31: #{tpu_custom_call.1} parent=11 // pred_region
          _
        $region32: #{tpu_custom_call.1} parent=11 // pred_fallthru
          _
        // Predicated region
        $region33: #{tpu_custom_call.1} parent=11 // pred_check
          %p622 = pneg %p221
        $region34: #{tpu_custom_call.1} parent=11 // pred_check_branch
          %624 = sbr.rel (%p622) target = $region36
        $region35: #{tpu_custom_call.1} parent=11 // pred_region
          %s626 = ssub.s32 2048, 2048
          %627 = vsyncadd [#allocation12], %s626
          %s628 = sshll.u32 [#allocation11], 4
          %s629 = int_to_ptr.vmem [resolvable:$true] %s628
          %634 = dma.hbm_to_vmem [thread:$0]  %s7, 2048, %s629, [#allocation12], 64, 64, 4
        $region36: #{tpu_custom_call.1} parent=11 // pred_fallthru
          _
        // Predicated region
        $region37: #{tpu_custom_call.1} parent=11 // pred_check
          %p635 = pneg %p242
        $region38: #{tpu_custom_call.1} parent=11 // pred_check_branch
          %637 = sbr.rel (%p635) target = $region40
        $region39: #{tpu_custom_call.1} parent=11 // pred_region
          _
        $region40: #{tpu_custom_call.1} parent=11 // pred_fallthru
          _
        // Predicated region
        $region41: #{tpu_custom_call.1} parent=11 // pred_check
          %p638 = pneg %p263
        $region42: #{tpu_custom_call.1} parent=11 // pred_check_branch
          %640 = sbr.rel (%p638) target = $region44
        $region43: #{tpu_custom_call.1} parent=11 // pred_region
          %s642 = ssub.s32 2048, 2048
          %643 = vsyncadd [#allocation12], %s642
          %s644 = sshll.u32 [#allocation13], 4
          %s645 = int_to_ptr.vmem [resolvable:$true] %s644
          %650 = dma.hbm_to_vmem [thread:$0]  %s9, 2048, %s645, [#allocation12], 64, 64, 4
        $region44: #{tpu_custom_call.1} parent=11 // pred_fallthru
          _
        // Predicated region
        $region45: #{tpu_custom_call.1} parent=11 // pred_check
          %p651 = pneg %p284
        $region46: #{tpu_custom_call.1} parent=11 // pred_check_branch
          %653 = sbr.rel (%p651) target = $region48
        $region47: #{tpu_custom_call.1} parent=11 // pred_region
          _
        $region48: #{tpu_custom_call.1} parent=11 // pred_fallthru
          _
        // Predicated region
        $region49: #{tpu_custom_call.1} parent=11 // pred_check
          %p654 = pneg %p305
        $region50: #{tpu_custom_call.1} parent=11 // pred_check_branch
          %656 = sbr.rel (%p654) target = $region52
        $region51: #{tpu_custom_call.1} parent=11 // pred_region
          %s658 = ssub.s32 512, 512
          %659 = vsyncadd [#allocation15], %s658
          %s660 = sshll.u32 [#allocation14], 4
          %s661 = int_to_ptr.vmem [resolvable:$true] %s660
          %666 = dma.hbm_to_vmem [thread:$0]  %s11, 512, %s661, [#allocation15], 64, 64, 4
        $region52: #{tpu_custom_call.1} parent=11 // pred_fallthru
          _
        // Predicated region
        $region53: #{tpu_custom_call.1} parent=11 // pred_check
          %p667 = pneg %p326
        $region54: #{tpu_custom_call.1} parent=11 // pred_check_branch
          %669 = sbr.rel (%p667) target = $region56
        $region55: #{tpu_custom_call.1} parent=11 // pred_region
          _
        $region56: #{tpu_custom_call.1} parent=11 // pred_fallthru
          _
        // Predicated region
        $region57: #{tpu_custom_call.1} parent=11 // pred_check
          %p670 = pneg %p347
        $region58: #{tpu_custom_call.1} parent=11 // pred_check_branch
          %672 = sbr.rel (%p670) target = $region60
        $region59: #{tpu_custom_call.1} parent=11 // pred_region
          _
        $region60: #{tpu_custom_call.1} parent=11 // pred_fallthru
          _
        // Predicated region
        $region61: #{tpu_custom_call.1} parent=11 // pred_check
          %p673 = pneg %p368
        $region62: #{tpu_custom_call.1} parent=11 // pred_check_branch
          %675 = sbr.rel (%p673) target = $region64
        $region63: #{tpu_custom_call.1} parent=11 // pred_region
          _
        $region64: #{tpu_custom_call.1} parent=11 // pred_fallthru
          _
        // Predicated region
        $region65: #{tpu_custom_call.1} parent=11 // pred_check
          %p676 = pneg %p389
        $region66: #{tpu_custom_call.1} parent=11 // pred_check_branch
          %678 = sbr.rel (%p676) target = $region68
        $region67: #{tpu_custom_call.1} parent=11 // pred_region
          %s680 = ssub.s32 2048, 2048
          %681 = vsyncadd [#allocation15], %s680
          %s682 = sshll.u32 [#allocation16], 4
          %s683 = int_to_ptr.vmem [resolvable:$true] %s682
          %688 = dma.hbm_to_vmem [thread:$0]  %s15, 2048, %s683, [#allocation15], 64, 64, 4
        $region68: #{tpu_custom_call.1} parent=11 // pred_fallthru
          _
        // Predicated region
        $region69: #{tpu_custom_call.1} parent=11 // pred_check
          %p689 = pneg %p410
        $region70: #{tpu_custom_call.1} parent=11 // pred_check_branch
          %691 = sbr.rel (%p689) target = $region72
        $region71: #{tpu_custom_call.1} parent=11 // pred_region
          _
        $region72: #{tpu_custom_call.1} parent=11 // pred_fallthru
          _
        // Predicated region
        $region73: #{tpu_custom_call.1} parent=11 // pred_check
          %p692 = pneg %p431
        $region74: #{tpu_custom_call.1} parent=11 // pred_check_branch
          %694 = sbr.rel (%p692) target = $region76
        $region75: #{tpu_custom_call.1} parent=11 // pred_region
          %s696 = ssub.s32 2048, 2048
          %697 = vsyncadd [#allocation18], %s696
          %s698 = sshll.u32 [#allocation17], 4
          %s699 = int_to_ptr.vmem [resolvable:$true] %s698
          %704 = dma.hbm_to_vmem [thread:$0]  %s17, 2048, %s699, [#allocation18], 64, 64, 4
        $region76: #{tpu_custom_call.1} parent=11 // pred_fallthru
          _
        // Predicated region
        $region77: #{tpu_custom_call.1} parent=11 // pred_check
          %p705 = pneg %p452
        $region78: #{tpu_custom_call.1} parent=11 // pred_check_branch
          %707 = sbr.rel (%p705) target = $region80
        $region79: #{tpu_custom_call.1} parent=11 // pred_region
          %s709 = ssub.s32 32, 32
          %710 = vsyncadd [#allocation18], %s709
          %s711 = sshll.u32 [#allocation19], 4
          %s712 = int_to_ptr.vmem [resolvable:$true] %s711
          %717 = dma.hbm_to_vmem [thread:$0]  %s18, 32, %s712, [#allocation18], 16, 16, 1
        $region80: #{tpu_custom_call.1} parent=11 // pred_fallthru
          _
        // Predicated region
        $region81: #{tpu_custom_call.1} parent=11 // pred_check
          %p718 = pneg %p473
        $region82: #{tpu_custom_call.1} parent=11 // pred_check_branch
          %720 = sbr.rel (%p718) target = $region84
        $region83: #{tpu_custom_call.1} parent=11 // pred_region
          %s722 = ssub.s32 32, 32
          %723 = vsyncadd [#allocation21], %s722
          %s724 = sshll.u32 [#allocation20], 4
          %s725 = int_to_ptr.vmem [resolvable:$true] %s724
          %730 = dma.hbm_to_vmem [thread:$0]  %s19, 32, %s725, [#allocation21], 16, 16, 1
        $region84: #{tpu_custom_call.1} parent=11 // pred_fallthru
          _
        // Predicated region
        $region85: #{tpu_custom_call.1} parent=11 // pred_check
          %p731 = pneg %p494
        $region86: #{tpu_custom_call.1} parent=11 // pred_check_branch
          %733 = sbr.rel (%p731) target = $region88
        $region87: #{tpu_custom_call.1} parent=11 // pred_region
          %s735 = ssub.s32 32, 32
          %736 = vsyncadd [#allocation21], %s735
          %s737 = sshll.u32 [#allocation22], 4
          %s738 = int_to_ptr.vmem [resolvable:$true] %s737
          %743 = dma.hbm_to_vmem [thread:$0]  %s20, 32, %s738, [#allocation21], 16, 16, 1
        $region88: #{tpu_custom_call.1} parent=11 // pred_fallthru
          _
        // Predicated region
        $region89: #{tpu_custom_call.1} parent=11 // pred_check
          %p744 = pneg %p515
        $region90: #{tpu_custom_call.1} parent=11 // pred_check_branch
          %746 = sbr.rel (%p744) target = $region92
        $region91: #{tpu_custom_call.1} parent=11 // pred_region
          _
        $region92: #{tpu_custom_call.1} parent=11 // pred_fallthru
          _
        // Predicated region
        $region93: #{tpu_custom_call.1} parent=11 // pred_check
          %p747 = pneg %p536
        $region94: #{tpu_custom_call.1} parent=11 // pred_check_branch
          %749 = sbr.rel (%p747) target = $region96
        $region95: #{tpu_custom_call.1} parent=11 // pred_region
          _
        $region96: #{tpu_custom_call.1} parent=11 // pred_fallthru
          _
      $region12: #{tpu_custom_call.1} parent=5 // pred_fallthru
        _
      %p750 = scmp.lt.s32.totalorder %s43, 2
      // Predicated region
      $region97: #{tpu_custom_call.1} parent=5 // pred_check
        %p751 = pneg %p750
      $region98: #{tpu_custom_call.1} parent=5 // pred_check_branch
        %753 = sbr.rel (%p751) target = $region100
      $region99: #{tpu_custom_call.1} parent=5 // pred_region
        // Predicated region
        $region101: #{tpu_custom_call.1} parent=99 // pred_check
          %p754 = pneg %p63
        $region102: #{tpu_custom_call.1} parent=99 // pred_check_branch
          %756 = sbr.rel (%p754) target = $region104
        $region103: #{tpu_custom_call.1} parent=99 // pred_region
          %s757 = sand.u32 %s53, 1
          %s758 = scalar_lea.sflag [#allocation3], %s757
          %s759 = sand.u32 %s53, 1
          %s760 = smul.addr %s759, 16
          %s761 = scalar_lea.vmem [#allocation2], %s760
          %s762 = smul.u32 2, %s43
          %s764 = ssub.s32 256, 256
          %765 = vsyncadd %s758, %s764
          %s766 = smul.addr %s762, 128
          %s767 = scalar_lea.hbm %s0, %s766
          %s768 = sshll.u32 %s761, 4
          %s769 = int_to_ptr.vmem [resolvable:$true] %s768
          %774 = dma.hbm_to_vmem [thread:$0]  %s767, 256, %s769, %s758, 128, 128, 8
        $region104: #{tpu_custom_call.1} parent=99 // pred_fallthru
          _
        // Predicated region
        $region105: #{tpu_custom_call.1} parent=99 // pred_check
          %p775 = pneg %p89
        $region106: #{tpu_custom_call.1} parent=99 // pred_check_branch
          %777 = sbr.rel (%p775) target = $region108
        $region107: #{tpu_custom_call.1} parent=99 // pred_region
          %s778 = sand.u32 %s43, 1
          %s779 = scalar_lea.sflag [#allocation6], %s778
          %s780 = sand.u32 %s79, 1
          %s781 = smul.addr %s780, 16
          %s782 = scalar_lea.vmem [#allocation5], %s781
          %s783 = smul.u32 2, %s43
          %s785 = ssub.s32 256, 256
          %786 = vsyncadd %s779, %s785
          %s787 = smul.addr %s783, 128
          %s788 = scalar_lea.hbm %s1, %s787
          %s789 = sshll.u32 %s782, 4
          %s790 = int_to_ptr.vmem [resolvable:$true] %s789
          %795 = dma.hbm_to_vmem [thread:$0]  %s788, 256, %s790, %s779, 128, 128, 8
        $region108: #{tpu_custom_call.1} parent=99 // pred_fallthru
          _
      $region100: #{tpu_custom_call.1} parent=5 // pred_fallthru
        _
      %p796 = scmp.le.s32.totalorder 1, %s43
      %p797 = scmp.lt.s32.totalorder %s43, 3
      %p798 = pnand %p796, %p797
      %p799 = pneg %p798
      // Predicated region
      $region109: #{tpu_custom_call.1} parent=5 // pred_check
        _
      $region110: #{tpu_custom_call.1} parent=5 // pred_check_branch
        %801 = sbr.rel (%p798) target = $region112
      $region111: #{tpu_custom_call.1} parent=5 // pred_region
        %s802 = ssub.s32 %s43, 1
        %s803 = sand.u32 %s56, 1
        %s804 = scalar_lea.sflag [#allocation3], %s803
        %s805 = sand.u32 %s56, 1
        %s806 = smul.addr %s805, 16
        %s807 = scalar_lea.vmem [#allocation2], %s806
        // Predicated region
        $region113: #{tpu_custom_call.1} parent=111 // pred_check
          %p808 = pneg %p69
        $region114: #{tpu_custom_call.1} parent=111 // pred_check_branch
          %810 = sbr.rel (%p808) target = $region116
        $region115: #{tpu_custom_call.1} parent=111 // pred_region
          %811 = dma.done %s804, 256
        $region116: #{tpu_custom_call.1} parent=111 // pred_fallthru
          _
        %s812 = sand.u32 %s48, 1
        %s813 = scalar_lea.sflag [#allocation6], %s812
        %s814 = sand.u32 %s82, 1
        %s815 = smul.addr %s814, 16
        %s816 = scalar_lea.vmem [#allocation5], %s815
        // Predicated region
        $region117: #{tpu_custom_call.1} parent=111 // pred_check
          %p817 = pneg %p95
        $region118: #{tpu_custom_call.1} parent=111 // pred_check_branch
          %819 = sbr.rel (%p817) target = $region120
        $region119: #{tpu_custom_call.1} parent=111 // pred_region
          %820 = dma.done %s813, 256
        $region120: #{tpu_custom_call.1} parent=111 // pred_fallthru
          _
        // Predicated region
        $region121: #{tpu_custom_call.1} parent=111 // pred_check
          %p821 = pneg %p116
        $region122: #{tpu_custom_call.1} parent=111 // pred_check_branch
          %823 = sbr.rel (%p821) target = $region124
        $region123: #{tpu_custom_call.1} parent=111 // pred_region
          %824 = dma.done [#allocation6], 256
        $region124: #{tpu_custom_call.1} parent=111 // pred_fallthru
          _
        // Predicated region
        $region125: #{tpu_custom_call.1} parent=111 // pred_check
          %p825 = pneg %p137
        $region126: #{tpu_custom_call.1} parent=111 // pred_check_branch
          %827 = sbr.rel (%p825) target = $region128
        $region127: #{tpu_custom_call.1} parent=111 // pred_region
          %828 = dma.done [#allocation9], 1024
        $region128: #{tpu_custom_call.1} parent=111 // pred_fallthru
          _
        // Predicated region
        $region129: #{tpu_custom_call.1} parent=111 // pred_check
          %p829 = pneg %p179
        $region130: #{tpu_custom_call.1} parent=111 // pred_check_branch
          %831 = sbr.rel (%p829) target = $region132
        $region131: #{tpu_custom_call.1} parent=111 // pred_region
          %832 = dma.done [#allocation9], 2048
        $region132: #{tpu_custom_call.1} parent=111 // pred_fallthru
          _
        // Predicated region
        $region133: #{tpu_custom_call.1} parent=111 // pred_check
          %p833 = pneg %p221
        $region134: #{tpu_custom_call.1} parent=111 // pred_check_branch
          %835 = sbr.rel (%p833) target = $region136
        $region135: #{tpu_custom_call.1} parent=111 // pred_region
          %836 = dma.done [#allocation12], 2048
        $region136: #{tpu_custom_call.1} parent=111 // pred_fallthru
          _
        // Predicated region
        $region137: #{tpu_custom_call.1} parent=111 // pred_check
          %p837 = pneg %p263
        $region138: #{tpu_custom_call.1} parent=111 // pred_check_branch
          %839 = sbr.rel (%p837) target = $region140
        $region139: #{tpu_custom_call.1} parent=111 // pred_region
          %840 = dma.done [#allocation12], 2048
        $region140: #{tpu_custom_call.1} parent=111 // pred_fallthru
          _
        // Predicated region
        $region141: #{tpu_custom_call.1} parent=111 // pred_check
          %p841 = pneg %p305
        $region142: #{tpu_custom_call.1} parent=111 // pred_check_branch
          %843 = sbr.rel (%p841) target = $region144
        $region143: #{tpu_custom_call.1} parent=111 // pred_region
          %844 = dma.done [#allocation15], 512
        $region144: #{tpu_custom_call.1} parent=111 // pred_fallthru
          _
        // Predicated region
        $region145: #{tpu_custom_call.1} parent=111 // pred_check
          %p845 = pneg %p389
        $region146: #{tpu_custom_call.1} parent=111 // pred_check_branch
          %847 = sbr.rel (%p845) target = $region148
        $region147: #{tpu_custom_call.1} parent=111 // pred_region
          %848 = dma.done [#allocation15], 2048
        $region148: #{tpu_custom_call.1} parent=111 // pred_fallthru
          _
        // Predicated region
        $region149: #{tpu_custom_call.1} parent=111 // pred_check
          %p849 = pneg %p431
        $region150: #{tpu_custom_call.1} parent=111 // pred_check_branch
          %851 = sbr.rel (%p849) target = $region152
        $region151: #{tpu_custom_call.1} parent=111 // pred_region
          %852 = dma.done [#allocation18], 2048
        $region152: #{tpu_custom_call.1} parent=111 // pred_fallthru
          _
        // Predicated region
        $region153: #{tpu_custom_call.1} parent=111 // pred_check
          %p853 = pneg %p452
        $region154: #{tpu_custom_call.1} parent=111 // pred_check_branch
          %855 = sbr.rel (%p853) target = $region156
        $region155: #{tpu_custom_call.1} parent=111 // pred_region
          %856 = dma.done [#allocation18], 32
        $region156: #{tpu_custom_call.1} parent=111 // pred_fallthru
          _
        // Predicated region
        $region157: #{tpu_custom_call.1} parent=111 // pred_check
          %p857 = pneg %p473
        $region158: #{tpu_custom_call.1} parent=111 // pred_check_branch
          %859 = sbr.rel (%p857) target = $region160
        $region159: #{tpu_custom_call.1} parent=111 // pred_region
          %860 = dma.done [#allocation21], 32
        $region160: #{tpu_custom_call.1} parent=111 // pred_fallthru
          _
        // Predicated region
        $region161: #{tpu_custom_call.1} parent=111 // pred_check
          %p861 = pneg %p494
        $region162: #{tpu_custom_call.1} parent=111 // pred_check_branch
          %863 = sbr.rel (%p861) target = $region164
        $region163: #{tpu_custom_call.1} parent=111 // pred_region
          %864 = dma.done [#allocation21], 32
        $region164: #{tpu_custom_call.1} parent=111 // pred_fallthru
          _
        %s865 = sand.u32 %s56, 1
        %s866 = scalar_lea.sflag [#allocation3], %s865
        %s867 = sand.u32 %s56, 1
        %s868 = smul.addr %s867, 16
        %s869 = scalar_lea.vmem [#allocation2], %s868
        %p870 = pneg %p69
        %p871 = pneg %p66
        %s872 = sand.u32 %s48, 1
        %s873 = scalar_lea.sflag [#allocation6], %s872
        %s874 = sand.u32 %s82, 1
        %s875 = smul.addr %s874, 16
        %s876 = scalar_lea.vmem [#allocation5], %s875
        %p877 = pneg %p95
        %p878 = pneg %p92
        %p879 = pneg %p116
        %p880 = pneg %p113
        %p881 = pneg %p137
        %p882 = pneg %p134
        %p883 = pneg %p158
        %p884 = pneg %p155
        %p885 = pneg %p179
        %p886 = pneg %p176
        %p887 = pneg %p200
        %p888 = pneg %p197
        %p889 = pneg %p221
        %p890 = pneg %p218
        %p891 = pneg %p242
        %p892 = pneg %p239
        %p893 = pneg %p263
        %p894 = pneg %p260
        %p895 = pneg %p284
        %p896 = pneg %p281
        %p897 = pneg %p305
        %p898 = pneg %p302
        %p899 = pneg %p326
        %p900 = pneg %p323
        %p901 = pneg %p347
        %p902 = pneg %p344
        %p903 = pneg %p368
        %p904 = pneg %p365
        %p905 = pneg %p389
        %p906 = pneg %p386
        %p907 = pneg %p410
        %p908 = pneg %p407
        %p909 = pneg %p431
        %p910 = pneg %p428
        %p911 = pneg %p452
        %p912 = pneg %p449
        %p913 = pneg %p473
        %p914 = pneg %p470
        %p915 = pneg %p494
        %p916 = pneg %p491
        %p917 = pneg %p515
        %p918 = pneg %p512
        %p919 = pneg %p536
        %p920 = pneg %p533
        %p921 = pneg %p562
        %p922 = pneg %p559
        %s923 = sand.u32 %s549, 1
        %s924 = scalar_lea.sflag [#allocation4], %s923
        %s925 = sand.u32 %s549, 1
        %s926 = smul.addr %s925, 16
        %s927 = scalar_lea.vmem [#allocation23], %s926
        %s928 = smul.u32 2, %s48
        %s929 = smul.u32 2, %s48
        %s930 = smul.u32 2, %s48
        %v932 = vld [vmem:[%s807] sm:$0xff]
        %v933 = vld [vmem:[%s807 + $0x8] sm:$0xff]
        %v934 = vpack.c.bf16 %v933, %v932
        %v935 = vld [vmem:[#allocation8] sm:$0xf]
        %v936 = vld [vmem:[#allocation8 + $0x4] sm:$0xf]
        %v937 = vld [vmem:[#allocation8 + $0x8] sm:$0xf]
        %v938 = vld [vmem:[#allocation8 + $0xc] sm:$0xf]
        %v939 = vld [vmem:[#allocation8 + $0x10] sm:$0xf]
        %v940 = vld [vmem:[#allocation8 + $0x14] sm:$0xf]
        %v941 = vld [vmem:[#allocation8 + $0x18] sm:$0xf]
        %v942 = vld [vmem:[#allocation8 + $0x1c] sm:$0xf]
        %v943 = vld [vmem:[#allocation8 + $0x20] sm:$0xf]
        %v944 = vld [vmem:[#allocation8 + $0x24] sm:$0xf]
        %v945 = vld [vmem:[#allocation8 + $0x28] sm:$0xf]
        %v946 = vld [vmem:[#allocation8 + $0x2c] sm:$0xf]
        %v947 = vld [vmem:[#allocation8 + $0x30] sm:$0xf]
        %v948 = vld [vmem:[#allocation8 + $0x34] sm:$0xf]
        %v949 = vld [vmem:[#allocation8 + $0x38] sm:$0xf]
        %v950 = vld [vmem:[#allocation8 + $0x3c] sm:$0xf]
        %v951 = vld [vmem:[%s4] sm:$0x1]
        %v953 = vlaneseq
        %v954 = vshrl.u32 %v953, 7
        %v955 = vsub.s32 0, %v954
        %v956 = vrot.slane %v951, %v955
        %v974 = vunpack.c.l.b16 %v935
        %v975 = vunpack.c.l.b16 %v936
        %v976 = vunpack.c.l.b16 %v937
        %v977 = vunpack.c.l.b16 %v938
        %v978 = vunpack.c.l.b16 %v939
        %v979 = vunpack.c.l.b16 %v940
        %v980 = vunpack.c.l.b16 %v941
        %v981 = vunpack.c.l.b16 %v942
        %v982 = vunpack.c.l.b16 %v943
        %v983 = vunpack.c.l.b16 %v944
        %v984 = vunpack.c.l.b16 %v945
        %v985 = vunpack.c.l.b16 %v946
        %v986 = vunpack.c.l.b16 %v947
        %v987 = vunpack.c.l.b16 %v948
        %v988 = vunpack.c.l.b16 %v949
        %v989 = vunpack.c.l.b16 %v950
        %v990 = vpack.c.b16 %v975, %v974
        %v991 = vpack.c.b16 %v977, %v976
        %v992 = vpack.c.b16 %v979, %v978
        %v993 = vpack.c.b16 %v981, %v980
        %v994 = vpack.c.b16 %v983, %v982
        %v995 = vpack.c.b16 %v985, %v984
        %v996 = vpack.c.b16 %v987, %v986
        %v997 = vpack.c.b16 %v989, %v988
        %1006 = vmatprep.subr.bf16.mxu0 0
        %1007 = vmatpush1.bf16.msra.mxu0 %v990
        %1008 = vmatprep.subr.bf16.mxu0 0
        %1009 = vmatpush1.bf16.msra.mxu0 %v991
        %1010 = vmatprep.subr.bf16.mxu0 0
        %1011 = vmatpush1.bf16.msra.mxu0 %v992
        %1012 = vmatprep.subr.bf16.mxu0 0
        %1013 = vmatpush1.bf16.msra.mxu0 %v993
        %1014 = vmatprep.subr.bf16.mxu0 0
        %1015 = vmatpush1.bf16.msra.mxu0 %v994
        %1016 = vmatprep.subr.bf16.mxu0 0
        %1017 = vmatpush1.bf16.msra.mxu0 %v995
        %1018 = vmatprep.subr.bf16.mxu0 0
        %1019 = vmatpush1.bf16.msra.mxu0 %v996
        %1020 = vmatprep.subr.bf16.mxu0 0
        %1021 = vmatpush1.bf16.msra.mxu0 %v997
        %1022 = vmatprep.subr.bf16.mxu0 0
        %1023 = vmatpush1.bf16.msra.mxu0 0
        %1024 = vmatprep.subr.bf16.mxu0 0
        %1025 = vmatpush1.bf16.msra.mxu0 0
        %1026 = vmatprep.subr.bf16.mxu0 0
        %1027 = vmatpush1.bf16.msra.mxu0 0
        %1028 = vmatprep.subr.bf16.mxu0 0
        %1029 = vmatpush1.bf16.msra.mxu0 0
        %1030 = vmatprep.subr.bf16.mxu0 0
        %1031 = vmatpush1.bf16.msra.mxu0 0
        %1032 = vmatprep.subr.bf16.mxu0 0
        %1033 = vmatpush1.bf16.msra.mxu0 0
        %1034 = vmatprep.subr.bf16.mxu0 0
        %1035 = vmatpush1.bf16.msra.mxu0 0
        %1036 = vmatprep.subr.bf16.mxu0 0
        %1037 = vmatpush1.bf16.msra.mxu0 0
        %1038 = vmatprep.mubr.bf16.mxu0 0
        %1039 = vmatmul.mubr.bf16.gmra.mrb[0].mxu0 %v934
        %v1040 = vpop.f32.mrb[0].mxu0
        %v1041 = vadd.f32 %v956, %v1040
        %v1042 = vpop.f32.mrb[0].mxu0
        %v1043 = vpop.f32.mrb[0].mxu0
        %v1044 = vadd.f32 %v956, %v1043
        %v1045 = vpop.f32.mrb[0].mxu0
        %1046 = vdwg.mxu0
        %v1047 = vld [vmem:[%s816] sm:$0xff]
        %v1048 = vld [vmem:[%s816 + $0x8] sm:$0xff]
        %v1049 = vadd.f32 %v1041, %v1047
        %v1050 = vadd.f32 %v1044, %v1048
        %v1051 = vld [vmem:[#allocation7] sm:$0xff]
        %v1052 = vld [vmem:[#allocation7 + $0x8] sm:$0xff]
        %v1053 = vpack.c.bf16 %v1050, %v1049
        %v1054 = vld [vmem:[#allocation10] sm:$0xf]
        %v1055 = vld [vmem:[#allocation10 + $0x4] sm:$0xf]
        %v1056 = vld [vmem:[#allocation10 + $0x8] sm:$0xf]
        %v1057 = vld [vmem:[#allocation10 + $0xc] sm:$0xf]
        %v1058 = vld [vmem:[#allocation10 + $0x10] sm:$0xf]
        %v1059 = vld [vmem:[#allocation10 + $0x14] sm:$0xf]
        %v1060 = vld [vmem:[#allocation10 + $0x18] sm:$0xf]
        %v1061 = vld [vmem:[#allocation10 + $0x1c] sm:$0xf]
        %v1062 = vld [vmem:[#allocation10 + $0x20] sm:$0xf]
        %v1063 = vld [vmem:[#allocation10 + $0x24] sm:$0xf]
        %v1064 = vld [vmem:[#allocation10 + $0x28] sm:$0xf]
        %v1065 = vld [vmem:[#allocation10 + $0x2c] sm:$0xf]
        %v1066 = vld [vmem:[#allocation10 + $0x30] sm:$0xf]
        %v1067 = vld [vmem:[#allocation10 + $0x34] sm:$0xf]
        %v1068 = vld [vmem:[#allocation10 + $0x38] sm:$0xf]
        %v1069 = vld [vmem:[#allocation10 + $0x3c] sm:$0xf]
        %v1070 = vld [vmem:[%s6] sm:$0x1]
        %v1072 = vlaneseq
        %v1073 = vshrl.u32 %v1072, 7
        %v1074 = vsub.s32 0, %v1073
        %v1075 = vrot.slane %v1070, %v1074
        %v1093 = vunpack.c.l.b16 %v1054
        %v1094 = vunpack.c.l.b16 %v1055
        %v1095 = vunpack.c.l.b16 %v1056
        %v1096 = vunpack.c.l.b16 %v1057
        %v1097 = vunpack.c.l.b16 %v1058
        %v1098 = vunpack.c.l.b16 %v1059
        %v1099 = vunpack.c.l.b16 %v1060
        %v1100 = vunpack.c.l.b16 %v1061
        %v1101 = vunpack.c.l.b16 %v1062
        %v1102 = vunpack.c.l.b16 %v1063
        %v1103 = vunpack.c.l.b16 %v1064
        %v1104 = vunpack.c.l.b16 %v1065
        %v1105 = vunpack.c.l.b16 %v1066
        %v1106 = vunpack.c.l.b16 %v1067
        %v1107 = vunpack.c.l.b16 %v1068
        %v1108 = vunpack.c.l.b16 %v1069
        %v1109 = vpack.c.b16 %v1094, %v1093
        %v1110 = vpack.c.b16 %v1096, %v1095
        %v1111 = vpack.c.b16 %v1098, %v1097
        %v1112 = vpack.c.b16 %v1100, %v1099
        %v1113 = vpack.c.b16 %v1102, %v1101
        %v1114 = vpack.c.b16 %v1104, %v1103
        %v1115 = vpack.c.b16 %v1106, %v1105
        %v1116 = vpack.c.b16 %v1108, %v1107
        %1125 = vmatprep.subr.bf16.mxu0 0
        %1126 = vmatpush1.bf16.msra.mxu0 %v1109
        %1127 = vmatprep.subr.bf16.mxu0 0
        %1128 = vmatpush1.bf16.msra.mxu0 %v1110
        %1129 = vmatprep.subr.bf16.mxu0 0
        %1130 = vmatpush1.bf16.msra.mxu0 %v1111
        %1131 = vmatprep.subr.bf16.mxu0 0
        %1132 = vmatpush1.bf16.msra.mxu0 %v1112
        %1133 = vmatprep.subr.bf16.mxu0 0
        %1134 = vmatpush1.bf16.msra.mxu0 %v1113
        %1135 = vmatprep.subr.bf16.mxu0 0
        %1136 = vmatpush1.bf16.msra.mxu0 %v1114
        %1137 = vmatprep.subr.bf16.mxu0 0
        %1138 = vmatpush1.bf16.msra.mxu0 %v1115
        %1139 = vmatprep.subr.bf16.mxu0 0
        %1140 = vmatpush1.bf16.msra.mxu0 %v1116
        %1141 = vmatprep.subr.bf16.mxu0 0
        %1142 = vmatpush1.bf16.msra.mxu0 0
        %1143 = vmatprep.subr.bf16.mxu0 0
        %1144 = vmatpush1.bf16.msra.mxu0 0
        %1145 = vmatprep.subr.bf16.mxu0 0
        %1146 = vmatpush1.bf16.msra.mxu0 0
        %1147 = vmatprep.subr.bf16.mxu0 0
        %1148 = vmatpush1.bf16.msra.mxu0 0
        %1149 = vmatprep.subr.bf16.mxu0 0
        %1150 = vmatpush1.bf16.msra.mxu0 0
        %1151 = vmatprep.subr.bf16.mxu0 0
        %1152 = vmatpush1.bf16.msra.mxu0 0
        %1153 = vmatprep.subr.bf16.mxu0 0
        %1154 = vmatpush1.bf16.msra.mxu0 0
        %1155 = vmatprep.subr.bf16.mxu0 0
        %1156 = vmatpush1.bf16.msra.mxu0 0
        %1157 = vmatprep.mubr.bf16.mxu0 0
        %1158 = vmatmul.mubr.bf16.gmra.mrb[0].mxu0 %v1053
        %v1159 = vpop.f32.mrb[0].mxu0
        %v1160 = vadd.f32 %v1075, %v1159
        %v1161 = vpop.f32.mrb[0].mxu0
        %v1162 = vpop.f32.mrb[0].mxu0
        %v1163 = vadd.f32 %v1075, %v1162
        %v1164 = vpop.f32.mrb[0].mxu0
        %1165 = vdwg.mxu0
        %v1166 = vld [vmem:[#allocation11] sm:$0xf]
        %v1167 = vld [vmem:[#allocation11 + $0x4] sm:$0xf]
        %v1168 = vld [vmem:[#allocation11 + $0x8] sm:$0xf]
        %v1169 = vld [vmem:[#allocation11 + $0xc] sm:$0xf]
        %v1170 = vld [vmem:[#allocation11 + $0x10] sm:$0xf]
        %v1171 = vld [vmem:[#allocation11 + $0x14] sm:$0xf]
        %v1172 = vld [vmem:[#allocation11 + $0x18] sm:$0xf]
        %v1173 = vld [vmem:[#allocation11 + $0x1c] sm:$0xf]
        %v1174 = vld [vmem:[#allocation11 + $0x20] sm:$0xf]
        %v1175 = vld [vmem:[#allocation11 + $0x24] sm:$0xf]
        %v1176 = vld [vmem:[#allocation11 + $0x28] sm:$0xf]
        %v1177 = vld [vmem:[#allocation11 + $0x2c] sm:$0xf]
        %v1178 = vld [vmem:[#allocation11 + $0x30] sm:$0xf]
        %v1179 = vld [vmem:[#allocation11 + $0x34] sm:$0xf]
        %v1180 = vld [vmem:[#allocation11 + $0x38] sm:$0xf]
        %v1181 = vld [vmem:[#allocation11 + $0x3c] sm:$0xf]
        %v1182 = vld [vmem:[%s8] sm:$0x1]
        %v1184 = vlaneseq
        %v1185 = vshrl.u32 %v1184, 7
        %v1186 = vsub.s32 0, %v1185
        %v1187 = vrot.slane %v1182, %v1186
        %v1205 = vunpack.c.l.b16 %v1166
        %v1206 = vunpack.c.l.b16 %v1167
        %v1207 = vunpack.c.l.b16 %v1168
        %v1208 = vunpack.c.l.b16 %v1169
        %v1209 = vunpack.c.l.b16 %v1170
        %v1210 = vunpack.c.l.b16 %v1171
        %v1211 = vunpack.c.l.b16 %v1172
        %v1212 = vunpack.c.l.b16 %v1173
        %v1213 = vunpack.c.l.b16 %v1174
        %v1214 = vunpack.c.l.b16 %v1175
        %v1215 = vunpack.c.l.b16 %v1176
        %v1216 = vunpack.c.l.b16 %v1177
        %v1217 = vunpack.c.l.b16 %v1178
        %v1218 = vunpack.c.l.b16 %v1179
        %v1219 = vunpack.c.l.b16 %v1180
        %v1220 = vunpack.c.l.b16 %v1181
        %v1221 = vpack.c.b16 %v1206, %v1205
        %v1222 = vpack.c.b16 %v1208, %v1207
        %v1223 = vpack.c.b16 %v1210, %v1209
        %v1224 = vpack.c.b16 %v1212, %v1211
        %v1225 = vpack.c.b16 %v1214, %v1213
        %v1226 = vpack.c.b16 %v1216, %v1215
        %v1227 = vpack.c.b16 %v1218, %v1217
        %v1228 = vpack.c.b16 %v1220, %v1219
        %1237 = vmatprep.subr.bf16.mxu0 0
        %1238 = vmatpush1.bf16.msra.mxu0 %v1221
        %1239 = vmatprep.subr.bf16.mxu0 0
        %1240 = vmatpush1.bf16.msra.mxu0 %v1222
        %1241 = vmatprep.subr.bf16.mxu0 0
        %1242 = vmatpush1.bf16.msra.mxu0 %v1223
        %1243 = vmatprep.subr.bf16.mxu0 0
        %1244 = vmatpush1.bf16.msra.mxu0 %v1224
        %1245 = vmatprep.subr.bf16.mxu0 0
        %1246 = vmatpush1.bf16.msra.mxu0 %v1225
        %1247 = vmatprep.subr.bf16.mxu0 0
        %1248 = vmatpush1.bf16.msra.mxu0 %v1226
        %1249 = vmatprep.subr.bf16.mxu0 0
        %1250 = vmatpush1.bf16.msra.mxu0 %v1227
        %1251 = vmatprep.subr.bf16.mxu0 0
        %1252 = vmatpush1.bf16.msra.mxu0 %v1228
        %1253 = vmatprep.subr.bf16.mxu0 0
        %1254 = vmatpush1.bf16.msra.mxu0 0
        %1255 = vmatprep.subr.bf16.mxu0 0
        %1256 = vmatpush1.bf16.msra.mxu0 0
        %1257 = vmatprep.subr.bf16.mxu0 0
        %1258 = vmatpush1.bf16.msra.mxu0 0
        %1259 = vmatprep.subr.bf16.mxu0 0
        %1260 = vmatpush1.bf16.msra.mxu0 0
        %1261 = vmatprep.subr.bf16.mxu0 0
        %1262 = vmatpush1.bf16.msra.mxu0 0
        %1263 = vmatprep.subr.bf16.mxu0 0
        %1264 = vmatpush1.bf16.msra.mxu0 0
        %1265 = vmatprep.subr.bf16.mxu0 0
        %1266 = vmatpush1.bf16.msra.mxu0 0
        %1267 = vmatprep.subr.bf16.mxu0 0
        %1268 = vmatpush1.bf16.msra.mxu0 0
        %1269 = vmatprep.mubr.bf16.mxu0 0
        %1270 = vmatmul.mubr.bf16.gmra.mrb[0].mxu0 %v1053
        %v1271 = vpop.f32.mrb[0].mxu0
        %v1272 = vadd.f32 %v1187, %v1271
        %v1273 = vpop.f32.mrb[0].mxu0
        %v1274 = vpop.f32.mrb[0].mxu0
        %v1275 = vadd.f32 %v1187, %v1274
        %v1276 = vpop.f32.mrb[0].mxu0
        %1277 = vdwg.mxu0
        %v1278 = vld [vmem:[#allocation13] sm:$0xf]
        %v1279 = vld [vmem:[#allocation13 + $0x4] sm:$0xf]
        %v1280 = vld [vmem:[#allocation13 + $0x8] sm:$0xf]
        %v1281 = vld [vmem:[#allocation13 + $0xc] sm:$0xf]
        %v1282 = vld [vmem:[#allocation13 + $0x10] sm:$0xf]
        %v1283 = vld [vmem:[#allocation13 + $0x14] sm:$0xf]
        %v1284 = vld [vmem:[#allocation13 + $0x18] sm:$0xf]
        %v1285 = vld [vmem:[#allocation13 + $0x1c] sm:$0xf]
        %v1286 = vld [vmem:[#allocation13 + $0x20] sm:$0xf]
        %v1287 = vld [vmem:[#allocation13 + $0x24] sm:$0xf]
        %v1288 = vld [vmem:[#allocation13 + $0x28] sm:$0xf]
        %v1289 = vld [vmem:[#allocation13 + $0x2c] sm:$0xf]
        %v1290 = vld [vmem:[#allocation13 + $0x30] sm:$0xf]
        %v1291 = vld [vmem:[#allocation13 + $0x34] sm:$0xf]
        %v1292 = vld [vmem:[#allocation13 + $0x38] sm:$0xf]
        %v1293 = vld [vmem:[#allocation13 + $0x3c] sm:$0xf]
        %v1294 = vld [vmem:[%s10] sm:$0x1]
        %v1296 = vlaneseq
        %v1297 = vshrl.u32 %v1296, 7
        %v1298 = vsub.s32 0, %v1297
        %v1299 = vrot.slane %v1294, %v1298
        %v1317 = vunpack.c.l.b16 %v1278
        %v1318 = vunpack.c.l.b16 %v1279
        %v1319 = vunpack.c.l.b16 %v1280
        %v1320 = vunpack.c.l.b16 %v1281
        %v1321 = vunpack.c.l.b16 %v1282
        %v1322 = vunpack.c.l.b16 %v1283
        %v1323 = vunpack.c.l.b16 %v1284
        %v1324 = vunpack.c.l.b16 %v1285
        %v1325 = vunpack.c.l.b16 %v1286
        %v1326 = vunpack.c.l.b16 %v1287
        %v1327 = vunpack.c.l.b16 %v1288
        %v1328 = vunpack.c.l.b16 %v1289
        %v1329 = vunpack.c.l.b16 %v1290
        %v1330 = vunpack.c.l.b16 %v1291
        %v1331 = vunpack.c.l.b16 %v1292
        %v1332 = vunpack.c.l.b16 %v1293
        %v1333 = vpack.c.b16 %v1318, %v1317
        %v1334 = vpack.c.b16 %v1320, %v1319
        %v1335 = vpack.c.b16 %v1322, %v1321
        %v1336 = vpack.c.b16 %v1324, %v1323
        %v1337 = vpack.c.b16 %v1326, %v1325
        %v1338 = vpack.c.b16 %v1328, %v1327
        %v1339 = vpack.c.b16 %v1330, %v1329
        %v1340 = vpack.c.b16 %v1332, %v1331
        %1349 = vmatprep.subr.bf16.mxu0 0
        %1350 = vmatpush1.bf16.msra.mxu0 %v1333
        %1351 = vmatprep.subr.bf16.mxu0 0
        %1352 = vmatpush1.bf16.msra.mxu0 %v1334
        %1353 = vmatprep.subr.bf16.mxu0 0
        %1354 = vmatpush1.bf16.msra.mxu0 %v1335
        %1355 = vmatprep.subr.bf16.mxu0 0
        %1356 = vmatpush1.bf16.msra.mxu0 %v1336
        %1357 = vmatprep.subr.bf16.mxu0 0
        %1358 = vmatpush1.bf16.msra.mxu0 %v1337
        %1359 = vmatprep.subr.bf16.mxu0 0
        %1360 = vmatpush1.bf16.msra.mxu0 %v1338
        %1361 = vmatprep.subr.bf16.mxu0 0
        %1362 = vmatpush1.bf16.msra.mxu0 %v1339
        %1363 = vmatprep.subr.bf16.mxu0 0
        %1364 = vmatpush1.bf16.msra.mxu0 %v1340
        %1365 = vmatprep.subr.bf16.mxu0 0
        %1366 = vmatpush1.bf16.msra.mxu0 0
        %1367 = vmatprep.subr.bf16.mxu0 0
        %1368 = vmatpush1.bf16.msra.mxu0 0
        %1369 = vmatprep.subr.bf16.mxu0 0
        %1370 = vmatpush1.bf16.msra.mxu0 0
        %1371 = vmatprep.subr.bf16.mxu0 0
        %1372 = vmatpush1.bf16.msra.mxu0 0
        %1373 = vmatprep.subr.bf16.mxu0 0
        %1374 = vmatpush1.bf16.msra.mxu0 0
        %1375 = vmatprep.subr.bf16.mxu0 0
        %1376 = vmatpush1.bf16.msra.mxu0 0
        %1377 = vmatprep.subr.bf16.mxu0 0
        %1378 = vmatpush1.bf16.msra.mxu0 0
        %1379 = vmatprep.subr.bf16.mxu0 0
        %1380 = vmatpush1.bf16.msra.mxu0 0
        %1381 = vmatprep.mubr.bf16.mxu0 0
        %1382 = vmatmul.mubr.bf16.gmra.mrb[0].mxu0 %v1053
        %v1383 = vpop.f32.mrb[0].mxu0
        %v1384 = vadd.f32 %v1299, %v1383
        %v1385 = vpop.f32.mrb[0].mxu0
        %v1386 = vpop.f32.mrb[0].mxu0
        %v1387 = vadd.f32 %v1299, %v1386
        %v1388 = vpop.f32.mrb[0].mxu0
        %1389 = vdwg.mxu0
        %v1390 = vmul.f32 %v1160, 0.35355338
        %v1391 = vmul.f32 %v1163, 0.35355338
        %v1392 = vpack.c.bf16 %v1387, %v1384
        %vm1393 = vcmask 64512
        %v1395 = vsel %vm1393, %v1390, 0
        %v1398 = vsel %vm1393, %v1391, 0
        %v1401 = vsel %vm1393, %v1272, 0
        %v1404 = vsel %vm1393, %v1275, 0
        %1406 = vmatprep.subr.mxu0 0.0
        %1407 = vmatpush1.xpose.msra.mxu0 %v1401
        %1408 = vmatprep.subr.mxu0 0.0
        %1409 = vmatpush1.xpose.msra.mxu0 %v1404
        %1410 = vmatprep.subr.mxu0 0.0
        %1411 = vmatpush1.xpose.msra.mxu0 0.0
        %1412 = vmatprep.subr.mxu0 0.0
        %1413 = vmatpush1.xpose.msra.mxu0 0.0
        %1414 = vmatprep.subr.mxu0 0.0
        %1415 = vmatpush1.xpose.msra.mxu0 0.0
        %1416 = vmatprep.subr.mxu0 0.0
        %1417 = vmatpush1.xpose.msra.mxu0 0.0
        %1418 = vmatprep.subr.mxu0 0.0
        %1419 = vmatpush1.xpose.msra.mxu0 0.0
        %1420 = vmatprep.subr.mxu0 0.0
        %1421 = vmatpush1.xpose.msra.mxu0 0.0
        %1422 = vmatprep.subr.mxu0 0.0
        %1423 = vmatpush1.xpose.msra.mxu0 0.0
        %1424 = vmatprep.subr.mxu0 0.0
        %1425 = vmatpush1.xpose.msra.mxu0 0.0
        %1426 = vmatprep.subr.mxu0 0.0
        %1427 = vmatpush1.xpose.msra.mxu0 0.0
        %1428 = vmatprep.subr.mxu0 0.0
        %1429 = vmatpush1.xpose.msra.mxu0 0.0
        %1430 = vmatprep.subr.mxu0 0.0
        %1431 = vmatpush1.xpose.msra.mxu0 0.0
        %1432 = vmatprep.subr.mxu0 0.0
        %1433 = vmatpush1.xpose.msra.mxu0 0.0
        %1434 = vmatprep.subr.mxu0 0.0
        %1435 = vmatpush1.xpose.msra.mxu0 0.0
        %1436 = vmatprep.subr.mxu0 0.0
        %1437 = vmatpush1.xpose.msra.mxu0 0.0
        %1438 = vmatprep.subr.mxu0 0.0
        %1439 = vmatpush1.xpose.msra.mxu0 0.0
        %1440 = vmatprep.subr.mxu0 0.0
        %1441 = vmatpush1.xpose.msra.mxu0 0.0
        %1442 = vmatprep.subr.mxu0 0.0
        %1443 = vmatpush1.xpose.msra.mxu0 0.0
        %1444 = vmatprep.subr.mxu0 0.0
        %1445 = vmatpush1.xpose.msra.mxu0 0.0
        %1446 = vmatprep.subr.mxu0 0.0
        %1447 = vmatpush1.xpose.msra.mxu0 0.0
        %1448 = vmatprep.subr.mxu0 0.0
        %1449 = vmatpush1.xpose.msra.mxu0 0.0
        %1450 = vmatprep.subr.mxu0 0.0
        %1451 = vmatpush1.xpose.msra.mxu0 0.0
        %1452 = vmatprep.subr.mxu0 0.0
        %1453 = vmatpush1.xpose.msra.mxu0 0.0
        %1454 = vmatprep.subr.mxu0 0.0
        %1455 = vmatpush1.xpose.msra.mxu0 0.0
        %1456 = vmatprep.subr.mxu0 0.0
        %1457 = vmatpush1.xpose.msra.mxu0 0.0
        %1458 = vmatprep.subr.mxu0 0.0
        %1459 = vmatpush1.xpose.msra.mxu0 0.0
        %1460 = vmatprep.subr.mxu0 0.0
        %1461 = vmatpush1.xpose.msra.mxu0 0.0
        %1462 = vmatprep.subr.mxu0 0.0
        %1463 = vmatpush1.xpose.msra.mxu0 0.0
        %1464 = vmatprep.subr.mxu0 0.0
        %1465 = vmatpush1.xpose.msra.mxu0 0.0
        %1466 = vmatprep.subr.mxu0 0.0
        %1467 = vmatpush1.xpose.msra.mxu0 0.0
        %1468 = vmatprep.subr.mxu0 0.0
        %1469 = vmatpush1.xpose.msra.mxu0 0.0
        %1470 = vmatprep.mubr.f32.mxu0 0.0
        %1471 = vmatmul.mubr.f32.gmra.mrb[0].mxu0 %v1395
        %v1472 = vpop.f32.mrb[0].mxu0
        %v1473 = vadd.f32 %v1051, %v1472
        %v1474 = vpop.f32.mrb[0].mxu0
        %1475 = vmatprep.mubr.f32.mxu0 0.0
        %1476 = vmatmul.mubr.f32.gmra.mrb[0].mxu0 %v1398
        %v1477 = vpop.f32.mrb[0].mxu0
        %v1478 = vadd.f32 %v1052, %v1477
        %v1479 = vpop.f32.mrb[0].mxu0
        %1480 = vdwg.mxu0
        %vm1481 = vcmask 130048
        %v1482 = vsel %vm1481, %v1473, -inf
        %1483 = vmax.xlane.f32.xlu0 %v1482
        %v1484 = vpop.xlane.xlu0 %1483
        %v1485 = vsel %vm1481, %v1478, -inf
        %1486 = vmax.xlane.f32.xlu0 %v1485
        %v1487 = vpop.xlane.xlu0 %1486
        %v1488 = vsub.f32 %v1473, %v1484
        %v1489 = vsub.f32 %v1478, %v1487
        %v1490 = vmul.f32 %v1488, 1.442695
        %v1491 = vpow.pop %v1490
        %v1492 = vmul.f32 %v1489, 1.442695
        %v1493 = vpow.pop %v1492
        %v1494 = vsel %vm1481, %v1491, 0.0
        %1495 = vadd.xlane.f32.xlu0 %v1494
        %v1496 = vpop.xlane.xlu0 %1495
        %v1497 = vsel %vm1481, %v1493, 0.0
        %1498 = vadd.xlane.f32.xlu0 %v1497
        %v1499 = vpop.xlane.xlu0 %1498
        %v1500 = vrcp.pop %v1496
        %v1501 = vrcp.pop %v1499
        %v1502 = vmul.f32 %v1491, %v1500
        %v1503 = vmul.f32 %v1493, %v1501
        %v1504 = vpack.c.bf16 %v1503, %v1502
        %v1506 = vsel %vm1481, %v1504, 0
        %1508 = vmatprep.subr.bf16.mxu0 0
        %1509 = vmatpush1.bf16.msra.mxu0 %v1392
        %1510 = vmatprep.subr.bf16.mxu0 0
        %1511 = vmatpush1.bf16.msra.mxu0 0
        %1512 = vmatprep.subr.bf16.mxu0 0
        %1513 = vmatpush1.bf16.msra.mxu0 0
        %1514 = vmatprep.subr.bf16.mxu0 0
        %1515 = vmatpush1.bf16.msra.mxu0 0
        %1516 = vmatprep.subr.bf16.mxu0 0
        %1517 = vmatpush1.bf16.msra.mxu0 0
        %1518 = vmatprep.subr.bf16.mxu0 0
        %1519 = vmatpush1.bf16.msra.mxu0 0
        %1520 = vmatprep.subr.bf16.mxu0 0
        %1521 = vmatpush1.bf16.msra.mxu0 0
        %1522 = vmatprep.subr.bf16.mxu0 0
        %1523 = vmatpush1.bf16.msra.mxu0 0
        %1524 = vmatprep.subr.bf16.mxu0 0
        %1525 = vmatpush1.bf16.msra.mxu0 0
        %1526 = vmatprep.subr.bf16.mxu0 0
        %1527 = vmatpush1.bf16.msra.mxu0 0
        %1528 = vmatprep.subr.bf16.mxu0 0
        %1529 = vmatpush1.bf16.msra.mxu0 0
        %1530 = vmatprep.subr.bf16.mxu0 0
        %1531 = vmatpush1.bf16.msra.mxu0 0
        %1532 = vmatprep.subr.bf16.mxu0 0
        %1533 = vmatpush1.bf16.msra.mxu0 0
        %1534 = vmatprep.subr.bf16.mxu0 0
        %1535 = vmatpush1.bf16.msra.mxu0 0
        %1536 = vmatprep.subr.bf16.mxu0 0
        %1537 = vmatpush1.bf16.msra.mxu0 0
        %1538 = vmatprep.subr.bf16.mxu0 0
        %1539 = vmatpush1.bf16.msra.mxu0 0
        %1540 = vmatprep.mubr.bf16.mxu0 0
        %1541 = vmatmul.mubr.bf16.gmra.mrb[0].mxu0 %v1506
        %v1542 = vpop.f32.mrb[0].mxu0
        %v1543 = vadd.f32 0.0, %v1542
        %v1544 = vpop.f32.mrb[0].mxu0
        %v1545 = vpop.f32.mrb[0].mxu0
        %v1546 = vadd.f32 0.0, %v1545
        %v1547 = vpop.f32.mrb[0].mxu0
        %1548 = vdwg.mxu0
        %1549 = vrot.lane.b32.xlu0 %v1390, 120
        %v1550 = vpop.permute.xlu0 %1549
        %1551 = vrot.lane.b32.xlu0 %v1391, 120
        %v1552 = vpop.permute.xlu0 %1551
        %1553 = vrot.lane.b32.xlu0 %v1272, 120
        %v1554 = vpop.permute.xlu0 %1553
        %1555 = vrot.lane.b32.xlu0 %v1275, 120
        %v1556 = vpop.permute.xlu0 %1555
        %v1557 = vsel %vm1393, %v1550, 0
        %v1559 = vsel %vm1393, %v1552, 0
        %v1561 = vsel %vm1393, %v1554, 0
        %v1563 = vsel %vm1393, %v1556, 0
        %1565 = vmatprep.subr.mxu0 0.0
        %1566 = vmatpush1.xpose.msra.mxu0 %v1561
        %1567 = vmatprep.subr.mxu0 0.0
        %1568 = vmatpush1.xpose.msra.mxu0 %v1563
        %1569 = vmatprep.subr.mxu0 0.0
        %1570 = vmatpush1.xpose.msra.mxu0 0.0
        %1571 = vmatprep.subr.mxu0 0.0
        %1572 = vmatpush1.xpose.msra.mxu0 0.0
        %1573 = vmatprep.subr.mxu0 0.0
        %1574 = vmatpush1.xpose.msra.mxu0 0.0
        %1575 = vmatprep.subr.mxu0 0.0
        %1576 = vmatpush1.xpose.msra.mxu0 0.0
        %1577 = vmatprep.subr.mxu0 0.0
        %1578 = vmatpush1.xpose.msra.mxu0 0.0
        %1579 = vmatprep.subr.mxu0 0.0
        %1580 = vmatpush1.xpose.msra.mxu0 0.0
        %1581 = vmatprep.subr.mxu0 0.0
        %1582 = vmatpush1.xpose.msra.mxu0 0.0
        %1583 = vmatprep.subr.mxu0 0.0
        %1584 = vmatpush1.xpose.msra.mxu0 0.0
        %1585 = vmatprep.subr.mxu0 0.0
        %1586 = vmatpush1.xpose.msra.mxu0 0.0
        %1587 = vmatprep.subr.mxu0 0.0
        %1588 = vmatpush1.xpose.msra.mxu0 0.0
        %1589 = vmatprep.subr.mxu0 0.0
        %1590 = vmatpush1.xpose.msra.mxu0 0.0
        %1591 = vmatprep.subr.mxu0 0.0
        %1592 = vmatpush1.xpose.msra.mxu0 0.0
        %1593 = vmatprep.subr.mxu0 0.0
        %1594 = vmatpush1.xpose.msra.mxu0 0.0
        %1595 = vmatprep.subr.mxu0 0.0
        %1596 = vmatpush1.xpose.msra.mxu0 0.0
        %1597 = vmatprep.subr.mxu0 0.0
        %1598 = vmatpush1.xpose.msra.mxu0 0.0
        %1599 = vmatprep.subr.mxu0 0.0
        %1600 = vmatpush1.xpose.msra.mxu0 0.0
        %1601 = vmatprep.subr.mxu0 0.0
        %1602 = vmatpush1.xpose.msra.mxu0 0.0
        %1603 = vmatprep.subr.mxu0 0.0
        %1604 = vmatpush1.xpose.msra.mxu0 0.0
        %1605 = vmatprep.subr.mxu0 0.0
        %1606 = vmatpush1.xpose.msra.mxu0 0.0
        %1607 = vmatprep.subr.mxu0 0.0
        %1608 = vmatpush1.xpose.msra.mxu0 0.0
        %1609 = vmatprep.subr.mxu0 0.0
        %1610 = vmatpush1.xpose.msra.mxu0 0.0
        %1611 = vmatprep.subr.mxu0 0.0
        %1612 = vmatpush1.xpose.msra.mxu0 0.0
        %1613 = vmatprep.subr.mxu0 0.0
        %1614 = vmatpush1.xpose.msra.mxu0 0.0
        %1615 = vmatprep.subr.mxu0 0.0
        %1616 = vmatpush1.xpose.msra.mxu0 0.0
        %1617 = vmatprep.subr.mxu0 0.0
        %1618 = vmatpush1.xpose.msra.mxu0 0.0
        %1619 = vmatprep.subr.mxu0 0.0
        %1620 = vmatpush1.xpose.msra.mxu0 0.0
        %1621 = vmatprep.subr.mxu0 0.0
        %1622 = vmatpush1.xpose.msra.mxu0 0.0
        %1623 = vmatprep.subr.mxu0 0.0
        %1624 = vmatpush1.xpose.msra.mxu0 0.0
        %1625 = vmatprep.subr.mxu0 0.0
        %1626 = vmatpush1.xpose.msra.mxu0 0.0
        %1627 = vmatprep.subr.mxu0 0.0
        %1628 = vmatpush1.xpose.msra.mxu0 0.0
        %1629 = vmatprep.mubr.f32.mxu0 0.0
        %1630 = vmatmul.mubr.f32.gmra.mrb[0].mxu0 %v1557
        %v1631 = vpop.f32.mrb[0].mxu0
        %v1632 = vadd.f32 %v1051, %v1631
        %v1633 = vpop.f32.mrb[0].mxu0
        %1634 = vmatprep.mubr.f32.mxu0 0.0
        %1635 = vmatmul.mubr.f32.gmra.mrb[0].mxu0 %v1559
        %v1636 = vpop.f32.mrb[0].mxu0
        %v1637 = vadd.f32 %v1052, %v1636
        %v1638 = vpop.f32.mrb[0].mxu0
        %1639 = vdwg.mxu0
        %v1640 = vsel %vm1481, %v1632, -inf
        %1641 = vmax.xlane.f32.xlu0 %v1640
        %v1642 = vpop.xlane.xlu0 %1641
        %v1643 = vsel %vm1481, %v1637, -inf
        %1644 = vmax.xlane.f32.xlu0 %v1643
        %v1645 = vpop.xlane.xlu0 %1644
        %v1646 = vsub.f32 %v1632, %v1642
        %v1647 = vsub.f32 %v1637, %v1645
        %v1648 = vmul.f32 %v1646, 1.442695
        %v1649 = vpow.pop %v1648
        %v1650 = vmul.f32 %v1647, 1.442695
        %v1651 = vpow.pop %v1650
        %v1652 = vsel %vm1481, %v1649, 0.0
        %1653 = vadd.xlane.f32.xlu0 %v1652
        %v1654 = vpop.xlane.xlu0 %1653
        %v1655 = vsel %vm1481, %v1651, 0.0
        %1656 = vadd.xlane.f32.xlu0 %v1655
        %v1657 = vpop.xlane.xlu0 %1656
        %v1658 = vrcp.pop %v1654
        %v1659 = vrcp.pop %v1657
        %v1660 = vmul.f32 %v1649, %v1658
        %v1661 = vmul.f32 %v1651, %v1659
        %v1662 = vpack.c.bf16 %v1661, %v1660
        %1664 = vrot.lane.b32.xlu0 %v1392, 120
        %v1665 = vpop.permute.xlu0 %1664
        %v1668 = vsel %vm1481, %v1662, 0
        %1670 = vmatprep.subr.bf16.mxu0 0
        %1671 = vmatpush1.bf16.msra.mxu0 %v1665
        %1672 = vmatprep.subr.bf16.mxu0 0
        %1673 = vmatpush1.bf16.msra.mxu0 0
        %1674 = vmatprep.subr.bf16.mxu0 0
        %1675 = vmatpush1.bf16.msra.mxu0 0
        %1676 = vmatprep.subr.bf16.mxu0 0
        %1677 = vmatpush1.bf16.msra.mxu0 0
        %1678 = vmatprep.subr.bf16.mxu0 0
        %1679 = vmatpush1.bf16.msra.mxu0 0
        %1680 = vmatprep.subr.bf16.mxu0 0
        %1681 = vmatpush1.bf16.msra.mxu0 0
        %1682 = vmatprep.subr.bf16.mxu0 0
        %1683 = vmatpush1.bf16.msra.mxu0 0
        %1684 = vmatprep.subr.bf16.mxu0 0
        %1685 = vmatpush1.bf16.msra.mxu0 0
        %1686 = vmatprep.subr.bf16.mxu0 0
        %1687 = vmatpush1.bf16.msra.mxu0 0
        %1688 = vmatprep.subr.bf16.mxu0 0
        %1689 = vmatpush1.bf16.msra.mxu0 0
        %1690 = vmatprep.subr.bf16.mxu0 0
        %1691 = vmatpush1.bf16.msra.mxu0 0
        %1692 = vmatprep.subr.bf16.mxu0 0
        %1693 = vmatpush1.bf16.msra.mxu0 0
        %1694 = vmatprep.subr.bf16.mxu0 0
        %1695 = vmatpush1.bf16.msra.mxu0 0
        %1696 = vmatprep.subr.bf16.mxu0 0
        %1697 = vmatpush1.bf16.msra.mxu0 0
        %1698 = vmatprep.subr.bf16.mxu0 0
        %1699 = vmatpush1.bf16.msra.mxu0 0
        %1700 = vmatprep.subr.bf16.mxu0 0
        %1701 = vmatpush1.bf16.msra.mxu0 0
        %1702 = vmatprep.mubr.bf16.mxu0 0
        %1703 = vmatmul.mubr.bf16.gmra.mrb[0].mxu0 %v1668
        %v1704 = vpop.f32.mrb[0].mxu0
        %v1705 = vadd.f32 0.0, %v1704
        %v1706 = vpop.f32.mrb[0].mxu0
        %v1707 = vpop.f32.mrb[0].mxu0
        %v1708 = vadd.f32 0.0, %v1707
        %v1709 = vpop.f32.mrb[0].mxu0
        %1710 = vdwg.mxu0
        %1711 = vrot.lane.b32.xlu0 %v1390, 112
        %v1712 = vpop.permute.xlu0 %1711
        %1713 = vrot.lane.b32.xlu0 %v1391, 112
        %v1714 = vpop.permute.xlu0 %1713
        %1715 = vrot.lane.b32.xlu0 %v1272, 112
        %v1716 = vpop.permute.xlu0 %1715
        %1717 = vrot.lane.b32.xlu0 %v1275, 112
        %v1718 = vpop.permute.xlu0 %1717
        %v1719 = vsel %vm1393, %v1712, 0
        %v1721 = vsel %vm1393, %v1714, 0
        %v1723 = vsel %vm1393, %v1716, 0
        %v1725 = vsel %vm1393, %v1718, 0
        %1727 = vmatprep.subr.mxu0 0.0
        %1728 = vmatpush1.xpose.msra.mxu0 %v1723
        %1729 = vmatprep.subr.mxu0 0.0
        %1730 = vmatpush1.xpose.msra.mxu0 %v1725
        %1731 = vmatprep.subr.mxu0 0.0
        %1732 = vmatpush1.xpose.msra.mxu0 0.0
        %1733 = vmatprep.subr.mxu0 0.0
        %1734 = vmatpush1.xpose.msra.mxu0 0.0
        %1735 = vmatprep.subr.mxu0 0.0
        %1736 = vmatpush1.xpose.msra.mxu0 0.0
        %1737 = vmatprep.subr.mxu0 0.0
        %1738 = vmatpush1.xpose.msra.mxu0 0.0
        %1739 = vmatprep.subr.mxu0 0.0
        %1740 = vmatpush1.xpose.msra.mxu0 0.0
        %1741 = vmatprep.subr.mxu0 0.0
        %1742 = vmatpush1.xpose.msra.mxu0 0.0
        %1743 = vmatprep.subr.mxu0 0.0
        %1744 = vmatpush1.xpose.msra.mxu0 0.0
        %1745 = vmatprep.subr.mxu0 0.0
        %1746 = vmatpush1.xpose.msra.mxu0 0.0
        %1747 = vmatprep.subr.mxu0 0.0
        %1748 = vmatpush1.xpose.msra.mxu0 0.0
        %1749 = vmatprep.subr.mxu0 0.0
        %1750 = vmatpush1.xpose.msra.mxu0 0.0
        %1751 = vmatprep.subr.mxu0 0.0
        %1752 = vmatpush1.xpose.msra.mxu0 0.0
        %1753 = vmatprep.subr.mxu0 0.0
        %1754 = vmatpush1.xpose.msra.mxu0 0.0
        %1755 = vmatprep.subr.mxu0 0.0
        %1756 = vmatpush1.xpose.msra.mxu0 0.0
        %1757 = vmatprep.subr.mxu0 0.0
        %1758 = vmatpush1.xpose.msra.mxu0 0.0
        %1759 = vmatprep.subr.mxu0 0.0
        %1760 = vmatpush1.xpose.msra.mxu0 0.0
        %1761 = vmatprep.subr.mxu0 0.0
        %1762 = vmatpush1.xpose.msra.mxu0 0.0
        %1763 = vmatprep.subr.mxu0 0.0
        %1764 = vmatpush1.xpose.msra.mxu0 0.0
        %1765 = vmatprep.subr.mxu0 0.0
        %1766 = vmatpush1.xpose.msra.mxu0 0.0
        %1767 = vmatprep.subr.mxu0 0.0
        %1768 = vmatpush1.xpose.msra.mxu0 0.0
        %1769 = vmatprep.subr.mxu0 0.0
        %1770 = vmatpush1.xpose.msra.mxu0 0.0
        %1771 = vmatprep.subr.mxu0 0.0
        %1772 = vmatpush1.xpose.msra.mxu0 0.0
        %1773 = vmatprep.subr.mxu0 0.0
        %1774 = vmatpush1.xpose.msra.mxu0 0.0
        %1775 = vmatprep.subr.mxu0 0.0
        %1776 = vmatpush1.xpose.msra.mxu0 0.0
        %1777 = vmatprep.subr.mxu0 0.0
        %1778 = vmatpush1.xpose.msra.mxu0 0.0
        %1779 = vmatprep.subr.mxu0 0.0
        %1780 = vmatpush1.xpose.msra.mxu0 0.0
        %1781 = vmatprep.subr.mxu0 0.0
        %1782 = vmatpush1.xpose.msra.mxu0 0.0
        %1783 = vmatprep.subr.mxu0 0.0
        %1784 = vmatpush1.xpose.msra.mxu0 0.0
        %1785 = vmatprep.subr.mxu0 0.0
        %1786 = vmatpush1.xpose.msra.mxu0 0.0
        %1787 = vmatprep.subr.mxu0 0.0
        %1788 = vmatpush1.xpose.msra.mxu0 0.0
        %1789 = vmatprep.subr.mxu0 0.0
        %1790 = vmatpush1.xpose.msra.mxu0 0.0
        %1791 = vmatprep.mubr.f32.mxu0 0.0
        %1792 = vmatmul.mubr.f32.gmra.mrb[0].mxu0 %v1719
        %v1793 = vpop.f32.mrb[0].mxu0
        %v1794 = vadd.f32 %v1051, %v1793
        %v1795 = vpop.f32.mrb[0].mxu0
        %1796 = vmatprep.mubr.f32.mxu0 0.0
        %1797 = vmatmul.mubr.f32.gmra.mrb[0].mxu0 %v1721
        %v1798 = vpop.f32.mrb[0].mxu0
        %v1799 = vadd.f32 %v1052, %v1798
        %v1800 = vpop.f32.mrb[0].mxu0
        %1801 = vdwg.mxu0
        %v1802 = vsel %vm1481, %v1794, -inf
        %1803 = vmax.xlane.f32.xlu0 %v1802
        %v1804 = vpop.xlane.xlu0 %1803
        %v1805 = vsel %vm1481, %v1799, -inf
        %1806 = vmax.xlane.f32.xlu0 %v1805
        %v1807 = vpop.xlane.xlu0 %1806
        %v1808 = vsub.f32 %v1794, %v1804
        %v1809 = vsub.f32 %v1799, %v1807
        %v1810 = vmul.f32 %v1808, 1.442695
        %v1811 = vpow.pop %v1810
        %v1812 = vmul.f32 %v1809, 1.442695
        %v1813 = vpow.pop %v1812
        %v1814 = vsel %vm1481, %v1811, 0.0
        %1815 = vadd.xlane.f32.xlu0 %v1814
        %v1816 = vpop.xlane.xlu0 %1815
        %v1817 = vsel %vm1481, %v1813, 0.0
        %1818 = vadd.xlane.f32.xlu0 %v1817
        %v1819 = vpop.xlane.xlu0 %1818
        %v1820 = vrcp.pop %v1816
        %v1821 = vrcp.pop %v1819
        %v1822 = vmul.f32 %v1811, %v1820
        %v1823 = vmul.f32 %v1813, %v1821
        %v1824 = vpack.c.bf16 %v1823, %v1822
        %1825 = vrot.lane.b32.xlu0 %v1392, 112
        %v1826 = vpop.permute.xlu0 %1825
        %v1829 = vsel %vm1481, %v1824, 0
        %1831 = vmatprep.subr.bf16.mxu0 0
        %1832 = vmatpush1.bf16.msra.mxu0 %v1826
        %1833 = vmatprep.subr.bf16.mxu0 0
        %1834 = vmatpush1.bf16.msra.mxu0 0
        %1835 = vmatprep.subr.bf16.mxu0 0
        %1836 = vmatpush1.bf16.msra.mxu0 0
        %1837 = vmatprep.subr.bf16.mxu0 0
        %1838 = vmatpush1.bf16.msra.mxu0 0
        %1839 = vmatprep.subr.bf16.mxu0 0
        %1840 = vmatpush1.bf16.msra.mxu0 0
        %1841 = vmatprep.subr.bf16.mxu0 0
        %1842 = vmatpush1.bf16.msra.mxu0 0
        %1843 = vmatprep.subr.bf16.mxu0 0
        %1844 = vmatpush1.bf16.msra.mxu0 0
        %1845 = vmatprep.subr.bf16.mxu0 0
        %1846 = vmatpush1.bf16.msra.mxu0 0
        %1847 = vmatprep.subr.bf16.mxu0 0
        %1848 = vmatpush1.bf16.msra.mxu0 0
        %1849 = vmatprep.subr.bf16.mxu0 0
        %1850 = vmatpush1.bf16.msra.mxu0 0
        %1851 = vmatprep.subr.bf16.mxu0 0
        %1852 = vmatpush1.bf16.msra.mxu0 0
        %1853 = vmatprep.subr.bf16.mxu0 0
        %1854 = vmatpush1.bf16.msra.mxu0 0
        %1855 = vmatprep.subr.bf16.mxu0 0
        %1856 = vmatpush1.bf16.msra.mxu0 0
        %1857 = vmatprep.subr.bf16.mxu0 0
        %1858 = vmatpush1.bf16.msra.mxu0 0
        %1859 = vmatprep.subr.bf16.mxu0 0
        %1860 = vmatpush1.bf16.msra.mxu0 0
        %1861 = vmatprep.subr.bf16.mxu0 0
        %1862 = vmatpush1.bf16.msra.mxu0 0
        %1863 = vmatprep.mubr.bf16.mxu0 0
        %1864 = vmatmul.mubr.bf16.gmra.mrb[0].mxu0 %v1829
        %v1865 = vpop.f32.mrb[0].mxu0
        %v1866 = vadd.f32 0.0, %v1865
        %v1867 = vpop.f32.mrb[0].mxu0
        %v1868 = vpop.f32.mrb[0].mxu0
        %v1869 = vadd.f32 0.0, %v1868
        %v1870 = vpop.f32.mrb[0].mxu0
        %1871 = vdwg.mxu0
        %1872 = vrot.lane.b32.xlu0 %v1390, 104
        %v1873 = vpop.permute.xlu0 %1872
        %1874 = vrot.lane.b32.xlu0 %v1391, 104
        %v1875 = vpop.permute.xlu0 %1874
        %1876 = vrot.lane.b32.xlu0 %v1272, 104
        %v1877 = vpop.permute.xlu0 %1876
        %1878 = vrot.lane.b32.xlu0 %v1275, 104
        %v1879 = vpop.permute.xlu0 %1878
        %v1880 = vsel %vm1393, %v1873, 0
        %v1882 = vsel %vm1393, %v1875, 0
        %v1884 = vsel %vm1393, %v1877, 0
        %v1886 = vsel %vm1393, %v1879, 0
        %1888 = vmatprep.subr.mxu0 0.0
        %1889 = vmatpush1.xpose.msra.mxu0 %v1884
        %1890 = vmatprep.subr.mxu0 0.0
        %1891 = vmatpush1.xpose.msra.mxu0 %v1886
        %1892 = vmatprep.subr.mxu0 0.0
        %1893 = vmatpush1.xpose.msra.mxu0 0.0
        %1894 = vmatprep.subr.mxu0 0.0
        %1895 = vmatpush1.xpose.msra.mxu0 0.0
        %1896 = vmatprep.subr.mxu0 0.0
        %1897 = vmatpush1.xpose.msra.mxu0 0.0
        %1898 = vmatprep.subr.mxu0 0.0
        %1899 = vmatpush1.xpose.msra.mxu0 0.0
        %1900 = vmatprep.subr.mxu0 0.0
        %1901 = vmatpush1.xpose.msra.mxu0 0.0
        %1902 = vmatprep.subr.mxu0 0.0
        %1903 = vmatpush1.xpose.msra.mxu0 0.0
        %1904 = vmatprep.subr.mxu0 0.0
        %1905 = vmatpush1.xpose.msra.mxu0 0.0
        %1906 = vmatprep.subr.mxu0 0.0
        %1907 = vmatpush1.xpose.msra.mxu0 0.0
        %1908 = vmatprep.subr.mxu0 0.0
        %1909 = vmatpush1.xpose.msra.mxu0 0.0
        %1910 = vmatprep.subr.mxu0 0.0
        %1911 = vmatpush1.xpose.msra.mxu0 0.0
        %1912 = vmatprep.subr.mxu0 0.0
        %1913 = vmatpush1.xpose.msra.mxu0 0.0
        %1914 = vmatprep.subr.mxu0 0.0
        %1915 = vmatpush1.xpose.msra.mxu0 0.0
        %1916 = vmatprep.subr.mxu0 0.0
        %1917 = vmatpush1.xpose.msra.mxu0 0.0
        %1918 = vmatprep.subr.mxu0 0.0
        %1919 = vmatpush1.xpose.msra.mxu0 0.0
        %1920 = vmatprep.subr.mxu0 0.0
        %1921 = vmatpush1.xpose.msra.mxu0 0.0
        %1922 = vmatprep.subr.mxu0 0.0
        %1923 = vmatpush1.xpose.msra.mxu0 0.0
        %1924 = vmatprep.subr.mxu0 0.0
        %1925 = vmatpush1.xpose.msra.mxu0 0.0
        %1926 = vmatprep.subr.mxu0 0.0
        %1927 = vmatpush1.xpose.msra.mxu0 0.0
        %1928 = vmatprep.subr.mxu0 0.0
        %1929 = vmatpush1.xpose.msra.mxu0 0.0
        %1930 = vmatprep.subr.mxu0 0.0
        %1931 = vmatpush1.xpose.msra.mxu0 0.0
        %1932 = vmatprep.subr.mxu0 0.0
        %1933 = vmatpush1.xpose.msra.mxu0 0.0
        %1934 = vmatprep.subr.mxu0 0.0
        %1935 = vmatpush1.xpose.msra.mxu0 0.0
        %1936 = vmatprep.subr.mxu0 0.0
        %1937 = vmatpush1.xpose.msra.mxu0 0.0
        %1938 = vmatprep.subr.mxu0 0.0
        %1939 = vmatpush1.xpose.msra.mxu0 0.0
        %1940 = vmatprep.subr.mxu0 0.0
        %1941 = vmatpush1.xpose.msra.mxu0 0.0
        %1942 = vmatprep.subr.mxu0 0.0
        %1943 = vmatpush1.xpose.msra.mxu0 0.0
        %1944 = vmatprep.subr.mxu0 0.0
        %1945 = vmatpush1.xpose.msra.mxu0 0.0
        %1946 = vmatprep.subr.mxu0 0.0
        %1947 = vmatpush1.xpose.msra.mxu0 0.0
        %1948 = vmatprep.subr.mxu0 0.0
        %1949 = vmatpush1.xpose.msra.mxu0 0.0
        %1950 = vmatprep.subr.mxu0 0.0
        %1951 = vmatpush1.xpose.msra.mxu0 0.0
        %1952 = vmatprep.mubr.f32.mxu0 0.0
        %1953 = vmatmul.mubr.f32.gmra.mrb[0].mxu0 %v1880
        %v1954 = vpop.f32.mrb[0].mxu0
        %v1955 = vadd.f32 %v1051, %v1954
        %v1956 = vpop.f32.mrb[0].mxu0
        %1957 = vmatprep.mubr.f32.mxu0 0.0
        %1958 = vmatmul.mubr.f32.gmra.mrb[0].mxu0 %v1882
        %v1959 = vpop.f32.mrb[0].mxu0
        %v1960 = vadd.f32 %v1052, %v1959
        %v1961 = vpop.f32.mrb[0].mxu0
        %1962 = vdwg.mxu0
        %v1963 = vsel %vm1481, %v1955, -inf
        %1964 = vmax.xlane.f32.xlu0 %v1963
        %v1965 = vpop.xlane.xlu0 %1964
        %v1966 = vsel %vm1481, %v1960, -inf
        %1967 = vmax.xlane.f32.xlu0 %v1966
        %v1968 = vpop.xlane.xlu0 %1967
        %v1969 = vsub.f32 %v1955, %v1965
        %v1970 = vsub.f32 %v1960, %v1968
        %v1971 = vmul.f32 %v1969, 1.442695
        %v1972 = vpow.pop %v1971
        %v1973 = vmul.f32 %v1970, 1.442695
        %v1974 = vpow.pop %v1973
        %v1975 = vsel %vm1481, %v1972, 0.0
        %1976 = vadd.xlane.f32.xlu0 %v1975
        %v1977 = vpop.xlane.xlu0 %1976
        %v1978 = vsel %vm1481, %v1974, 0.0
        %1979 = vadd.xlane.f32.xlu0 %v1978
        %v1980 = vpop.xlane.xlu0 %1979
        %v1981 = vrcp.pop %v1977
        %v1982 = vrcp.pop %v1980
        %v1983 = vmul.f32 %v1972, %v1981
        %v1984 = vmul.f32 %v1974, %v1982
        %v1985 = vpack.c.bf16 %v1984, %v1983
        %1986 = vrot.lane.b32.xlu0 %v1392, 104
        %v1987 = vpop.permute.xlu0 %1986
        %v1990 = vsel %vm1481, %v1985, 0
        %1992 = vmatprep.subr.bf16.mxu0 0
        %1993 = vmatpush1.bf16.msra.mxu0 %v1987
        %1994 = vmatprep.subr.bf16.mxu0 0
        %1995 = vmatpush1.bf16.msra.mxu0 0
        %1996 = vmatprep.subr.bf16.mxu0 0
        %1997 = vmatpush1.bf16.msra.mxu0 0
        %1998 = vmatprep.subr.bf16.mxu0 0
        %1999 = vmatpush1.bf16.msra.mxu0 0
        %2000 = vmatprep.subr.bf16.mxu0 0
        %2001 = vmatpush1.bf16.msra.mxu0 0
        %2002 = vmatprep.subr.bf16.mxu0 0
        %2003 = vmatpush1.bf16.msra.mxu0 0
        %2004 = vmatprep.subr.bf16.mxu0 0
        %2005 = vmatpush1.bf16.msra.mxu0 0
        %2006 = vmatprep.subr.bf16.mxu0 0
        %2007 = vmatpush1.bf16.msra.mxu0 0
        %2008 = vmatprep.subr.bf16.mxu0 0
        %2009 = vmatpush1.bf16.msra.mxu0 0
        %2010 = vmatprep.subr.bf16.mxu0 0
        %2011 = vmatpush1.bf16.msra.mxu0 0
        %2012 = vmatprep.subr.bf16.mxu0 0
        %2013 = vmatpush1.bf16.msra.mxu0 0
        %2014 = vmatprep.subr.bf16.mxu0 0
        %2015 = vmatpush1.bf16.msra.mxu0 0
        %2016 = vmatprep.subr.bf16.mxu0 0
        %2017 = vmatpush1.bf16.msra.mxu0 0
        %2018 = vmatprep.subr.bf16.mxu0 0
        %2019 = vmatpush1.bf16.msra.mxu0 0
        %2020 = vmatprep.subr.bf16.mxu0 0
        %2021 = vmatpush1.bf16.msra.mxu0 0
        %2022 = vmatprep.subr.bf16.mxu0 0
        %2023 = vmatpush1.bf16.msra.mxu0 0
        %2024 = vmatprep.mubr.bf16.mxu0 0
        %2025 = vmatmul.mubr.bf16.gmra.mrb[0].mxu0 %v1990
        %v2026 = vpop.f32.mrb[0].mxu0
        %v2027 = vadd.f32 0.0, %v2026
        %v2028 = vpop.f32.mrb[0].mxu0
        %v2029 = vpop.f32.mrb[0].mxu0
        %v2030 = vadd.f32 0.0, %v2029
        %v2031 = vpop.f32.mrb[0].mxu0
        %2032 = vdwg.mxu0
        %2035 = vrot.lane.b32.xlu0 %v1705, 8
        %v2036 = vpop.permute.xlu0 %2035
        %2037 = vrot.lane.b32.xlu0 %v1708, 8
        %v2038 = vpop.permute.xlu0 %2037
        %2043 = vrot.lane.b32.xlu0 %v1866, 16
        %v2044 = vpop.permute.xlu0 %2043
        %2045 = vrot.lane.b32.xlu0 %v1869, 16
        %v2046 = vpop.permute.xlu0 %2045
        %2051 = vrot.lane.b32.xlu0 %v2027, 24
        %v2052 = vpop.permute.xlu0 %2051
        %2053 = vrot.lane.b32.xlu0 %v2030, 24
        %v2054 = vpop.permute.xlu0 %2053
        %v2057 = vsel %vm1393, %v1543, %v2036
        %v2058 = vsel %vm1393, %v1546, %v2038
        %v2059 = vsel %vm1481, %v2057, %v2044
        %v2060 = vsel %vm1481, %v2058, %v2046
        %vm2061 = vcmask 195584
        %v2062 = vsel %vm2061, %v2059, %v2052
        %v2063 = vsel %vm2061, %v2060, %v2054
        %v2064 = vpack.c.bf16 %v2063, %v2062
        %v2065 = vld [vmem:[#allocation14] sm:$0xf]
        %v2066 = vld [vmem:[#allocation14 + $0x4] sm:$0xf]
        %v2067 = vld [vmem:[#allocation14 + $0x8] sm:$0xf]
        %v2068 = vld [vmem:[#allocation14 + $0xc] sm:$0xf]
        %v2069 = vld [vmem:[%s12] sm:$0x1]
        %v2071 = vlaneseq
        %v2072 = vshrl.u32 %v2071, 7
        %v2073 = vsub.s32 0, %v2072
        %v2074 = vrot.slane %v2069, %v2073
        %v2080 = vunpack.c.l.b16 %v2065
        %v2081 = vunpack.c.l.b16 %v2066
        %v2082 = vunpack.c.l.b16 %v2067
        %v2083 = vunpack.c.l.b16 %v2068
        %v2084 = vpack.c.b16 %v2081, %v2080
        %v2085 = vpack.c.b16 %v2083, %v2082
        %vm2088 = vcmask 261120
        %v2090 = vsel %vm2088, %v2064, 0
        %2092 = vmatprep.subr.bf16.mxu0 0
        %2093 = vmatpush1.bf16.msra.mxu0 %v2084
        %2094 = vmatprep.subr.bf16.mxu0 0
        %2095 = vmatpush1.bf16.msra.mxu0 %v2085
        %2096 = vmatprep.subr.bf16.mxu0 0
        %2097 = vmatpush1.bf16.msra.mxu0 0
        %2098 = vmatprep.subr.bf16.mxu0 0
        %2099 = vmatpush1.bf16.msra.mxu0 0
        %2100 = vmatprep.subr.bf16.mxu0 0
        %2101 = vmatpush1.bf16.msra.mxu0 0
        %2102 = vmatprep.subr.bf16.mxu0 0
        %2103 = vmatpush1.bf16.msra.mxu0 0
        %2104 = vmatprep.subr.bf16.mxu0 0
        %2105 = vmatpush1.bf16.msra.mxu0 0
        %2106 = vmatprep.subr.bf16.mxu0 0
        %2107 = vmatpush1.bf16.msra.mxu0 0
        %2108 = vmatprep.subr.bf16.mxu0 0
        %2109 = vmatpush1.bf16.msra.mxu0 0
        %2110 = vmatprep.subr.bf16.mxu0 0
        %2111 = vmatpush1.bf16.msra.mxu0 0
        %2112 = vmatprep.subr.bf16.mxu0 0
        %2113 = vmatpush1.bf16.msra.mxu0 0
        %2114 = vmatprep.subr.bf16.mxu0 0
        %2115 = vmatpush1.bf16.msra.mxu0 0
        %2116 = vmatprep.subr.bf16.mxu0 0
        %2117 = vmatpush1.bf16.msra.mxu0 0
        %2118 = vmatprep.subr.bf16.mxu0 0
        %2119 = vmatpush1.bf16.msra.mxu0 0
        %2120 = vmatprep.subr.bf16.mxu0 0
        %2121 = vmatpush1.bf16.msra.mxu0 0
        %2122 = vmatprep.subr.bf16.mxu0 0
        %2123 = vmatpush1.bf16.msra.mxu0 0
        %2124 = vmatprep.mubr.bf16.mxu0 0
        %2125 = vmatmul.mubr.bf16.gmra.mrb[0].mxu0 %v2090
        %v2126 = vpop.f32.mrb[0].mxu0
        %v2127 = vadd.f32 %v2074, %v2126
        %v2128 = vpop.f32.mrb[0].mxu0
        %v2129 = vpop.f32.mrb[0].mxu0
        %v2130 = vadd.f32 %v2074, %v2129
        %v2131 = vpop.f32.mrb[0].mxu0
        %2132 = vdwg.mxu0
        %v2133 = vadd.f32 %v1049, %v2127
        %v2134 = vadd.f32 %v1050, %v2130
        %v2135 = vld [vmem:[%s13] sm:$0x1]
        %v2136 = vld [vmem:[%s14] sm:$0x1]
        %2137 = vadd.xlane.f32.xlu0 %v2133
        %v2138 = vpop.xlane.xlu0 %2137
        %2139 = vadd.xlane.f32.xlu0 %v2134
        %v2140 = vpop.xlane.xlu0 %2139
        %v2141 = vmul.f32 %v2138, 0.03125
        %v2142 = vmul.f32 %v2140, 0.03125
        %v2143 = vmul.f32 %v2133, %v2133
        %v2144 = vmul.f32 %v2134, %v2134
        %2145 = vadd.xlane.f32.xlu0 %v2143
        %v2146 = vpop.xlane.xlu0 %2145
        %2147 = vadd.xlane.f32.xlu0 %v2144
        %v2148 = vpop.xlane.xlu0 %2147
        %v2149 = vmul.f32 %v2146, 0.03125
        %v2150 = vmul.f32 %v2148, 0.03125
        %v2151 = vmul.f32 %v2141, %v2141
        %v2152 = vmul.f32 %v2142, %v2142
        %v2153 = vsub.f32 %v2149, %v2151
        %v2154 = vsub.f32 %v2150, %v2152
        %v2155 = vmax.f32 %v2153, 0.0
        %v2156 = vmax.f32 %v2154, 0.0
        %v2157 = vsub.f32 %v2133, %v2141
        %v2158 = vsub.f32 %v2134, %v2142
        %v2159 = vadd.f32 %v2155, 1e-05
        %v2160 = vadd.f32 %v2156, 1e-05
        %v2161 = vrsqrt.pop %v2159
        %v2162 = vrsqrt.pop %v2160
        %v2163 = vmul.f32 %v2157, %v2161
        %v2164 = vmul.f32 %v2158, %v2162
        %v2166 = vlaneseq
        %v2167 = vshrl.u32 %v2166, 7
        %v2168 = vsub.s32 0, %v2167
        %v2169 = vrot.slane %v2135, %v2168
        %v2171 = vmul.f32 %v2163, %v2169
        %v2172 = vmul.f32 %v2164, %v2169
        %v2174 = vlaneseq
        %v2175 = vshrl.u32 %v2174, 7
        %v2176 = vsub.s32 0, %v2175
        %v2177 = vrot.slane %v2136, %v2176
        %v2179 = vadd.f32 %v2171, %v2177
        %v2180 = vadd.f32 %v2172, %v2177
        %v2181 = vpack.c.bf16 %v2180, %v2179
        %v2182 = vld [vmem:[#allocation16] sm:$0xf]
        %v2183 = vld [vmem:[#allocation16 + $0x4] sm:$0xf]
        %v2184 = vld [vmem:[#allocation16 + $0x8] sm:$0xf]
        %v2185 = vld [vmem:[#allocation16 + $0xc] sm:$0xf]
        %v2186 = vld [vmem:[#allocation16 + $0x10] sm:$0xf]
        %v2187 = vld [vmem:[#allocation16 + $0x14] sm:$0xf]
        %v2188 = vld [vmem:[#allocation16 + $0x18] sm:$0xf]
        %v2189 = vld [vmem:[#allocation16 + $0x1c] sm:$0xf]
        %v2190 = vld [vmem:[#allocation16 + $0x20] sm:$0xf]
        %v2191 = vld [vmem:[#allocation16 + $0x24] sm:$0xf]
        %v2192 = vld [vmem:[#allocation16 + $0x28] sm:$0xf]
        %v2193 = vld [vmem:[#allocation16 + $0x2c] sm:$0xf]
        %v2194 = vld [vmem:[#allocation16 + $0x30] sm:$0xf]
        %v2195 = vld [vmem:[#allocation16 + $0x34] sm:$0xf]
        %v2196 = vld [vmem:[#allocation16 + $0x38] sm:$0xf]
        %v2197 = vld [vmem:[#allocation16 + $0x3c] sm:$0xf]
        %v2198 = vld [vmem:[%s16] sm:$0x1]
        %v2200 = vlaneseq
        %v2201 = vshrl.u32 %v2200, 7
        %v2202 = vsub.s32 0, %v2201
        %v2203 = vrot.slane %v2198, %v2202
        %v2221 = vunpack.c.l.b16 %v2182
        %v2222 = vunpack.c.l.b16 %v2183
        %v2223 = vunpack.c.l.b16 %v2184
        %v2224 = vunpack.c.l.b16 %v2185
        %v2225 = vunpack.c.l.b16 %v2186
        %v2226 = vunpack.c.l.b16 %v2187
        %v2227 = vunpack.c.l.b16 %v2188
        %v2228 = vunpack.c.l.b16 %v2189
        %v2229 = vunpack.c.l.b16 %v2190
        %v2230 = vunpack.c.l.b16 %v2191
        %v2231 = vunpack.c.l.b16 %v2192
        %v2232 = vunpack.c.l.b16 %v2193
        %v2233 = vunpack.c.l.b16 %v2194
        %v2234 = vunpack.c.l.b16 %v2195
        %v2235 = vunpack.c.l.b16 %v2196
        %v2236 = vunpack.c.l.b16 %v2197
        %v2237 = vpack.c.b16 %v2222, %v2221
        %v2238 = vpack.c.b16 %v2224, %v2223
        %v2239 = vpack.c.b16 %v2226, %v2225
        %v2240 = vpack.c.b16 %v2228, %v2227
        %v2241 = vpack.c.b16 %v2230, %v2229
        %v2242 = vpack.c.b16 %v2232, %v2231
        %v2243 = vpack.c.b16 %v2234, %v2233
        %v2244 = vpack.c.b16 %v2236, %v2235
        %2253 = vmatprep.subr.bf16.mxu0 0
        %2254 = vmatpush1.bf16.msra.mxu0 %v2237
        %2255 = vmatprep.subr.bf16.mxu0 0
        %2256 = vmatpush1.bf16.msra.mxu0 %v2238
        %2257 = vmatprep.subr.bf16.mxu0 0
        %2258 = vmatpush1.bf16.msra.mxu0 %v2239
        %2259 = vmatprep.subr.bf16.mxu0 0
        %2260 = vmatpush1.bf16.msra.mxu0 %v2240
        %2261 = vmatprep.subr.bf16.mxu0 0
        %2262 = vmatpush1.bf16.msra.mxu0 %v2241
        %2263 = vmatprep.subr.bf16.mxu0 0
        %2264 = vmatpush1.bf16.msra.mxu0 %v2242
        %2265 = vmatprep.subr.bf16.mxu0 0
        %2266 = vmatpush1.bf16.msra.mxu0 %v2243
        %2267 = vmatprep.subr.bf16.mxu0 0
        %2268 = vmatpush1.bf16.msra.mxu0 %v2244
        %2269 = vmatprep.subr.bf16.mxu0 0
        %2270 = vmatpush1.bf16.msra.mxu0 0
        %2271 = vmatprep.subr.bf16.mxu0 0
        %2272 = vmatpush1.bf16.msra.mxu0 0
        %2273 = vmatprep.subr.bf16.mxu0 0
        %2274 = vmatpush1.bf16.msra.mxu0 0
        %2275 = vmatprep.subr.bf16.mxu0 0
        %2276 = vmatpush1.bf16.msra.mxu0 0
        %2277 = vmatprep.subr.bf16.mxu0 0
        %2278 = vmatpush1.bf16.msra.mxu0 0
        %2279 = vmatprep.subr.bf16.mxu0 0
        %2280 = vmatpush1.bf16.msra.mxu0 0
        %2281 = vmatprep.subr.bf16.mxu0 0
        %2282 = vmatpush1.bf16.msra.mxu0 0
        %2283 = vmatprep.subr.bf16.mxu0 0
        %2284 = vmatpush1.bf16.msra.mxu0 0
        %2285 = vmatprep.mubr.bf16.mxu0 0
        %2286 = vmatmul.mubr.bf16.gmra.mrb[0].mxu0 %v2181
        %v2287 = vpop.f32.mrb[0].mxu0
        %v2288 = vadd.f32 %v2203, %v2287
        %v2289 = vpop.f32.mrb[0].mxu0
        %v2290 = vpop.f32.mrb[0].mxu0
        %v2291 = vadd.f32 %v2203, %v2290
        %v2292 = vpop.f32.mrb[0].mxu0
        %2293 = vdwg.mxu0
        %v2294 = vmax.f32 %v2288, 0.0
        %v2295 = vmax.f32 %v2291, 0.0
        %v2296 = vpack.c.bf16 %v2295, %v2294
        %v2297 = vld [vmem:[#allocation17] sm:$0xf]
        %v2298 = vld [vmem:[#allocation17 + $0x4] sm:$0xf]
        %v2299 = vld [vmem:[#allocation17 + $0x8] sm:$0xf]
        %v2300 = vld [vmem:[#allocation17 + $0xc] sm:$0xf]
        %v2301 = vld [vmem:[#allocation17 + $0x10] sm:$0xf]
        %v2302 = vld [vmem:[#allocation17 + $0x14] sm:$0xf]
        %v2303 = vld [vmem:[#allocation17 + $0x18] sm:$0xf]
        %v2304 = vld [vmem:[#allocation17 + $0x1c] sm:$0xf]
        %v2305 = vld [vmem:[#allocation17 + $0x20] sm:$0xf]
        %v2306 = vld [vmem:[#allocation17 + $0x24] sm:$0xf]
        %v2307 = vld [vmem:[#allocation17 + $0x28] sm:$0xf]
        %v2308 = vld [vmem:[#allocation17 + $0x2c] sm:$0xf]
        %v2309 = vld [vmem:[#allocation17 + $0x30] sm:$0xf]
        %v2310 = vld [vmem:[#allocation17 + $0x34] sm:$0xf]
        %v2311 = vld [vmem:[#allocation17 + $0x38] sm:$0xf]
        %v2312 = vld [vmem:[#allocation17 + $0x3c] sm:$0xf]
        %v2313 = vld [vmem:[#allocation19] sm:$0x1]
        %v2315 = vlaneseq
        %v2316 = vshrl.u32 %v2315, 7
        %v2317 = vsub.s32 0, %v2316
        %v2318 = vrot.slane %v2313, %v2317
        %v2336 = vunpack.c.l.b16 %v2297
        %v2337 = vunpack.c.l.b16 %v2298
        %v2338 = vunpack.c.l.b16 %v2299
        %v2339 = vunpack.c.l.b16 %v2300
        %v2340 = vunpack.c.l.b16 %v2301
        %v2341 = vunpack.c.l.b16 %v2302
        %v2342 = vunpack.c.l.b16 %v2303
        %v2343 = vunpack.c.l.b16 %v2304
        %v2344 = vunpack.c.l.b16 %v2305
        %v2345 = vunpack.c.l.b16 %v2306
        %v2346 = vunpack.c.l.b16 %v2307
        %v2347 = vunpack.c.l.b16 %v2308
        %v2348 = vunpack.c.l.b16 %v2309
        %v2349 = vunpack.c.l.b16 %v2310
        %v2350 = vunpack.c.l.b16 %v2311
        %v2351 = vunpack.c.l.b16 %v2312
        %v2352 = vpack.c.b16 %v2337, %v2336
        %v2353 = vpack.c.b16 %v2339, %v2338
        %v2354 = vpack.c.b16 %v2341, %v2340
        %v2355 = vpack.c.b16 %v2343, %v2342
        %v2356 = vpack.c.b16 %v2345, %v2344
        %v2357 = vpack.c.b16 %v2347, %v2346
        %v2358 = vpack.c.b16 %v2349, %v2348
        %v2359 = vpack.c.b16 %v2351, %v2350
        %2368 = vmatprep.subr.bf16.mxu0 0
        %2369 = vmatpush1.bf16.msra.mxu0 %v2352
        %2370 = vmatprep.subr.bf16.mxu0 0
        %2371 = vmatpush1.bf16.msra.mxu0 %v2353
        %2372 = vmatprep.subr.bf16.mxu0 0
        %2373 = vmatpush1.bf16.msra.mxu0 %v2354
        %2374 = vmatprep.subr.bf16.mxu0 0
        %2375 = vmatpush1.bf16.msra.mxu0 %v2355
        %2376 = vmatprep.subr.bf16.mxu0 0
        %2377 = vmatpush1.bf16.msra.mxu0 %v2356
        %2378 = vmatprep.subr.bf16.mxu0 0
        %2379 = vmatpush1.bf16.msra.mxu0 %v2357
        %2380 = vmatprep.subr.bf16.mxu0 0
        %2381 = vmatpush1.bf16.msra.mxu0 %v2358
        %2382 = vmatprep.subr.bf16.mxu0 0
        %2383 = vmatpush1.bf16.msra.mxu0 %v2359
        %2384 = vmatprep.subr.bf16.mxu0 0
        %2385 = vmatpush1.bf16.msra.mxu0 0
        %2386 = vmatprep.subr.bf16.mxu0 0
        %2387 = vmatpush1.bf16.msra.mxu0 0
        %2388 = vmatprep.subr.bf16.mxu0 0
        %2389 = vmatpush1.bf16.msra.mxu0 0
        %2390 = vmatprep.subr.bf16.mxu0 0
        %2391 = vmatpush1.bf16.msra.mxu0 0
        %2392 = vmatprep.subr.bf16.mxu0 0
        %2393 = vmatpush1.bf16.msra.mxu0 0
        %2394 = vmatprep.subr.bf16.mxu0 0
        %2395 = vmatpush1.bf16.msra.mxu0 0
        %2396 = vmatprep.subr.bf16.mxu0 0
        %2397 = vmatpush1.bf16.msra.mxu0 0
        %2398 = vmatprep.subr.bf16.mxu0 0
        %2399 = vmatpush1.bf16.msra.mxu0 0
        %2400 = vmatprep.mubr.bf16.mxu0 0
        %2401 = vmatmul.mubr.bf16.gmra.mrb[0].mxu0 %v2296
        %v2402 = vpop.f32.mrb[0].mxu0
        %v2403 = vadd.f32 %v2318, %v2402
        %v2404 = vpop.f32.mrb[0].mxu0
        %v2405 = vpop.f32.mrb[0].mxu0
        %v2406 = vadd.f32 %v2318, %v2405
        %v2407 = vpop.f32.mrb[0].mxu0
        %2408 = vdwg.mxu0
        %v2409 = vadd.f32 %v2179, %v2403
        %v2410 = vadd.f32 %v2180, %v2406
        %v2411 = vld [vmem:[#allocation20] sm:$0x1]
        %v2412 = vld [vmem:[#allocation22] sm:$0x1]
        %2413 = vadd.xlane.f32.xlu0 %v2409
        %v2414 = vpop.xlane.xlu0 %2413
        %2415 = vadd.xlane.f32.xlu0 %v2410
        %v2416 = vpop.xlane.xlu0 %2415
        %v2417 = vmul.f32 %v2414, 0.03125
        %v2418 = vmul.f32 %v2416, 0.03125
        %v2419 = vmul.f32 %v2409, %v2409
        %v2420 = vmul.f32 %v2410, %v2410
        %2421 = vadd.xlane.f32.xlu0 %v2419
        %v2422 = vpop.xlane.xlu0 %2421
        %2423 = vadd.xlane.f32.xlu0 %v2420
        %v2424 = vpop.xlane.xlu0 %2423
        %v2425 = vmul.f32 %v2422, 0.03125
        %v2426 = vmul.f32 %v2424, 0.03125
        %v2427 = vmul.f32 %v2417, %v2417
        %v2428 = vmul.f32 %v2418, %v2418
        %v2429 = vsub.f32 %v2425, %v2427
        %v2430 = vsub.f32 %v2426, %v2428
        %v2431 = vmax.f32 %v2429, 0.0
        %v2432 = vmax.f32 %v2430, 0.0
        %v2433 = vsub.f32 %v2409, %v2417
        %v2434 = vsub.f32 %v2410, %v2418
        %v2435 = vadd.f32 %v2431, 1e-05
        %v2436 = vadd.f32 %v2432, 1e-05
        %v2437 = vrsqrt.pop %v2435
        %v2438 = vrsqrt.pop %v2436
        %v2439 = vmul.f32 %v2433, %v2437
        %v2440 = vmul.f32 %v2434, %v2438
        %v2442 = vlaneseq
        %v2443 = vshrl.u32 %v2442, 7
        %v2444 = vsub.s32 0, %v2443
        %v2445 = vrot.slane %v2411, %v2444
        %v2447 = vmul.f32 %v2439, %v2445
        %v2448 = vmul.f32 %v2440, %v2445
        %v2450 = vlaneseq
        %v2451 = vshrl.u32 %v2450, 7
        %v2452 = vsub.s32 0, %v2451
        %v2453 = vrot.slane %v2412, %v2452
        %v2455 = vadd.f32 %v2447, %v2453
        %v2456 = vadd.f32 %v2448, %v2453
        %v2457 = vpack.c.bf16 %v2456, %v2455
        %s2458 = scalar_lea.vmem [#allocation10], 64
        %v2459 = vld [vmem:[%s2458] sm:$0xf]
        %v2460 = vld [vmem:[%s2458 + $0x4] sm:$0xf]
        %v2461 = vld [vmem:[%s2458 + $0x8] sm:$0xf]
        %v2462 = vld [vmem:[%s2458 + $0xc] sm:$0xf]
        %v2463 = vld [vmem:[%s2458 + $0x10] sm:$0xf]
        %v2464 = vld [vmem:[%s2458 + $0x14] sm:$0xf]
        %v2465 = vld [vmem:[%s2458 + $0x18] sm:$0xf]
        %v2466 = vld [vmem:[%s2458 + $0x1c] sm:$0xf]
        %v2467 = vld [vmem:[%s2458 + $0x20] sm:$0xf]
        %v2468 = vld [vmem:[%s2458 + $0x24] sm:$0xf]
        %v2469 = vld [vmem:[%s2458 + $0x28] sm:$0xf]
        %v2470 = vld [vmem:[%s2458 + $0x2c] sm:$0xf]
        %v2471 = vld [vmem:[%s2458 + $0x30] sm:$0xf]
        %v2472 = vld [vmem:[%s2458 + $0x34] sm:$0xf]
        %v2473 = vld [vmem:[%s2458 + $0x38] sm:$0xf]
        %v2474 = vld [vmem:[%s2458 + $0x3c] sm:$0xf]
        %s2475 = scalar_lea.vmem %s6, 1
        %v2476 = vld [vmem:[%s2475] sm:$0x1]
        %v2478 = vlaneseq
        %v2479 = vshrl.u32 %v2478, 7
        %v2480 = vsub.s32 0, %v2479
        %v2481 = vrot.slane %v2476, %v2480
        %v2499 = vunpack.c.l.b16 %v2459
        %v2500 = vunpack.c.l.b16 %v2460
        %v2501 = vunpack.c.l.b16 %v2461
        %v2502 = vunpack.c.l.b16 %v2462
        %v2503 = vunpack.c.l.b16 %v2463
        %v2504 = vunpack.c.l.b16 %v2464
        %v2505 = vunpack.c.l.b16 %v2465
        %v2506 = vunpack.c.l.b16 %v2466
        %v2507 = vunpack.c.l.b16 %v2467
        %v2508 = vunpack.c.l.b16 %v2468
        %v2509 = vunpack.c.l.b16 %v2469
        %v2510 = vunpack.c.l.b16 %v2470
        %v2511 = vunpack.c.l.b16 %v2471
        %v2512 = vunpack.c.l.b16 %v2472
        %v2513 = vunpack.c.l.b16 %v2473
        %v2514 = vunpack.c.l.b16 %v2474
        %v2515 = vpack.c.b16 %v2500, %v2499
        %v2516 = vpack.c.b16 %v2502, %v2501
        %v2517 = vpack.c.b16 %v2504, %v2503
        %v2518 = vpack.c.b16 %v2506, %v2505
        %v2519 = vpack.c.b16 %v2508, %v2507
        %v2520 = vpack.c.b16 %v2510, %v2509
        %v2521 = vpack.c.b16 %v2512, %v2511
        %v2522 = vpack.c.b16 %v2514, %v2513
        %2531 = vmatprep.subr.bf16.mxu0 0
        %2532 = vmatpush1.bf16.msra.mxu0 %v2515
        %2533 = vmatprep.subr.bf16.mxu0 0
        %2534 = vmatpush1.bf16.msra.mxu0 %v2516
        %2535 = vmatprep.subr.bf16.mxu0 0
        %2536 = vmatpush1.bf16.msra.mxu0 %v2517
        %2537 = vmatprep.subr.bf16.mxu0 0
        %2538 = vmatpush1.bf16.msra.mxu0 %v2518
        %2539 = vmatprep.subr.bf16.mxu0 0
        %2540 = vmatpush1.bf16.msra.mxu0 %v2519
        %2541 = vmatprep.subr.bf16.mxu0 0
        %2542 = vmatpush1.bf16.msra.mxu0 %v2520
        %2543 = vmatprep.subr.bf16.mxu0 0
        %2544 = vmatpush1.bf16.msra.mxu0 %v2521
        %2545 = vmatprep.subr.bf16.mxu0 0
        %2546 = vmatpush1.bf16.msra.mxu0 %v2522
        %2547 = vmatprep.subr.bf16.mxu0 0
        %2548 = vmatpush1.bf16.msra.mxu0 0
        %2549 = vmatprep.subr.bf16.mxu0 0
        %2550 = vmatpush1.bf16.msra.mxu0 0
        %2551 = vmatprep.subr.bf16.mxu0 0
        %2552 = vmatpush1.bf16.msra.mxu0 0
        %2553 = vmatprep.subr.bf16.mxu0 0
        %2554 = vmatpush1.bf16.msra.mxu0 0
        %2555 = vmatprep.subr.bf16.mxu0 0
        %2556 = vmatpush1.bf16.msra.mxu0 0
        %2557 = vmatprep.subr.bf16.mxu0 0
        %2558 = vmatpush1.bf16.msra.mxu0 0
        %2559 = vmatprep.subr.bf16.mxu0 0
        %2560 = vmatpush1.bf16.msra.mxu0 0
        %2561 = vmatprep.subr.bf16.mxu0 0
        %2562 = vmatpush1.bf16.msra.mxu0 0
        %2563 = vmatprep.mubr.bf16.mxu0 0
        %2564 = vmatmul.mubr.bf16.gmra.mrb[0].mxu0 %v2457
        %v2565 = vpop.f32.mrb[0].mxu0
        %v2566 = vadd.f32 %v2481, %v2565
        %v2567 = vpop.f32.mrb[0].mxu0
        %v2568 = vpop.f32.mrb[0].mxu0
        %v2569 = vadd.f32 %v2481, %v2568
        %v2570 = vpop.f32.mrb[0].mxu0
        %2571 = vdwg.mxu0
        %s2572 = scalar_lea.vmem [#allocation11], 64
        %v2573 = vld [vmem:[%s2572] sm:$0xf]
        %v2574 = vld [vmem:[%s2572 + $0x4] sm:$0xf]
        %v2575 = vld [vmem:[%s2572 + $0x8] sm:$0xf]
        %v2576 = vld [vmem:[%s2572 + $0xc] sm:$0xf]
        %v2577 = vld [vmem:[%s2572 + $0x10] sm:$0xf]
        %v2578 = vld [vmem:[%s2572 + $0x14] sm:$0xf]
        %v2579 = vld [vmem:[%s2572 + $0x18] sm:$0xf]
        %v2580 = vld [vmem:[%s2572 + $0x1c] sm:$0xf]
        %v2581 = vld [vmem:[%s2572 + $0x20] sm:$0xf]
        %v2582 = vld [vmem:[%s2572 + $0x24] sm:$0xf]
        %v2583 = vld [vmem:[%s2572 + $0x28] sm:$0xf]
        %v2584 = vld [vmem:[%s2572 + $0x2c] sm:$0xf]
        %v2585 = vld [vmem:[%s2572 + $0x30] sm:$0xf]
        %v2586 = vld [vmem:[%s2572 + $0x34] sm:$0xf]
        %v2587 = vld [vmem:[%s2572 + $0x38] sm:$0xf]
        %v2588 = vld [vmem:[%s2572 + $0x3c] sm:$0xf]
        %s2589 = scalar_lea.vmem %s8, 1
        %v2590 = vld [vmem:[%s2589] sm:$0x1]
        %v2592 = vlaneseq
        %v2593 = vshrl.u32 %v2592, 7
        %v2594 = vsub.s32 0, %v2593
        %v2595 = vrot.slane %v2590, %v2594
        %v2613 = vunpack.c.l.b16 %v2573
        %v2614 = vunpack.c.l.b16 %v2574
        %v2615 = vunpack.c.l.b16 %v2575
        %v2616 = vunpack.c.l.b16 %v2576
        %v2617 = vunpack.c.l.b16 %v2577
        %v2618 = vunpack.c.l.b16 %v2578
        %v2619 = vunpack.c.l.b16 %v2579
        %v2620 = vunpack.c.l.b16 %v2580
        %v2621 = vunpack.c.l.b16 %v2581
        %v2622 = vunpack.c.l.b16 %v2582
        %v2623 = vunpack.c.l.b16 %v2583
        %v2624 = vunpack.c.l.b16 %v2584
        %v2625 = vunpack.c.l.b16 %v2585
        %v2626 = vunpack.c.l.b16 %v2586
        %v2627 = vunpack.c.l.b16 %v2587
        %v2628 = vunpack.c.l.b16 %v2588
        %v2629 = vpack.c.b16 %v2614, %v2613
        %v2630 = vpack.c.b16 %v2616, %v2615
        %v2631 = vpack.c.b16 %v2618, %v2617
        %v2632 = vpack.c.b16 %v2620, %v2619
        %v2633 = vpack.c.b16 %v2622, %v2621
        %v2634 = vpack.c.b16 %v2624, %v2623
        %v2635 = vpack.c.b16 %v2626, %v2625
        %v2636 = vpack.c.b16 %v2628, %v2627
        %2645 = vmatprep.subr.bf16.mxu0 0
        %2646 = vmatpush1.bf16.msra.mxu0 %v2629
        %2647 = vmatprep.subr.bf16.mxu0 0
        %2648 = vmatpush1.bf16.msra.mxu0 %v2630
        %2649 = vmatprep.subr.bf16.mxu0 0
        %2650 = vmatpush1.bf16.msra.mxu0 %v2631
        %2651 = vmatprep.subr.bf16.mxu0 0
        %2652 = vmatpush1.bf16.msra.mxu0 %v2632
        %2653 = vmatprep.subr.bf16.mxu0 0
        %2654 = vmatpush1.bf16.msra.mxu0 %v2633
        %2655 = vmatprep.subr.bf16.mxu0 0
        %2656 = vmatpush1.bf16.msra.mxu0 %v2634
        %2657 = vmatprep.subr.bf16.mxu0 0
        %2658 = vmatpush1.bf16.msra.mxu0 %v2635
        %2659 = vmatprep.subr.bf16.mxu0 0
        %2660 = vmatpush1.bf16.msra.mxu0 %v2636
        %2661 = vmatprep.subr.bf16.mxu0 0
        %2662 = vmatpush1.bf16.msra.mxu0 0
        %2663 = vmatprep.subr.bf16.mxu0 0
        %2664 = vmatpush1.bf16.msra.mxu0 0
        %2665 = vmatprep.subr.bf16.mxu0 0
        %2666 = vmatpush1.bf16.msra.mxu0 0
        %2667 = vmatprep.subr.bf16.mxu0 0
        %2668 = vmatpush1.bf16.msra.mxu0 0
        %2669 = vmatprep.subr.bf16.mxu0 0
        %2670 = vmatpush1.bf16.msra.mxu0 0
        %2671 = vmatprep.subr.bf16.mxu0 0
        %2672 = vmatpush1.bf16.msra.mxu0 0
        %2673 = vmatprep.subr.bf16.mxu0 0
        %2674 = vmatpush1.bf16.msra.mxu0 0
        %2675 = vmatprep.subr.bf16.mxu0 0
        %2676 = vmatpush1.bf16.msra.mxu0 0
        %2677 = vmatprep.mubr.bf16.mxu0 0
        %2678 = vmatmul.mubr.bf16.gmra.mrb[0].mxu0 %v2457
        %v2679 = vpop.f32.mrb[0].mxu0
        %v2680 = vadd.f32 %v2595, %v2679
        %v2681 = vpop.f32.mrb[0].mxu0
        %v2682 = vpop.f32.mrb[0].mxu0
        %v2683 = vadd.f32 %v2595, %v2682
        %v2684 = vpop.f32.mrb[0].mxu0
        %2685 = vdwg.mxu0
        %s2686 = scalar_lea.vmem [#allocation13], 64
        %v2687 = vld [vmem:[%s2686] sm:$0xf]
        %v2688 = vld [vmem:[%s2686 + $0x4] sm:$0xf]
        %v2689 = vld [vmem:[%s2686 + $0x8] sm:$0xf]
        %v2690 = vld [vmem:[%s2686 + $0xc] sm:$0xf]
        %v2691 = vld [vmem:[%s2686 + $0x10] sm:$0xf]
        %v2692 = vld [vmem:[%s2686 + $0x14] sm:$0xf]
        %v2693 = vld [vmem:[%s2686 + $0x18] sm:$0xf]
        %v2694 = vld [vmem:[%s2686 + $0x1c] sm:$0xf]
        %v2695 = vld [vmem:[%s2686 + $0x20] sm:$0xf]
        %v2696 = vld [vmem:[%s2686 + $0x24] sm:$0xf]
        %v2697 = vld [vmem:[%s2686 + $0x28] sm:$0xf]
        %v2698 = vld [vmem:[%s2686 + $0x2c] sm:$0xf]
        %v2699 = vld [vmem:[%s2686 + $0x30] sm:$0xf]
        %v2700 = vld [vmem:[%s2686 + $0x34] sm:$0xf]
        %v2701 = vld [vmem:[%s2686 + $0x38] sm:$0xf]
        %v2702 = vld [vmem:[%s2686 + $0x3c] sm:$0xf]
        %s2703 = scalar_lea.vmem %s10, 1
        %v2704 = vld [vmem:[%s2703] sm:$0x1]
        %v2706 = vlaneseq
        %v2707 = vshrl.u32 %v2706, 7
        %v2708 = vsub.s32 0, %v2707
        %v2709 = vrot.slane %v2704, %v2708
        %v2727 = vunpack.c.l.b16 %v2687
        %v2728 = vunpack.c.l.b16 %v2688
        %v2729 = vunpack.c.l.b16 %v2689
        %v2730 = vunpack.c.l.b16 %v2690
        %v2731 = vunpack.c.l.b16 %v2691
        %v2732 = vunpack.c.l.b16 %v2692
        %v2733 = vunpack.c.l.b16 %v2693
        %v2734 = vunpack.c.l.b16 %v2694
        %v2735 = vunpack.c.l.b16 %v2695
        %v2736 = vunpack.c.l.b16 %v2696
        %v2737 = vunpack.c.l.b16 %v2697
        %v2738 = vunpack.c.l.b16 %v2698
        %v2739 = vunpack.c.l.b16 %v2699
        %v2740 = vunpack.c.l.b16 %v2700
        %v2741 = vunpack.c.l.b16 %v2701
        %v2742 = vunpack.c.l.b16 %v2702
        %v2743 = vpack.c.b16 %v2728, %v2727
        %v2744 = vpack.c.b16 %v2730, %v2729
        %v2745 = vpack.c.b16 %v2732, %v2731
        %v2746 = vpack.c.b16 %v2734, %v2733
        %v2747 = vpack.c.b16 %v2736, %v2735
        %v2748 = vpack.c.b16 %v2738, %v2737
        %v2749 = vpack.c.b16 %v2740, %v2739
        %v2750 = vpack.c.b16 %v2742, %v2741
        %2759 = vmatprep.subr.bf16.mxu0 0
        %2760 = vmatpush1.bf16.msra.mxu0 %v2743
        %2761 = vmatprep.subr.bf16.mxu0 0
        %2762 = vmatpush1.bf16.msra.mxu0 %v2744
        %2763 = vmatprep.subr.bf16.mxu0 0
        %2764 = vmatpush1.bf16.msra.mxu0 %v2745
        %2765 = vmatprep.subr.bf16.mxu0 0
        %2766 = vmatpush1.bf16.msra.mxu0 %v2746
        %2767 = vmatprep.subr.bf16.mxu0 0
        %2768 = vmatpush1.bf16.msra.mxu0 %v2747
        %2769 = vmatprep.subr.bf16.mxu0 0
        %2770 = vmatpush1.bf16.msra.mxu0 %v2748
        %2771 = vmatprep.subr.bf16.mxu0 0
        %2772 = vmatpush1.bf16.msra.mxu0 %v2749
        %2773 = vmatprep.subr.bf16.mxu0 0
        %2774 = vmatpush1.bf16.msra.mxu0 %v2750
        %2775 = vmatprep.subr.bf16.mxu0 0
        %2776 = vmatpush1.bf16.msra.mxu0 0
        %2777 = vmatprep.subr.bf16.mxu0 0
        %2778 = vmatpush1.bf16.msra.mxu0 0
        %2779 = vmatprep.subr.bf16.mxu0 0
        %2780 = vmatpush1.bf16.msra.mxu0 0
        %2781 = vmatprep.subr.bf16.mxu0 0
        %2782 = vmatpush1.bf16.msra.mxu0 0
        %2783 = vmatprep.subr.bf16.mxu0 0
        %2784 = vmatpush1.bf16.msra.mxu0 0
        %2785 = vmatprep.subr.bf16.mxu0 0
        %2786 = vmatpush1.bf16.msra.mxu0 0
        %2787 = vmatprep.subr.bf16.mxu0 0
        %2788 = vmatpush1.bf16.msra.mxu0 0
        %2789 = vmatprep.subr.bf16.mxu0 0
        %2790 = vmatpush1.bf16.msra.mxu0 0
        %2791 = vmatprep.mubr.bf16.mxu0 0
        %2792 = vmatmul.mubr.bf16.gmra.mrb[0].mxu0 %v2457
        %v2793 = vpop.f32.mrb[0].mxu0
        %v2794 = vadd.f32 %v2709, %v2793
        %v2795 = vpop.f32.mrb[0].mxu0
        %v2796 = vpop.f32.mrb[0].mxu0
        %v2797 = vadd.f32 %v2709, %v2796
        %v2798 = vpop.f32.mrb[0].mxu0
        %2799 = vdwg.mxu0
        %v2800 = vmul.f32 %v2566, 0.35355338
        %v2801 = vmul.f32 %v2569, 0.35355338
        %v2802 = vpack.c.bf16 %v2797, %v2794
        %v2804 = vsel %vm1393, %v2800, 0
        %v2807 = vsel %vm1393, %v2801, 0
        %v2810 = vsel %vm1393, %v2680, 0
        %v2813 = vsel %vm1393, %v2683, 0
        %2815 = vmatprep.subr.mxu0 0.0
        %2816 = vmatpush1.xpose.msra.mxu0 %v2810
        %2817 = vmatprep.subr.mxu0 0.0
        %2818 = vmatpush1.xpose.msra.mxu0 %v2813
        %2819 = vmatprep.subr.mxu0 0.0
        %2820 = vmatpush1.xpose.msra.mxu0 0.0
        %2821 = vmatprep.subr.mxu0 0.0
        %2822 = vmatpush1.xpose.msra.mxu0 0.0
        %2823 = vmatprep.subr.mxu0 0.0
        %2824 = vmatpush1.xpose.msra.mxu0 0.0
        %2825 = vmatprep.subr.mxu0 0.0
        %2826 = vmatpush1.xpose.msra.mxu0 0.0
        %2827 = vmatprep.subr.mxu0 0.0
        %2828 = vmatpush1.xpose.msra.mxu0 0.0
        %2829 = vmatprep.subr.mxu0 0.0
        %2830 = vmatpush1.xpose.msra.mxu0 0.0
        %2831 = vmatprep.subr.mxu0 0.0
        %2832 = vmatpush1.xpose.msra.mxu0 0.0
        %2833 = vmatprep.subr.mxu0 0.0
        %2834 = vmatpush1.xpose.msra.mxu0 0.0
        %2835 = vmatprep.subr.mxu0 0.0
        %2836 = vmatpush1.xpose.msra.mxu0 0.0
        %2837 = vmatprep.subr.mxu0 0.0
        %2838 = vmatpush1.xpose.msra.mxu0 0.0
        %2839 = vmatprep.subr.mxu0 0.0
        %2840 = vmatpush1.xpose.msra.mxu0 0.0
        %2841 = vmatprep.subr.mxu0 0.0
        %2842 = vmatpush1.xpose.msra.mxu0 0.0
        %2843 = vmatprep.subr.mxu0 0.0
        %2844 = vmatpush1.xpose.msra.mxu0 0.0
        %2845 = vmatprep.subr.mxu0 0.0
        %2846 = vmatpush1.xpose.msra.mxu0 0.0
        %2847 = vmatprep.subr.mxu0 0.0
        %2848 = vmatpush1.xpose.msra.mxu0 0.0
        %2849 = vmatprep.subr.mxu0 0.0
        %2850 = vmatpush1.xpose.msra.mxu0 0.0
        %2851 = vmatprep.subr.mxu0 0.0
        %2852 = vmatpush1.xpose.msra.mxu0 0.0
        %2853 = vmatprep.subr.mxu0 0.0
        %2854 = vmatpush1.xpose.msra.mxu0 0.0
        %2855 = vmatprep.subr.mxu0 0.0
        %2856 = vmatpush1.xpose.msra.mxu0 0.0
        %2857 = vmatprep.subr.mxu0 0.0
        %2858 = vmatpush1.xpose.msra.mxu0 0.0
        %2859 = vmatprep.subr.mxu0 0.0
        %2860 = vmatpush1.xpose.msra.mxu0 0.0
        %2861 = vmatprep.subr.mxu0 0.0
        %2862 = vmatpush1.xpose.msra.mxu0 0.0
        %2863 = vmatprep.subr.mxu0 0.0
        %2864 = vmatpush1.xpose.msra.mxu0 0.0
        %2865 = vmatprep.subr.mxu0 0.0
        %2866 = vmatpush1.xpose.msra.mxu0 0.0
        %2867 = vmatprep.subr.mxu0 0.0
        %2868 = vmatpush1.xpose.msra.mxu0 0.0
        %2869 = vmatprep.subr.mxu0 0.0
        %2870 = vmatpush1.xpose.msra.mxu0 0.0
        %2871 = vmatprep.subr.mxu0 0.0
        %2872 = vmatpush1.xpose.msra.mxu0 0.0
        %2873 = vmatprep.subr.mxu0 0.0
        %2874 = vmatpush1.xpose.msra.mxu0 0.0
        %2875 = vmatprep.subr.mxu0 0.0
        %2876 = vmatpush1.xpose.msra.mxu0 0.0
        %2877 = vmatprep.subr.mxu0 0.0
        %2878 = vmatpush1.xpose.msra.mxu0 0.0
        %2879 = vmatprep.mubr.f32.mxu0 0.0
        %2880 = vmatmul.mubr.f32.gmra.mrb[0].mxu0 %v2804
        %v2881 = vpop.f32.mrb[0].mxu0
        %v2882 = vadd.f32 %v1051, %v2881
        %v2883 = vpop.f32.mrb[0].mxu0
        %2884 = vmatprep.mubr.f32.mxu0 0.0
        %2885 = vmatmul.mubr.f32.gmra.mrb[0].mxu0 %v2807
        %v2886 = vpop.f32.mrb[0].mxu0
        %v2887 = vadd.f32 %v1052, %v2886
        %v2888 = vpop.f32.mrb[0].mxu0
        %2889 = vdwg.mxu0
        %v2890 = vsel %vm1481, %v2882, -inf
        %2891 = vmax.xlane.f32.xlu0 %v2890
        %v2892 = vpop.xlane.xlu0 %2891
        %v2893 = vsel %vm1481, %v2887, -inf
        %2894 = vmax.xlane.f32.xlu0 %v2893
        %v2895 = vpop.xlane.xlu0 %2894
        %v2896 = vsub.f32 %v2882, %v2892
        %v2897 = vsub.f32 %v2887, %v2895
        %v2898 = vmul.f32 %v2896, 1.442695
        %v2899 = vpow.pop %v2898
        %v2900 = vmul.f32 %v2897, 1.442695
        %v2901 = vpow.pop %v2900
        %v2902 = vsel %vm1481, %v2899, 0.0
        %2903 = vadd.xlane.f32.xlu0 %v2902
        %v2904 = vpop.xlane.xlu0 %2903
        %v2905 = vsel %vm1481, %v2901, 0.0
        %2906 = vadd.xlane.f32.xlu0 %v2905
        %v2907 = vpop.xlane.xlu0 %2906
        %v2908 = vrcp.pop %v2904
        %v2909 = vrcp.pop %v2907
        %v2910 = vmul.f32 %v2899, %v2908
        %v2911 = vmul.f32 %v2901, %v2909
        %v2912 = vpack.c.bf16 %v2911, %v2910
        %v2914 = vsel %vm1481, %v2912, 0
        %2916 = vmatprep.subr.bf16.mxu0 0
        %2917 = vmatpush1.bf16.msra.mxu0 %v2802
        %2918 = vmatprep.subr.bf16.mxu0 0
        %2919 = vmatpush1.bf16.msra.mxu0 0
        %2920 = vmatprep.subr.bf16.mxu0 0
        %2921 = vmatpush1.bf16.msra.mxu0 0
        %2922 = vmatprep.subr.bf16.mxu0 0
        %2923 = vmatpush1.bf16.msra.mxu0 0
        %2924 = vmatprep.subr.bf16.mxu0 0
        %2925 = vmatpush1.bf16.msra.mxu0 0
        %2926 = vmatprep.subr.bf16.mxu0 0
        %2927 = vmatpush1.bf16.msra.mxu0 0
        %2928 = vmatprep.subr.bf16.mxu0 0
        %2929 = vmatpush1.bf16.msra.mxu0 0
        %2930 = vmatprep.subr.bf16.mxu0 0
        %2931 = vmatpush1.bf16.msra.mxu0 0
        %2932 = vmatprep.subr.bf16.mxu0 0
        %2933 = vmatpush1.bf16.msra.mxu0 0
        %2934 = vmatprep.subr.bf16.mxu0 0
        %2935 = vmatpush1.bf16.msra.mxu0 0
        %2936 = vmatprep.subr.bf16.mxu0 0
        %2937 = vmatpush1.bf16.msra.mxu0 0
        %2938 = vmatprep.subr.bf16.mxu0 0
        %2939 = vmatpush1.bf16.msra.mxu0 0
        %2940 = vmatprep.subr.bf16.mxu0 0
        %2941 = vmatpush1.bf16.msra.mxu0 0
        %2942 = vmatprep.subr.bf16.mxu0 0
        %2943 = vmatpush1.bf16.msra.mxu0 0
        %2944 = vmatprep.subr.bf16.mxu0 0
        %2945 = vmatpush1.bf16.msra.mxu0 0
        %2946 = vmatprep.subr.bf16.mxu0 0
        %2947 = vmatpush1.bf16.msra.mxu0 0
        %2948 = vmatprep.mubr.bf16.mxu0 0
        %2949 = vmatmul.mubr.bf16.gmra.mrb[0].mxu0 %v2914
        %v2950 = vpop.f32.mrb[0].mxu0
        %v2951 = vadd.f32 0.0, %v2950
        %v2952 = vpop.f32.mrb[0].mxu0
        %v2953 = vpop.f32.mrb[0].mxu0
        %v2954 = vadd.f32 0.0, %v2953
        %v2955 = vpop.f32.mrb[0].mxu0
        %2956 = vdwg.mxu0
        %2957 = vrot.lane.b32.xlu0 %v2800, 120
        %v2958 = vpop.permute.xlu0 %2957
        %2959 = vrot.lane.b32.xlu0 %v2801, 120
        %v2960 = vpop.permute.xlu0 %2959
        %2961 = vrot.lane.b32.xlu0 %v2680, 120
        %v2962 = vpop.permute.xlu0 %2961
        %2963 = vrot.lane.b32.xlu0 %v2683, 120
        %v2964 = vpop.permute.xlu0 %2963
        %v2965 = vsel %vm1393, %v2958, 0
        %v2967 = vsel %vm1393, %v2960, 0
        %v2969 = vsel %vm1393, %v2962, 0
        %v2971 = vsel %vm1393, %v2964, 0
        %2973 = vmatprep.subr.mxu0 0.0
        %2974 = vmatpush1.xpose.msra.mxu0 %v2969
        %2975 = vmatprep.subr.mxu0 0.0
        %2976 = vmatpush1.xpose.msra.mxu0 %v2971
        %2977 = vmatprep.subr.mxu0 0.0
        %2978 = vmatpush1.xpose.msra.mxu0 0.0
        %2979 = vmatprep.subr.mxu0 0.0
        %2980 = vmatpush1.xpose.msra.mxu0 0.0
        %2981 = vmatprep.subr.mxu0 0.0
        %2982 = vmatpush1.xpose.msra.mxu0 0.0
        %2983 = vmatprep.subr.mxu0 0.0
        %2984 = vmatpush1.xpose.msra.mxu0 0.0
        %2985 = vmatprep.subr.mxu0 0.0
        %2986 = vmatpush1.xpose.msra.mxu0 0.0
        %2987 = vmatprep.subr.mxu0 0.0
        %2988 = vmatpush1.xpose.msra.mxu0 0.0
        %2989 = vmatprep.subr.mxu0 0.0
        %2990 = vmatpush1.xpose.msra.mxu0 0.0
        %2991 = vmatprep.subr.mxu0 0.0
        %2992 = vmatpush1.xpose.msra.mxu0 0.0
        %2993 = vmatprep.subr.mxu0 0.0
        %2994 = vmatpush1.xpose.msra.mxu0 0.0
        %2995 = vmatprep.subr.mxu0 0.0
        %2996 = vmatpush1.xpose.msra.mxu0 0.0
        %2997 = vmatprep.subr.mxu0 0.0
        %2998 = vmatpush1.xpose.msra.mxu0 0.0
        %2999 = vmatprep.subr.mxu0 0.0
        %3000 = vmatpush1.xpose.msra.mxu0 0.0
        %3001 = vmatprep.subr.mxu0 0.0
        %3002 = vmatpush1.xpose.msra.mxu0 0.0
        %3003 = vmatprep.subr.mxu0 0.0
        %3004 = vmatpush1.xpose.msra.mxu0 0.0
        %3005 = vmatprep.subr.mxu0 0.0
        %3006 = vmatpush1.xpose.msra.mxu0 0.0
        %3007 = vmatprep.subr.mxu0 0.0
        %3008 = vmatpush1.xpose.msra.mxu0 0.0
        %3009 = vmatprep.subr.mxu0 0.0
        %3010 = vmatpush1.xpose.msra.mxu0 0.0
        %3011 = vmatprep.subr.mxu0 0.0
        %3012 = vmatpush1.xpose.msra.mxu0 0.0
        %3013 = vmatprep.subr.mxu0 0.0
        %3014 = vmatpush1.xpose.msra.mxu0 0.0
        %3015 = vmatprep.subr.mxu0 0.0
        %3016 = vmatpush1.xpose.msra.mxu0 0.0
        %3017 = vmatprep.subr.mxu0 0.0
        %3018 = vmatpush1.xpose.msra.mxu0 0.0
        %3019 = vmatprep.subr.mxu0 0.0
        %3020 = vmatpush1.xpose.msra.mxu0 0.0
        %3021 = vmatprep.subr.mxu0 0.0
        %3022 = vmatpush1.xpose.msra.mxu0 0.0
        %3023 = vmatprep.subr.mxu0 0.0
        %3024 = vmatpush1.xpose.msra.mxu0 0.0
        %3025 = vmatprep.subr.mxu0 0.0
        %3026 = vmatpush1.xpose.msra.mxu0 0.0
        %3027 = vmatprep.subr.mxu0 0.0
        %3028 = vmatpush1.xpose.msra.mxu0 0.0
        %3029 = vmatprep.subr.mxu0 0.0
        %3030 = vmatpush1.xpose.msra.mxu0 0.0
        %3031 = vmatprep.subr.mxu0 0.0
        %3032 = vmatpush1.xpose.msra.mxu0 0.0
        %3033 = vmatprep.subr.mxu0 0.0
        %3034 = vmatpush1.xpose.msra.mxu0 0.0
        %3035 = vmatprep.subr.mxu0 0.0
        %3036 = vmatpush1.xpose.msra.mxu0 0.0
        %3037 = vmatprep.mubr.f32.mxu0 0.0
        %3038 = vmatmul.mubr.f32.gmra.mrb[0].mxu0 %v2965
        %v3039 = vpop.f32.mrb[0].mxu0
        %v3040 = vadd.f32 %v1051, %v3039
        %v3041 = vpop.f32.mrb[0].mxu0
        %3042 = vmatprep.mubr.f32.mxu0 0.0
        %3043 = vmatmul.mubr.f32.gmra.mrb[0].mxu0 %v2967
        %v3044 = vpop.f32.mrb[0].mxu0
        %v3045 = vadd.f32 %v1052, %v3044
        %v3046 = vpop.f32.mrb[0].mxu0
        %3047 = vdwg.mxu0
        %v3048 = vsel %vm1481, %v3040, -inf
        %3049 = vmax.xlane.f32.xlu0 %v3048
        %v3050 = vpop.xlane.xlu0 %3049
        %v3051 = vsel %vm1481, %v3045, -inf
        %3052 = vmax.xlane.f32.xlu0 %v3051
        %v3053 = vpop.xlane.xlu0 %3052
        %v3054 = vsub.f32 %v3040, %v3050
        %v3055 = vsub.f32 %v3045, %v3053
        %v3056 = vmul.f32 %v3054, 1.442695
        %v3057 = vpow.pop %v3056
        %v3058 = vmul.f32 %v3055, 1.442695
        %v3059 = vpow.pop %v3058
        %v3060 = vsel %vm1481, %v3057, 0.0
        %3061 = vadd.xlane.f32.xlu0 %v3060
        %v3062 = vpop.xlane.xlu0 %3061
        %v3063 = vsel %vm1481, %v3059, 0.0
        %3064 = vadd.xlane.f32.xlu0 %v3063
        %v3065 = vpop.xlane.xlu0 %3064
        %v3066 = vrcp.pop %v3062
        %v3067 = vrcp.pop %v3065
        %v3068 = vmul.f32 %v3057, %v3066
        %v3069 = vmul.f32 %v3059, %v3067
        %v3070 = vpack.c.bf16 %v3069, %v3068
        %3072 = vrot.lane.b32.xlu0 %v2802, 120
        %v3073 = vpop.permute.xlu0 %3072
        %v3076 = vsel %vm1481, %v3070, 0
        %3078 = vmatprep.subr.bf16.mxu0 0
        %3079 = vmatpush1.bf16.msra.mxu0 %v3073
        %3080 = vmatprep.subr.bf16.mxu0 0
        %3081 = vmatpush1.bf16.msra.mxu0 0
        %3082 = vmatprep.subr.bf16.mxu0 0
        %3083 = vmatpush1.bf16.msra.mxu0 0
        %3084 = vmatprep.subr.bf16.mxu0 0
        %3085 = vmatpush1.bf16.msra.mxu0 0
        %3086 = vmatprep.subr.bf16.mxu0 0
        %3087 = vmatpush1.bf16.msra.mxu0 0
        %3088 = vmatprep.subr.bf16.mxu0 0
        %3089 = vmatpush1.bf16.msra.mxu0 0
        %3090 = vmatprep.subr.bf16.mxu0 0
        %3091 = vmatpush1.bf16.msra.mxu0 0
        %3092 = vmatprep.subr.bf16.mxu0 0
        %3093 = vmatpush1.bf16.msra.mxu0 0
        %3094 = vmatprep.subr.bf16.mxu0 0
        %3095 = vmatpush1.bf16.msra.mxu0 0
        %3096 = vmatprep.subr.bf16.mxu0 0
        %3097 = vmatpush1.bf16.msra.mxu0 0
        %3098 = vmatprep.subr.bf16.mxu0 0
        %3099 = vmatpush1.bf16.msra.mxu0 0
        %3100 = vmatprep.subr.bf16.mxu0 0
        %3101 = vmatpush1.bf16.msra.mxu0 0
        %3102 = vmatprep.subr.bf16.mxu0 0
        %3103 = vmatpush1.bf16.msra.mxu0 0
        %3104 = vmatprep.subr.bf16.mxu0 0
        %3105 = vmatpush1.bf16.msra.mxu0 0
        %3106 = vmatprep.subr.bf16.mxu0 0
        %3107 = vmatpush1.bf16.msra.mxu0 0
        %3108 = vmatprep.subr.bf16.mxu0 0
        %3109 = vmatpush1.bf16.msra.mxu0 0
        %3110 = vmatprep.mubr.bf16.mxu0 0
        %3111 = vmatmul.mubr.bf16.gmra.mrb[0].mxu0 %v3076
        %v3112 = vpop.f32.mrb[0].mxu0
        %v3113 = vadd.f32 0.0, %v3112
        %v3114 = vpop.f32.mrb[0].mxu0
        %v3115 = vpop.f32.mrb[0].mxu0
        %v3116 = vadd.f32 0.0, %v3115
        %v3117 = vpop.f32.mrb[0].mxu0
        %3118 = vdwg.mxu0
        %3119 = vrot.lane.b32.xlu0 %v2800, 112
        %v3120 = vpop.permute.xlu0 %3119
        %3121 = vrot.lane.b32.xlu0 %v2801, 112
        %v3122 = vpop.permute.xlu0 %3121
        %3123 = vrot.lane.b32.xlu0 %v2680, 112
        %v3124 = vpop.permute.xlu0 %3123
        %3125 = vrot.lane.b32.xlu0 %v2683, 112
        %v3126 = vpop.permute.xlu0 %3125
        %v3127 = vsel %vm1393, %v3120, 0
        %v3129 = vsel %vm1393, %v3122, 0
        %v3131 = vsel %vm1393, %v3124, 0
        %v3133 = vsel %vm1393, %v3126, 0
        %3135 = vmatprep.subr.mxu0 0.0
        %3136 = vmatpush1.xpose.msra.mxu0 %v3131
        %3137 = vmatprep.subr.mxu0 0.0
        %3138 = vmatpush1.xpose.msra.mxu0 %v3133
        %3139 = vmatprep.subr.mxu0 0.0
        %3140 = vmatpush1.xpose.msra.mxu0 0.0
        %3141 = vmatprep.subr.mxu0 0.0
        %3142 = vmatpush1.xpose.msra.mxu0 0.0
        %3143 = vmatprep.subr.mxu0 0.0
        %3144 = vmatpush1.xpose.msra.mxu0 0.0
        %3145 = vmatprep.subr.mxu0 0.0
        %3146 = vmatpush1.xpose.msra.mxu0 0.0
        %3147 = vmatprep.subr.mxu0 0.0
        %3148 = vmatpush1.xpose.msra.mxu0 0.0
        %3149 = vmatprep.subr.mxu0 0.0
        %3150 = vmatpush1.xpose.msra.mxu0 0.0
        %3151 = vmatprep.subr.mxu0 0.0
        %3152 = vmatpush1.xpose.msra.mxu0 0.0
        %3153 = vmatprep.subr.mxu0 0.0
        %3154 = vmatpush1.xpose.msra.mxu0 0.0
        %3155 = vmatprep.subr.mxu0 0.0
        %3156 = vmatpush1.xpose.msra.mxu0 0.0
        %3157 = vmatprep.subr.mxu0 0.0
        %3158 = vmatpush1.xpose.msra.mxu0 0.0
        %3159 = vmatprep.subr.mxu0 0.0
        %3160 = vmatpush1.xpose.msra.mxu0 0.0
        %3161 = vmatprep.subr.mxu0 0.0
        %3162 = vmatpush1.xpose.msra.mxu0 0.0
        %3163 = vmatprep.subr.mxu0 0.0
        %3164 = vmatpush1.xpose.msra.mxu0 0.0
        %3165 = vmatprep.subr.mxu0 0.0
        %3166 = vmatpush1.xpose.msra.mxu0 0.0
        %3167 = vmatprep.subr.mxu0 0.0
        %3168 = vmatpush1.xpose.msra.mxu0 0.0
        %3169 = vmatprep.subr.mxu0 0.0
        %3170 = vmatpush1.xpose.msra.mxu0 0.0
        %3171 = vmatprep.subr.mxu0 0.0
        %3172 = vmatpush1.xpose.msra.mxu0 0.0
        %3173 = vmatprep.subr.mxu0 0.0
        %3174 = vmatpush1.xpose.msra.mxu0 0.0
        %3175 = vmatprep.subr.mxu0 0.0
        %3176 = vmatpush1.xpose.msra.mxu0 0.0
        %3177 = vmatprep.subr.mxu0 0.0
        %3178 = vmatpush1.xpose.msra.mxu0 0.0
        %3179 = vmatprep.subr.mxu0 0.0
        %3180 = vmatpush1.xpose.msra.mxu0 0.0
        %3181 = vmatprep.subr.mxu0 0.0
        %3182 = vmatpush1.xpose.msra.mxu0 0.0
        %3183 = vmatprep.subr.mxu0 0.0
        %3184 = vmatpush1.xpose.msra.mxu0 0.0
        %3185 = vmatprep.subr.mxu0 0.0
        %3186 = vmatpush1.xpose.msra.mxu0 0.0
        %3187 = vmatprep.subr.mxu0 0.0
        %3188 = vmatpush1.xpose.msra.mxu0 0.0
        %3189 = vmatprep.subr.mxu0 0.0
        %3190 = vmatpush1.xpose.msra.mxu0 0.0
        %3191 = vmatprep.subr.mxu0 0.0
        %3192 = vmatpush1.xpose.msra.mxu0 0.0
        %3193 = vmatprep.subr.mxu0 0.0
        %3194 = vmatpush1.xpose.msra.mxu0 0.0
        %3195 = vmatprep.subr.mxu0 0.0
        %3196 = vmatpush1.xpose.msra.mxu0 0.0
        %3197 = vmatprep.subr.mxu0 0.0
        %3198 = vmatpush1.xpose.msra.mxu0 0.0
        %3199 = vmatprep.mubr.f32.mxu0 0.0
        %3200 = vmatmul.mubr.f32.gmra.mrb[0].mxu0 %v3127
        %v3201 = vpop.f32.mrb[0].mxu0
        %v3202 = vadd.f32 %v1051, %v3201
        %v3203 = vpop.f32.mrb[0].mxu0
        %3204 = vmatprep.mubr.f32.mxu0 0.0
        %3205 = vmatmul.mubr.f32.gmra.mrb[0].mxu0 %v3129
        %v3206 = vpop.f32.mrb[0].mxu0
        %v3207 = vadd.f32 %v1052, %v3206
        %v3208 = vpop.f32.mrb[0].mxu0
        %3209 = vdwg.mxu0
        %v3210 = vsel %vm1481, %v3202, -inf
        %3211 = vmax.xlane.f32.xlu0 %v3210
        %v3212 = vpop.xlane.xlu0 %3211
        %v3213 = vsel %vm1481, %v3207, -inf
        %3214 = vmax.xlane.f32.xlu0 %v3213
        %v3215 = vpop.xlane.xlu0 %3214
        %v3216 = vsub.f32 %v3202, %v3212
        %v3217 = vsub.f32 %v3207, %v3215
        %v3218 = vmul.f32 %v3216, 1.442695
        %v3219 = vpow.pop %v3218
        %v3220 = vmul.f32 %v3217, 1.442695
        %v3221 = vpow.pop %v3220
        %v3222 = vsel %vm1481, %v3219, 0.0
        %3223 = vadd.xlane.f32.xlu0 %v3222
        %v3224 = vpop.xlane.xlu0 %3223
        %v3225 = vsel %vm1481, %v3221, 0.0
        %3226 = vadd.xlane.f32.xlu0 %v3225
        %v3227 = vpop.xlane.xlu0 %3226
        %v3228 = vrcp.pop %v3224
        %v3229 = vrcp.pop %v3227
        %v3230 = vmul.f32 %v3219, %v3228
        %v3231 = vmul.f32 %v3221, %v3229
        %v3232 = vpack.c.bf16 %v3231, %v3230
        %3233 = vrot.lane.b32.xlu0 %v2802, 112
        %v3234 = vpop.permute.xlu0 %3233
        %v3237 = vsel %vm1481, %v3232, 0
        %3239 = vmatprep.subr.bf16.mxu0 0
        %3240 = vmatpush1.bf16.msra.mxu0 %v3234
        %3241 = vmatprep.subr.bf16.mxu0 0
        %3242 = vmatpush1.bf16.msra.mxu0 0
        %3243 = vmatprep.subr.bf16.mxu0 0
        %3244 = vmatpush1.bf16.msra.mxu0 0
        %3245 = vmatprep.subr.bf16.mxu0 0
        %3246 = vmatpush1.bf16.msra.mxu0 0
        %3247 = vmatprep.subr.bf16.mxu0 0
        %3248 = vmatpush1.bf16.msra.mxu0 0
        %3249 = vmatprep.subr.bf16.mxu0 0
        %3250 = vmatpush1.bf16.msra.mxu0 0
        %3251 = vmatprep.subr.bf16.mxu0 0
        %3252 = vmatpush1.bf16.msra.mxu0 0
        %3253 = vmatprep.subr.bf16.mxu0 0
        %3254 = vmatpush1.bf16.msra.mxu0 0
        %3255 = vmatprep.subr.bf16.mxu0 0
        %3256 = vmatpush1.bf16.msra.mxu0 0
        %3257 = vmatprep.subr.bf16.mxu0 0
        %3258 = vmatpush1.bf16.msra.mxu0 0
        %3259 = vmatprep.subr.bf16.mxu0 0
        %3260 = vmatpush1.bf16.msra.mxu0 0
        %3261 = vmatprep.subr.bf16.mxu0 0
        %3262 = vmatpush1.bf16.msra.mxu0 0
        %3263 = vmatprep.subr.bf16.mxu0 0
        %3264 = vmatpush1.bf16.msra.mxu0 0
        %3265 = vmatprep.subr.bf16.mxu0 0
        %3266 = vmatpush1.bf16.msra.mxu0 0
        %3267 = vmatprep.subr.bf16.mxu0 0
        %3268 = vmatpush1.bf16.msra.mxu0 0
        %3269 = vmatprep.subr.bf16.mxu0 0
        %3270 = vmatpush1.bf16.msra.mxu0 0
        %3271 = vmatprep.mubr.bf16.mxu0 0
        %3272 = vmatmul.mubr.bf16.gmra.mrb[0].mxu0 %v3237
        %v3273 = vpop.f32.mrb[0].mxu0
        %v3274 = vadd.f32 0.0, %v3273
        %v3275 = vpop.f32.mrb[0].mxu0
        %v3276 = vpop.f32.mrb[0].mxu0
        %v3277 = vadd.f32 0.0, %v3276
        %v3278 = vpop.f32.mrb[0].mxu0
        %3279 = vdwg.mxu0
        %3280 = vrot.lane.b32.xlu0 %v2800, 104
        %v3281 = vpop.permute.xlu0 %3280
        %3282 = vrot.lane.b32.xlu0 %v2801, 104
        %v3283 = vpop.permute.xlu0 %3282
        %3284 = vrot.lane.b32.xlu0 %v2680, 104
        %v3285 = vpop.permute.xlu0 %3284
        %3286 = vrot.lane.b32.xlu0 %v2683, 104
        %v3287 = vpop.permute.xlu0 %3286
        %v3288 = vsel %vm1393, %v3281, 0
        %v3290 = vsel %vm1393, %v3283, 0
        %v3292 = vsel %vm1393, %v3285, 0
        %v3294 = vsel %vm1393, %v3287, 0
        %3296 = vmatprep.subr.mxu0 0.0
        %3297 = vmatpush1.xpose.msra.mxu0 %v3292
        %3298 = vmatprep.subr.mxu0 0.0
        %3299 = vmatpush1.xpose.msra.mxu0 %v3294
        %3300 = vmatprep.subr.mxu0 0.0
        %3301 = vmatpush1.xpose.msra.mxu0 0.0
        %3302 = vmatprep.subr.mxu0 0.0
        %3303 = vmatpush1.xpose.msra.mxu0 0.0
        %3304 = vmatprep.subr.mxu0 0.0
        %3305 = vmatpush1.xpose.msra.mxu0 0.0
        %3306 = vmatprep.subr.mxu0 0.0
        %3307 = vmatpush1.xpose.msra.mxu0 0.0
        %3308 = vmatprep.subr.mxu0 0.0
        %3309 = vmatpush1.xpose.msra.mxu0 0.0
        %3310 = vmatprep.subr.mxu0 0.0
        %3311 = vmatpush1.xpose.msra.mxu0 0.0
        %3312 = vmatprep.subr.mxu0 0.0
        %3313 = vmatpush1.xpose.msra.mxu0 0.0
        %3314 = vmatprep.subr.mxu0 0.0
        %3315 = vmatpush1.xpose.msra.mxu0 0.0
        %3316 = vmatprep.subr.mxu0 0.0
        %3317 = vmatpush1.xpose.msra.mxu0 0.0
        %3318 = vmatprep.subr.mxu0 0.0
        %3319 = vmatpush1.xpose.msra.mxu0 0.0
        %3320 = vmatprep.subr.mxu0 0.0
        %3321 = vmatpush1.xpose.msra.mxu0 0.0
        %3322 = vmatprep.subr.mxu0 0.0
        %3323 = vmatpush1.xpose.msra.mxu0 0.0
        %3324 = vmatprep.subr.mxu0 0.0
        %3325 = vmatpush1.xpose.msra.mxu0 0.0
        %3326 = vmatprep.subr.mxu0 0.0
        %3327 = vmatpush1.xpose.msra.mxu0 0.0
        %3328 = vmatprep.subr.mxu0 0.0
        %3329 = vmatpush1.xpose.msra.mxu0 0.0
        %3330 = vmatprep.subr.mxu0 0.0
        %3331 = vmatpush1.xpose.msra.mxu0 0.0
        %3332 = vmatprep.subr.mxu0 0.0
        %3333 = vmatpush1.xpose.msra.mxu0 0.0
        %3334 = vmatprep.subr.mxu0 0.0
        %3335 = vmatpush1.xpose.msra.mxu0 0.0
        %3336 = vmatprep.subr.mxu0 0.0
        %3337 = vmatpush1.xpose.msra.mxu0 0.0
        %3338 = vmatprep.subr.mxu0 0.0
        %3339 = vmatpush1.xpose.msra.mxu0 0.0
        %3340 = vmatprep.subr.mxu0 0.0
        %3341 = vmatpush1.xpose.msra.mxu0 0.0
        %3342 = vmatprep.subr.mxu0 0.0
        %3343 = vmatpush1.xpose.msra.mxu0 0.0
        %3344 = vmatprep.subr.mxu0 0.0
        %3345 = vmatpush1.xpose.msra.mxu0 0.0
        %3346 = vmatprep.subr.mxu0 0.0
        %3347 = vmatpush1.xpose.msra.mxu0 0.0
        %3348 = vmatprep.subr.mxu0 0.0
        %3349 = vmatpush1.xpose.msra.mxu0 0.0
        %3350 = vmatprep.subr.mxu0 0.0
        %3351 = vmatpush1.xpose.msra.mxu0 0.0
        %3352 = vmatprep.subr.mxu0 0.0
        %3353 = vmatpush1.xpose.msra.mxu0 0.0
        %3354 = vmatprep.subr.mxu0 0.0
        %3355 = vmatpush1.xpose.msra.mxu0 0.0
        %3356 = vmatprep.subr.mxu0 0.0
        %3357 = vmatpush1.xpose.msra.mxu0 0.0
        %3358 = vmatprep.subr.mxu0 0.0
        %3359 = vmatpush1.xpose.msra.mxu0 0.0
        %3360 = vmatprep.mubr.f32.mxu0 0.0
        %3361 = vmatmul.mubr.f32.gmra.mrb[0].mxu0 %v3288
        %v3362 = vpop.f32.mrb[0].mxu0
        %v3363 = vadd.f32 %v1051, %v3362
        %v3364 = vpop.f32.mrb[0].mxu0
        %3365 = vmatprep.mubr.f32.mxu0 0.0
        %3366 = vmatmul.mubr.f32.gmra.mrb[0].mxu0 %v3290
        %v3367 = vpop.f32.mrb[0].mxu0
        %v3368 = vadd.f32 %v1052, %v3367
        %v3369 = vpop.f32.mrb[0].mxu0
        %3370 = vdwg.mxu0
        %v3371 = vsel %vm1481, %v3363, -inf
        %3372 = vmax.xlane.f32.xlu0 %v3371
        %v3373 = vpop.xlane.xlu0 %3372
        %v3374 = vsel %vm1481, %v3368, -inf
        %3375 = vmax.xlane.f32.xlu0 %v3374
        %v3376 = vpop.xlane.xlu0 %3375
        %v3377 = vsub.f32 %v3363, %v3373
        %v3378 = vsub.f32 %v3368, %v3376
        %v3379 = vmul.f32 %v3377, 1.442695
        %v3380 = vpow.pop %v3379
        %v3381 = vmul.f32 %v3378, 1.442695
        %v3382 = vpow.pop %v3381
        %v3383 = vsel %vm1481, %v3380, 0.0
        %3384 = vadd.xlane.f32.xlu0 %v3383
        %v3385 = vpop.xlane.xlu0 %3384
        %v3386 = vsel %vm1481, %v3382, 0.0
        %3387 = vadd.xlane.f32.xlu0 %v3386
        %v3388 = vpop.xlane.xlu0 %3387
        %v3389 = vrcp.pop %v3385
        %v3390 = vrcp.pop %v3388
        %v3391 = vmul.f32 %v3380, %v3389
        %v3392 = vmul.f32 %v3382, %v3390
        %v3393 = vpack.c.bf16 %v3392, %v3391
        %3394 = vrot.lane.b32.xlu0 %v2802, 104
        %v3395 = vpop.permute.xlu0 %3394
        %v3398 = vsel %vm1481, %v3393, 0
        %3400 = vmatprep.subr.bf16.mxu0 0
        %3401 = vmatpush1.bf16.msra.mxu0 %v3395
        %3402 = vmatprep.subr.bf16.mxu0 0
        %3403 = vmatpush1.bf16.msra.mxu0 0
        %3404 = vmatprep.subr.bf16.mxu0 0
        %3405 = vmatpush1.bf16.msra.mxu0 0
        %3406 = vmatprep.subr.bf16.mxu0 0
        %3407 = vmatpush1.bf16.msra.mxu0 0
        %3408 = vmatprep.subr.bf16.mxu0 0
        %3409 = vmatpush1.bf16.msra.mxu0 0
        %3410 = vmatprep.subr.bf16.mxu0 0
        %3411 = vmatpush1.bf16.msra.mxu0 0
        %3412 = vmatprep.subr.bf16.mxu0 0
        %3413 = vmatpush1.bf16.msra.mxu0 0
        %3414 = vmatprep.subr.bf16.mxu0 0
        %3415 = vmatpush1.bf16.msra.mxu0 0
        %3416 = vmatprep.subr.bf16.mxu0 0
        %3417 = vmatpush1.bf16.msra.mxu0 0
        %3418 = vmatprep.subr.bf16.mxu0 0
        %3419 = vmatpush1.bf16.msra.mxu0 0
        %3420 = vmatprep.subr.bf16.mxu0 0
        %3421 = vmatpush1.bf16.msra.mxu0 0
        %3422 = vmatprep.subr.bf16.mxu0 0
        %3423 = vmatpush1.bf16.msra.mxu0 0
        %3424 = vmatprep.subr.bf16.mxu0 0
        %3425 = vmatpush1.bf16.msra.mxu0 0
        %3426 = vmatprep.subr.bf16.mxu0 0
        %3427 = vmatpush1.bf16.msra.mxu0 0
        %3428 = vmatprep.subr.bf16.mxu0 0
        %3429 = vmatpush1.bf16.msra.mxu0 0
        %3430 = vmatprep.subr.bf16.mxu0 0
        %3431 = vmatpush1.bf16.msra.mxu0 0
        %3432 = vmatprep.mubr.bf16.mxu0 0
        %3433 = vmatmul.mubr.bf16.gmra.mrb[0].mxu0 %v3398
        %v3434 = vpop.f32.mrb[0].mxu0
        %v3435 = vadd.f32 0.0, %v3434
        %v3436 = vpop.f32.mrb[0].mxu0
        %v3437 = vpop.f32.mrb[0].mxu0
        %v3438 = vadd.f32 0.0, %v3437
        %v3439 = vpop.f32.mrb[0].mxu0
        %3440 = vdwg.mxu0
        %3443 = vrot.lane.b32.xlu0 %v3113, 8
        %v3444 = vpop.permute.xlu0 %3443
        %3445 = vrot.lane.b32.xlu0 %v3116, 8
        %v3446 = vpop.permute.xlu0 %3445
        %3451 = vrot.lane.b32.xlu0 %v3274, 16
        %v3452 = vpop.permute.xlu0 %3451
        %3453 = vrot.lane.b32.xlu0 %v3277, 16
        %v3454 = vpop.permute.xlu0 %3453
        %3459 = vrot.lane.b32.xlu0 %v3435, 24
        %v3460 = vpop.permute.xlu0 %3459
        %3461 = vrot.lane.b32.xlu0 %v3438, 24
        %v3462 = vpop.permute.xlu0 %3461
        %v3465 = vsel %vm1393, %v2951, %v3444
        %v3466 = vsel %vm1393, %v2954, %v3446
        %v3467 = vsel %vm1481, %v3465, %v3452
        %v3468 = vsel %vm1481, %v3466, %v3454
        %v3469 = vsel %vm2061, %v3467, %v3460
        %v3470 = vsel %vm2061, %v3468, %v3462
        %v3471 = vpack.c.bf16 %v3470, %v3469
        %s3472 = scalar_lea.vmem [#allocation14], 16
        %v3473 = vld [vmem:[%s3472] sm:$0xf]
        %v3474 = vld [vmem:[%s3472 + $0x4] sm:$0xf]
        %v3475 = vld [vmem:[%s3472 + $0x8] sm:$0xf]
        %v3476 = vld [vmem:[%s3472 + $0xc] sm:$0xf]
        %s3477 = scalar_lea.vmem %s12, 1
        %v3478 = vld [vmem:[%s3477] sm:$0x1]
        %v3480 = vlaneseq
        %v3481 = vshrl.u32 %v3480, 7
        %v3482 = vsub.s32 0, %v3481
        %v3483 = vrot.slane %v3478, %v3482
        %v3489 = vunpack.c.l.b16 %v3473
        %v3490 = vunpack.c.l.b16 %v3474
        %v3491 = vunpack.c.l.b16 %v3475
        %v3492 = vunpack.c.l.b16 %v3476
        %v3493 = vpack.c.b16 %v3490, %v3489
        %v3494 = vpack.c.b16 %v3492, %v3491
        %v3498 = vsel %vm2088, %v3471, 0
        %3500 = vmatprep.subr.bf16.mxu0 0
        %3501 = vmatpush1.bf16.msra.mxu0 %v3493
        %3502 = vmatprep.subr.bf16.mxu0 0
        %3503 = vmatpush1.bf16.msra.mxu0 %v3494
        %3504 = vmatprep.subr.bf16.mxu0 0
        %3505 = vmatpush1.bf16.msra.mxu0 0
        %3506 = vmatprep.subr.bf16.mxu0 0
        %3507 = vmatpush1.bf16.msra.mxu0 0
        %3508 = vmatprep.subr.bf16.mxu0 0
        %3509 = vmatpush1.bf16.msra.mxu0 0
        %3510 = vmatprep.subr.bf16.mxu0 0
        %3511 = vmatpush1.bf16.msra.mxu0 0
        %3512 = vmatprep.subr.bf16.mxu0 0
        %3513 = vmatpush1.bf16.msra.mxu0 0
        %3514 = vmatprep.subr.bf16.mxu0 0
        %3515 = vmatpush1.bf16.msra.mxu0 0
        %3516 = vmatprep.subr.bf16.mxu0 0
        %3517 = vmatpush1.bf16.msra.mxu0 0
        %3518 = vmatprep.subr.bf16.mxu0 0
        %3519 = vmatpush1.bf16.msra.mxu0 0
        %3520 = vmatprep.subr.bf16.mxu0 0
        %3521 = vmatpush1.bf16.msra.mxu0 0
        %3522 = vmatprep.subr.bf16.mxu0 0
        %3523 = vmatpush1.bf16.msra.mxu0 0
        %3524 = vmatprep.subr.bf16.mxu0 0
        %3525 = vmatpush1.bf16.msra.mxu0 0
        %3526 = vmatprep.subr.bf16.mxu0 0
        %3527 = vmatpush1.bf16.msra.mxu0 0
        %3528 = vmatprep.subr.bf16.mxu0 0
        %3529 = vmatpush1.bf16.msra.mxu0 0
        %3530 = vmatprep.subr.bf16.mxu0 0
        %3531 = vmatpush1.bf16.msra.mxu0 0
        %3532 = vmatprep.mubr.bf16.mxu0 0
        %3533 = vmatmul.mubr.bf16.gmra.mrb[0].mxu0 %v3498
        %v3534 = vpop.f32.mrb[0].mxu0
        %v3535 = vadd.f32 %v3483, %v3534
        %v3536 = vpop.f32.mrb[0].mxu0
        %v3537 = vpop.f32.mrb[0].mxu0
        %v3538 = vadd.f32 %v3483, %v3537
        %v3539 = vpop.f32.mrb[0].mxu0
        %3540 = vdwg.mxu0
        %v3541 = vadd.f32 %v2455, %v3535
        %v3542 = vadd.f32 %v2456, %v3538
        %s3543 = scalar_lea.vmem %s13, 1
        %v3544 = vld [vmem:[%s3543] sm:$0x1]
        %s3545 = scalar_lea.vmem %s14, 1
        %v3546 = vld [vmem:[%s3545] sm:$0x1]
        %3547 = vadd.xlane.f32.xlu0 %v3541
        %v3548 = vpop.xlane.xlu0 %3547
        %3549 = vadd.xlane.f32.xlu0 %v3542
        %v3550 = vpop.xlane.xlu0 %3549
        %v3551 = vmul.f32 %v3548, 0.03125
        %v3552 = vmul.f32 %v3550, 0.03125
        %v3553 = vmul.f32 %v3541, %v3541
        %v3554 = vmul.f32 %v3542, %v3542
        %3555 = vadd.xlane.f32.xlu0 %v3553
        %v3556 = vpop.xlane.xlu0 %3555
        %3557 = vadd.xlane.f32.xlu0 %v3554
        %v3558 = vpop.xlane.xlu0 %3557
        %v3559 = vmul.f32 %v3556, 0.03125
        %v3560 = vmul.f32 %v3558, 0.03125
        %v3561 = vmul.f32 %v3551, %v3551
        %v3562 = vmul.f32 %v3552, %v3552
        %v3563 = vsub.f32 %v3559, %v3561
        %v3564 = vsub.f32 %v3560, %v3562
        %v3565 = vmax.f32 %v3563, 0.0
        %v3566 = vmax.f32 %v3564, 0.0
        %v3567 = vsub.f32 %v3541, %v3551
        %v3568 = vsub.f32 %v3542, %v3552
        %v3569 = vadd.f32 %v3565, 1e-05
        %v3570 = vadd.f32 %v3566, 1e-05
        %v3571 = vrsqrt.pop %v3569
        %v3572 = vrsqrt.pop %v3570
        %v3573 = vmul.f32 %v3567, %v3571
        %v3574 = vmul.f32 %v3568, %v3572
        %v3576 = vlaneseq
        %v3577 = vshrl.u32 %v3576, 7
        %v3578 = vsub.s32 0, %v3577
        %v3579 = vrot.slane %v3544, %v3578
        %v3581 = vmul.f32 %v3573, %v3579
        %v3582 = vmul.f32 %v3574, %v3579
        %v3584 = vlaneseq
        %v3585 = vshrl.u32 %v3584, 7
        %v3586 = vsub.s32 0, %v3585
        %v3587 = vrot.slane %v3546, %v3586
        %v3589 = vadd.f32 %v3581, %v3587
        %v3590 = vadd.f32 %v3582, %v3587
        %v3591 = vpack.c.bf16 %v3590, %v3589
        %s3592 = scalar_lea.vmem [#allocation16], 64
        %v3593 = vld [vmem:[%s3592] sm:$0xf]
        %v3594 = vld [vmem:[%s3592 + $0x4] sm:$0xf]
        %v3595 = vld [vmem:[%s3592 + $0x8] sm:$0xf]
        %v3596 = vld [vmem:[%s3592 + $0xc] sm:$0xf]
        %v3597 = vld [vmem:[%s3592 + $0x10] sm:$0xf]
        %v3598 = vld [vmem:[%s3592 + $0x14] sm:$0xf]
        %v3599 = vld [vmem:[%s3592 + $0x18] sm:$0xf]
        %v3600 = vld [vmem:[%s3592 + $0x1c] sm:$0xf]
        %v3601 = vld [vmem:[%s3592 + $0x20] sm:$0xf]
        %v3602 = vld [vmem:[%s3592 + $0x24] sm:$0xf]
        %v3603 = vld [vmem:[%s3592 + $0x28] sm:$0xf]
        %v3604 = vld [vmem:[%s3592 + $0x2c] sm:$0xf]
        %v3605 = vld [vmem:[%s3592 + $0x30] sm:$0xf]
        %v3606 = vld [vmem:[%s3592 + $0x34] sm:$0xf]
        %v3607 = vld [vmem:[%s3592 + $0x38] sm:$0xf]
        %v3608 = vld [vmem:[%s3592 + $0x3c] sm:$0xf]
        %s3609 = scalar_lea.vmem %s16, 1
        %v3610 = vld [vmem:[%s3609] sm:$0x1]
        %v3612 = vlaneseq
        %v3613 = vshrl.u32 %v3612, 7
        %v3614 = vsub.s32 0, %v3613
        %v3615 = vrot.slane %v3610, %v3614
        %v3633 = vunpack.c.l.b16 %v3593
        %v3634 = vunpack.c.l.b16 %v3594
        %v3635 = vunpack.c.l.b16 %v3595
        %v3636 = vunpack.c.l.b16 %v3596
        %v3637 = vunpack.c.l.b16 %v3597
        %v3638 = vunpack.c.l.b16 %v3598
        %v3639 = vunpack.c.l.b16 %v3599
        %v3640 = vunpack.c.l.b16 %v3600
        %v3641 = vunpack.c.l.b16 %v3601
        %v3642 = vunpack.c.l.b16 %v3602
        %v3643 = vunpack.c.l.b16 %v3603
        %v3644 = vunpack.c.l.b16 %v3604
        %v3645 = vunpack.c.l.b16 %v3605
        %v3646 = vunpack.c.l.b16 %v3606
        %v3647 = vunpack.c.l.b16 %v3607
        %v3648 = vunpack.c.l.b16 %v3608
        %v3649 = vpack.c.b16 %v3634, %v3633
        %v3650 = vpack.c.b16 %v3636, %v3635
        %v3651 = vpack.c.b16 %v3638, %v3637
        %v3652 = vpack.c.b16 %v3640, %v3639
        %v3653 = vpack.c.b16 %v3642, %v3641
        %v3654 = vpack.c.b16 %v3644, %v3643
        %v3655 = vpack.c.b16 %v3646, %v3645
        %v3656 = vpack.c.b16 %v3648, %v3647
        %3665 = vmatprep.subr.bf16.mxu0 0
        %3666 = vmatpush1.bf16.msra.mxu0 %v3649
        %3667 = vmatprep.subr.bf16.mxu0 0
        %3668 = vmatpush1.bf16.msra.mxu0 %v3650
        %3669 = vmatprep.subr.bf16.mxu0 0
        %3670 = vmatpush1.bf16.msra.mxu0 %v3651
        %3671 = vmatprep.subr.bf16.mxu0 0
        %3672 = vmatpush1.bf16.msra.mxu0 %v3652
        %3673 = vmatprep.subr.bf16.mxu0 0
        %3674 = vmatpush1.bf16.msra.mxu0 %v3653
        %3675 = vmatprep.subr.bf16.mxu0 0
        %3676 = vmatpush1.bf16.msra.mxu0 %v3654
        %3677 = vmatprep.subr.bf16.mxu0 0
        %3678 = vmatpush1.bf16.msra.mxu0 %v3655
        %3679 = vmatprep.subr.bf16.mxu0 0
        %3680 = vmatpush1.bf16.msra.mxu0 %v3656
        %3681 = vmatprep.subr.bf16.mxu0 0
        %3682 = vmatpush1.bf16.msra.mxu0 0
        %3683 = vmatprep.subr.bf16.mxu0 0
        %3684 = vmatpush1.bf16.msra.mxu0 0
        %3685 = vmatprep.subr.bf16.mxu0 0
        %3686 = vmatpush1.bf16.msra.mxu0 0
        %3687 = vmatprep.subr.bf16.mxu0 0
        %3688 = vmatpush1.bf16.msra.mxu0 0
        %3689 = vmatprep.subr.bf16.mxu0 0
        %3690 = vmatpush1.bf16.msra.mxu0 0
        %3691 = vmatprep.subr.bf16.mxu0 0
        %3692 = vmatpush1.bf16.msra.mxu0 0
        %3693 = vmatprep.subr.bf16.mxu0 0
        %3694 = vmatpush1.bf16.msra.mxu0 0
        %3695 = vmatprep.subr.bf16.mxu0 0
        %3696 = vmatpush1.bf16.msra.mxu0 0
        %3697 = vmatprep.mubr.bf16.mxu0 0
        %3698 = vmatmul.mubr.bf16.gmra.mrb[0].mxu0 %v3591
        %v3699 = vpop.f32.mrb[0].mxu0
        %v3700 = vadd.f32 %v3615, %v3699
        %v3701 = vpop.f32.mrb[0].mxu0
        %v3702 = vpop.f32.mrb[0].mxu0
        %v3703 = vadd.f32 %v3615, %v3702
        %v3704 = vpop.f32.mrb[0].mxu0
        %3705 = vdwg.mxu0
        %v3706 = vmax.f32 %v3700, 0.0
        %v3707 = vmax.f32 %v3703, 0.0
        %v3708 = vpack.c.bf16 %v3707, %v3706
        %s3709 = scalar_lea.vmem [#allocation17], 64
        %v3710 = vld [vmem:[%s3709] sm:$0xf]
        %v3711 = vld [vmem:[%s3709 + $0x4] sm:$0xf]
        %v3712 = vld [vmem:[%s3709 + $0x8] sm:$0xf]
        %v3713 = vld [vmem:[%s3709 + $0xc] sm:$0xf]
        %v3714 = vld [vmem:[%s3709 + $0x10] sm:$0xf]
        %v3715 = vld [vmem:[%s3709 + $0x14] sm:$0xf]
        %v3716 = vld [vmem:[%s3709 + $0x18] sm:$0xf]
        %v3717 = vld [vmem:[%s3709 + $0x1c] sm:$0xf]
        %v3718 = vld [vmem:[%s3709 + $0x20] sm:$0xf]
        %v3719 = vld [vmem:[%s3709 + $0x24] sm:$0xf]
        %v3720 = vld [vmem:[%s3709 + $0x28] sm:$0xf]
        %v3721 = vld [vmem:[%s3709 + $0x2c] sm:$0xf]
        %v3722 = vld [vmem:[%s3709 + $0x30] sm:$0xf]
        %v3723 = vld [vmem:[%s3709 + $0x34] sm:$0xf]
        %v3724 = vld [vmem:[%s3709 + $0x38] sm:$0xf]
        %v3725 = vld [vmem:[%s3709 + $0x3c] sm:$0xf]
        %s3726 = scalar_lea.vmem [#allocation19], 1
        %v3727 = vld [vmem:[%s3726] sm:$0x1]
        %v3729 = vlaneseq
        %v3730 = vshrl.u32 %v3729, 7
        %v3731 = vsub.s32 0, %v3730
        %v3732 = vrot.slane %v3727, %v3731
        %v3750 = vunpack.c.l.b16 %v3710
        %v3751 = vunpack.c.l.b16 %v3711
        %v3752 = vunpack.c.l.b16 %v3712
        %v3753 = vunpack.c.l.b16 %v3713
        %v3754 = vunpack.c.l.b16 %v3714
        %v3755 = vunpack.c.l.b16 %v3715
        %v3756 = vunpack.c.l.b16 %v3716
        %v3757 = vunpack.c.l.b16 %v3717
        %v3758 = vunpack.c.l.b16 %v3718
        %v3759 = vunpack.c.l.b16 %v3719
        %v3760 = vunpack.c.l.b16 %v3720
        %v3761 = vunpack.c.l.b16 %v3721
        %v3762 = vunpack.c.l.b16 %v3722
        %v3763 = vunpack.c.l.b16 %v3723
        %v3764 = vunpack.c.l.b16 %v3724
        %v3765 = vunpack.c.l.b16 %v3725
        %v3766 = vpack.c.b16 %v3751, %v3750
        %v3767 = vpack.c.b16 %v3753, %v3752
        %v3768 = vpack.c.b16 %v3755, %v3754
        %v3769 = vpack.c.b16 %v3757, %v3756
        %v3770 = vpack.c.b16 %v3759, %v3758
        %v3771 = vpack.c.b16 %v3761, %v3760
        %v3772 = vpack.c.b16 %v3763, %v3762
        %v3773 = vpack.c.b16 %v3765, %v3764
        %3782 = vmatprep.subr.bf16.mxu0 0
        %3783 = vmatpush1.bf16.msra.mxu0 %v3766
        %3784 = vmatprep.subr.bf16.mxu0 0
        %3785 = vmatpush1.bf16.msra.mxu0 %v3767
        %3786 = vmatprep.subr.bf16.mxu0 0
        %3787 = vmatpush1.bf16.msra.mxu0 %v3768
        %3788 = vmatprep.subr.bf16.mxu0 0
        %3789 = vmatpush1.bf16.msra.mxu0 %v3769
        %3790 = vmatprep.subr.bf16.mxu0 0
        %3791 = vmatpush1.bf16.msra.mxu0 %v3770
        %3792 = vmatprep.subr.bf16.mxu0 0
        %3793 = vmatpush1.bf16.msra.mxu0 %v3771
        %3794 = vmatprep.subr.bf16.mxu0 0
        %3795 = vmatpush1.bf16.msra.mxu0 %v3772
        %3796 = vmatprep.subr.bf16.mxu0 0
        %3797 = vmatpush1.bf16.msra.mxu0 %v3773
        %3798 = vmatprep.subr.bf16.mxu0 0
        %3799 = vmatpush1.bf16.msra.mxu0 0
        %3800 = vmatprep.subr.bf16.mxu0 0
        %3801 = vmatpush1.bf16.msra.mxu0 0
        %3802 = vmatprep.subr.bf16.mxu0 0
        %3803 = vmatpush1.bf16.msra.mxu0 0
        %3804 = vmatprep.subr.bf16.mxu0 0
        %3805 = vmatpush1.bf16.msra.mxu0 0
        %3806 = vmatprep.subr.bf16.mxu0 0
        %3807 = vmatpush1.bf16.msra.mxu0 0
        %3808 = vmatprep.subr.bf16.mxu0 0
        %3809 = vmatpush1.bf16.msra.mxu0 0
        %3810 = vmatprep.subr.bf16.mxu0 0
        %3811 = vmatpush1.bf16.msra.mxu0 0
        %3812 = vmatprep.subr.bf16.mxu0 0
        %3813 = vmatpush1.bf16.msra.mxu0 0
        %3814 = vmatprep.mubr.bf16.mxu0 0
        %3815 = vmatmul.mubr.bf16.gmra.mrb[0].mxu0 %v3708
        %v3816 = vpop.f32.mrb[0].mxu0
        %v3817 = vadd.f32 %v3732, %v3816
        %v3818 = vpop.f32.mrb[0].mxu0
        %v3819 = vpop.f32.mrb[0].mxu0
        %v3820 = vadd.f32 %v3732, %v3819
        %v3821 = vpop.f32.mrb[0].mxu0
        %3822 = vdwg.mxu0
        %v3823 = vadd.f32 %v3589, %v3817
        %v3824 = vadd.f32 %v3590, %v3820
        %s3825 = scalar_lea.vmem [#allocation20], 1
        %v3826 = vld [vmem:[%s3825] sm:$0x1]
        %s3827 = scalar_lea.vmem [#allocation22], 1
        %v3828 = vld [vmem:[%s3827] sm:$0x1]
        %3829 = vadd.xlane.f32.xlu0 %v3823
        %v3830 = vpop.xlane.xlu0 %3829
        %3831 = vadd.xlane.f32.xlu0 %v3824
        %v3832 = vpop.xlane.xlu0 %3831
        %v3833 = vmul.f32 %v3830, 0.03125
        %v3834 = vmul.f32 %v3832, 0.03125
        %v3835 = vmul.f32 %v3823, %v3823
        %v3836 = vmul.f32 %v3824, %v3824
        %3837 = vadd.xlane.f32.xlu0 %v3835
        %v3838 = vpop.xlane.xlu0 %3837
        %3839 = vadd.xlane.f32.xlu0 %v3836
        %v3840 = vpop.xlane.xlu0 %3839
        %v3841 = vmul.f32 %v3838, 0.03125
        %v3842 = vmul.f32 %v3840, 0.03125
        %v3843 = vmul.f32 %v3833, %v3833
        %v3844 = vmul.f32 %v3834, %v3834
        %v3845 = vsub.f32 %v3841, %v3843
        %v3846 = vsub.f32 %v3842, %v3844
        %v3847 = vmax.f32 %v3845, 0.0
        %v3848 = vmax.f32 %v3846, 0.0
        %v3849 = vsub.f32 %v3823, %v3833
        %v3850 = vsub.f32 %v3824, %v3834
        %v3851 = vadd.f32 %v3847, 1e-05
        %v3852 = vadd.f32 %v3848, 1e-05
        %v3853 = vrsqrt.pop %v3851
        %v3854 = vrsqrt.pop %v3852
        %v3855 = vmul.f32 %v3849, %v3853
        %v3856 = vmul.f32 %v3850, %v3854
        %v3858 = vlaneseq
        %v3859 = vshrl.u32 %v3858, 7
        %v3860 = vsub.s32 0, %v3859
        %v3861 = vrot.slane %v3826, %v3860
        %v3863 = vmul.f32 %v3855, %v3861
        %v3864 = vmul.f32 %v3856, %v3861
        %v3866 = vlaneseq
        %v3867 = vshrl.u32 %v3866, 7
        %v3868 = vsub.s32 0, %v3867
        %v3869 = vrot.slane %v3828, %v3868
        %v3871 = vadd.f32 %v3863, %v3869
        %v3872 = vadd.f32 %v3864, %v3869
        %v3873 = vpack.c.bf16 %v3872, %v3871
        %v3874 = vld [vmem:[%s21] sm:$0xf]
        %v3875 = vld [vmem:[%s21 + $0x4] sm:$0xf]
        %v3876 = vld [vmem:[%s21 + $0x8] sm:$0xf]
        %v3877 = vld [vmem:[%s21 + $0xc] sm:$0xf]
        %v3878 = vld [vmem:[%s21 + $0x10] sm:$0xf]
        %v3879 = vld [vmem:[%s21 + $0x14] sm:$0xf]
        %v3880 = vld [vmem:[%s21 + $0x18] sm:$0xf]
        %v3881 = vld [vmem:[%s21 + $0x1c] sm:$0xf]
        %v3882 = vld [vmem:[%s21 + $0x20] sm:$0xf]
        %v3883 = vld [vmem:[%s21 + $0x24] sm:$0xf]
        %v3884 = vld [vmem:[%s21 + $0x28] sm:$0xf]
        %v3885 = vld [vmem:[%s21 + $0x2c] sm:$0xf]
        %v3886 = vld [vmem:[%s21 + $0x30] sm:$0xf]
        %v3887 = vld [vmem:[%s21 + $0x34] sm:$0xf]
        %v3888 = vld [vmem:[%s21 + $0x38] sm:$0xf]
        %v3889 = vld [vmem:[%s21 + $0x3c] sm:$0xf]
        %v3890 = vld [vmem:[%s22] sm:$0x1]
        %v3892 = vlaneseq
        %v3893 = vshrl.u32 %v3892, 7
        %v3894 = vsub.s32 0, %v3893
        %v3895 = vrot.slane %v3890, %v3894
        %v3913 = vunpack.c.l.b16 %v3874
        %v3914 = vunpack.c.l.b16 %v3875
        %v3915 = vunpack.c.l.b16 %v3876
        %v3916 = vunpack.c.l.b16 %v3877
        %v3917 = vunpack.c.l.b16 %v3878
        %v3918 = vunpack.c.l.b16 %v3879
        %v3919 = vunpack.c.l.b16 %v3880
        %v3920 = vunpack.c.l.b16 %v3881
        %v3921 = vunpack.c.l.b16 %v3882
        %v3922 = vunpack.c.l.b16 %v3883
        %v3923 = vunpack.c.l.b16 %v3884
        %v3924 = vunpack.c.l.b16 %v3885
        %v3925 = vunpack.c.l.b16 %v3886
        %v3926 = vunpack.c.l.b16 %v3887
        %v3927 = vunpack.c.l.b16 %v3888
        %v3928 = vunpack.c.l.b16 %v3889
        %v3929 = vpack.c.b16 %v3914, %v3913
        %v3930 = vpack.c.b16 %v3916, %v3915
        %v3931 = vpack.c.b16 %v3918, %v3917
        %v3932 = vpack.c.b16 %v3920, %v3919
        %v3933 = vpack.c.b16 %v3922, %v3921
        %v3934 = vpack.c.b16 %v3924, %v3923
        %v3935 = vpack.c.b16 %v3926, %v3925
        %v3936 = vpack.c.b16 %v3928, %v3927
        %3945 = vmatprep.subr.bf16.mxu0 0
        %3946 = vmatpush1.bf16.msra.mxu0 %v3929
        %3947 = vmatprep.subr.bf16.mxu0 0
        %3948 = vmatpush1.bf16.msra.mxu0 %v3930
        %3949 = vmatprep.subr.bf16.mxu0 0
        %3950 = vmatpush1.bf16.msra.mxu0 %v3931
        %3951 = vmatprep.subr.bf16.mxu0 0
        %3952 = vmatpush1.bf16.msra.mxu0 %v3932
        %3953 = vmatprep.subr.bf16.mxu0 0
        %3954 = vmatpush1.bf16.msra.mxu0 %v3933
        %3955 = vmatprep.subr.bf16.mxu0 0
        %3956 = vmatpush1.bf16.msra.mxu0 %v3934
        %3957 = vmatprep.subr.bf16.mxu0 0
        %3958 = vmatpush1.bf16.msra.mxu0 %v3935
        %3959 = vmatprep.subr.bf16.mxu0 0
        %3960 = vmatpush1.bf16.msra.mxu0 %v3936
        %3961 = vmatprep.subr.bf16.mxu0 0
        %3962 = vmatpush1.bf16.msra.mxu0 0
        %3963 = vmatprep.subr.bf16.mxu0 0
        %3964 = vmatpush1.bf16.msra.mxu0 0
        %3965 = vmatprep.subr.bf16.mxu0 0
        %3966 = vmatpush1.bf16.msra.mxu0 0
        %3967 = vmatprep.subr.bf16.mxu0 0
        %3968 = vmatpush1.bf16.msra.mxu0 0
        %3969 = vmatprep.subr.bf16.mxu0 0
        %3970 = vmatpush1.bf16.msra.mxu0 0
        %3971 = vmatprep.subr.bf16.mxu0 0
        %3972 = vmatpush1.bf16.msra.mxu0 0
        %3973 = vmatprep.subr.bf16.mxu0 0
        %3974 = vmatpush1.bf16.msra.mxu0 0
        %3975 = vmatprep.subr.bf16.mxu0 0
        %3976 = vmatpush1.bf16.msra.mxu0 0
        %3977 = vmatprep.mubr.bf16.mxu0 0
        %3978 = vmatmul.mubr.bf16.gmra.mrb[0].mxu0 %v3873
        %v3979 = vpop.f32.mrb[0].mxu0
        %v3980 = vadd.f32 %v3895, %v3979
        %v3981 = vpop.f32.mrb[0].mxu0
        %v3982 = vpop.f32.mrb[0].mxu0
        %v3983 = vadd.f32 %v3895, %v3982
        %v3984 = vpop.f32.mrb[0].mxu0
        %3985 = vdwg.mxu0
        %3986 = vst [vmem:[%s927] sm:$0xff] %v3980
        %3987 = vst [vmem:[%s927 + $0x8] sm:$0xff] %v3983
        %s3988 = sand.u32 %s549, 1
        %s3989 = scalar_lea.sflag [#allocation4], %s3988
        %s3990 = sand.u32 %s549, 1
        %s3991 = smul.addr %s3990, 16
        %s3992 = scalar_lea.vmem [#allocation23], %s3991
        // Predicated region
        $region165: #{tpu_custom_call.1} parent=111 // pred_check
          %p3993 = pneg %p559
        $region166: #{tpu_custom_call.1} parent=111 // pred_check_branch
          %3995 = sbr.rel (%p3993) target = $region168
        $region167: #{tpu_custom_call.1} parent=111 // pred_region
          %s3996 = smul.u32 2, %s48
          %s3998 = ssub.s32 256, 256
          %3999 = vsyncadd %s3989, %s3998
          %s4000 = smul.addr %s3996, 128
          %s4001 = scalar_lea.hbm %s23, %s4000
          %s4002 = sshll.u32 %s3992, 4
          %s4003 = int_to_ptr.vmem [resolvable:$true] %s4002
          %4008 = dma.vmem_to_hbm [thread:$0]  %s4003, 256, %s4001, %s3989, 128, 128, 8
        $region168: #{tpu_custom_call.1} parent=111 // pred_fallthru
          _
      $region112: #{tpu_custom_call.1} parent=5 // pred_fallthru
        _
      %p4009 = scmp.le.s32.totalorder 2, %s43
      // Predicated region
      $region169: #{tpu_custom_call.1} parent=5 // pred_check
        %p4010 = pneg %p4009
      $region170: #{tpu_custom_call.1} parent=5 // pred_check_branch
        %4012 = sbr.rel (%p4010) target = $region172
      $region171: #{tpu_custom_call.1} parent=5 // pred_region
        %s4013 = ssub.s32 %s43, 2
        // Predicated region
        $region173: #{tpu_custom_call.1} parent=171 // pred_check
          %p4014 = pneg %p565
        $region174: #{tpu_custom_call.1} parent=171 // pred_check_branch
          %4016 = sbr.rel (%p4014) target = $region176
        $region175: #{tpu_custom_call.1} parent=171 // pred_region
          %s4017 = sand.u32 %s550, 1
          %s4018 = scalar_lea.sflag [#allocation4], %s4017
          %s4019 = sand.u32 %s550, 1
          %s4020 = smul.addr %s4019, 16
          %s4021 = scalar_lea.vmem [#allocation23], %s4020
          %4022 = dma.done %s4018, 256
        $region176: #{tpu_custom_call.1} parent=171 // pred_fallthru
          _
      $region172: #{tpu_custom_call.1} parent=5 // pred_fallthru
        _
    $region6: #{tpu_custom_call.1} parent=1 // loop_footer
      %s47 = sadd.s32 1, %s43
    $region7: #{tpu_custom_call.1} parent=1 // loop_footer_branch
      %42 = sbr.rel target = $region3
    $region8: #{tpu_custom_call.1} parent=1 // loop_exit
      _
    %4023 = vsyncpa [#allocation3], 1
    %s4024 = scalar_lea.sflag [#allocation3], 1
    %4025 = vsyncpa %s4024, 1
    %4026 = vsyncpa [#allocation6], 1
    %s4027 = scalar_lea.sflag [#allocation6], 1
    %4028 = vsyncpa %s4027, 1
    %4029 = vsyncpa [#allocation9], 1
    %4030 = vsyncpa [#allocation12], 1
    %4031 = vsyncpa [#allocation15], 1
    %4032 = vsyncpa [#allocation18], 1
    %4033 = vsyncpa [#allocation21], 1
    %4034 = vsyncpa [#allocation4], 1
    %s4035 = scalar_lea.sflag [#allocation4], 1
    %4036 = vsyncpa %s4035, 1

</llo_original>
